<compile_context>
chip_gen: v6e
topology: v6e:2x2x1
jax: 0.10.0
libtpu: 0.0.40
codegen_flags: <defaults>
</compile_context>

<pallas_src>
import math
from functools import partial

import jax
import jax.numpy as jnp
from jax.experimental import pallas as pl
from jax.experimental.pallas import tpu as pltpu


# ----------------------------------------------------------------------------- kernels
def _mm_kernel_single_k(x_ref, w_ref, o_ref, *, precision):
    """Whole K resident in one block: no accumulator RMW, direct lane-dense store."""
    o_ref[...] = jnp.dot(
        x_ref[...], w_ref[...],
        preferred_element_type=jnp.float32, precision=precision,
    ).astype(o_ref.dtype)


def _mm_kernel_acc_out(x_ref, w_ref, o_ref, *, precision):
    """f32 output: accumulate directly into the resident output tile.

    NOTE: correct only because K is the *innermost* grid axis and is marked
    "arbitrary" in dimension_semantics. Do not reorder the grid or mark K parallel.
    """
    @pl.when(pl.program_id(2) == 0)
    def _():
        o_ref[...] = jnp.zeros_like(o_ref)

    o_ref[...] += jnp.dot(
        x_ref[...], w_ref[...],
        preferred_element_type=jnp.float32, precision=precision,
    )


def _mm_kernel_scratch(x_ref, w_ref, o_ref, acc_ref, *, precision):
    """Narrow-output path (e.g. bf16): f32 VMEM accumulator, cast on last K step.

    Same K-innermost / "arbitrary" requirement as _mm_kernel_acc_out.
    """
    @pl.when(pl.program_id(2) == 0)
    def _():
        acc_ref[...] = jnp.zeros_like(acc_ref)

    acc_ref[...] += jnp.dot(
        x_ref[...], w_ref[...],
        preferred_element_type=jnp.float32, precision=precision,
    )

    @pl.when(pl.program_id(2) == pl.num_programs(2) - 1)
    def _():
        o_ref[...] = acc_ref[...].astype(o_ref.dtype)


# ----------------------------------------------------------------------------- helpers
def _cdiv(a, b):
    return (a + b - 1) // b


def _round_up(x, m):
    return ((x + m - 1) // m) * m


def _balanced_tile(dim, target, align):
    """Tile <= ~target, aligned, with pad waste limited to the alignment granularity."""
    nb = max(1, _cdiv(dim, target))
    tile = _round_up(_cdiv(dim, nb), align)
    padded = _round_up(dim, tile)
    return tile, padded


def _device_kind():
    try:
        return jax.devices()[0].device_kind.lower()
    except Exception:
        return ""


def _vmem_budget_bytes(kind):
    if "v7" in kind:
        # 64 MiB physical per TensorCore on v7x: leave compiler-internal headroom.
        return 48 * 1024 * 1024
    if "v5" in kind or "v6" in kind:
        # 128 MiB physical VMEM on v5e / v6e.
        return 100 * 1024 * 1024
    return 64 * 1024 * 1024  # unknown generation: conservative


def _num_tensorcores(kind):
    # v7x has 2 TensorCores per chip (sharded via "parallel" grid axes).
    return 2 if "v7" in kind else 1


# ----------------------------------------------------------------------------- wrapper
def mlp_forward(x, weight, *, tm=None, tn=None, tk=None,
                compute_dtype=None, precision=None,
                small_bypass_elems=64 * 128 * 128):
    """Pallas implementation of mlp.forward: xw = x @ weight.

    compute_dtype: optionally cast x/weight (e.g. jnp.bfloat16) for MXU-peak compute
                   with f32 accumulation; output dtype always matches x.dtype.
    precision:     forwarded to the in-kernel matmuls (Precision.HIGHEST -> strict
                   fp32 fidelity at multi-pass MXU cost).
    """
    M, K = x.shape
    K2, N = weight.shape
    assert K == K2, "input_dim mismatch"

    out_dtype = x.dtype
    cdt = jnp.dtype(compute_dtype) if compute_dtype is not None else jnp.dtype(x.dtype)
    low_prec = cdt.itemsize < 4
    in_bytes = cdt.itemsize
    out_bytes = jnp.dtype(out_dtype).itemsize

    # Small-shape bypass: launch, padding copies, and the pipeline prologue/epilogue
    # dominate below a few MXU-tile volumes; plain XLA dot is strictly better there.
    if M * N * K <= small_bypass_elems:
        xw = jnp.dot(x.astype(cdt), weight.astype(cdt),
                     preferred_element_type=jnp.float32, precision=precision)
        return xw.astype(out_dtype)

    kind = _device_kind()
    vmem_budget = _vmem_budget_bytes(kind)

    # MXU/lane-aligned tile targets, sized to cut operand re-fetch from HBM.
    tm_user, tn_user, tk_user = tm, tn, tk
    tm_t = 512 if tm is None else tm
    tn_t = (1024 if low_prec else 512) if tn is None else tn
    tk_t = 1024 if tk is None else tk

    m_align = 16 if low_prec else 8              # sublane packing for bf16 / f32
    tm, Mp = _balanced_tile(M, tm_t, m_align)
    tn, Np = _balanced_tile(N, tn_t, 128)        # lane-dense output tiles

    # Weight-resident fast path: if the whole (padded) K dimension fits in the VMEM
    # budget next to the x / output tiles, collapse the K grid axis to a single step.
    Kp_full = _round_up(K, 128)
    if tk_user is None:
        single_k_bytes = (2 * tm * Kp_full * in_bytes
                          + 2 * Kp_full * tn * in_bytes
                          + 2 * tm * tn * out_bytes)
        if single_k_bytes <= int(0.6 * vmem_budget):
            tk, Kp = Kp_full, Kp_full
        else:
            tk, Kp = _balanced_tile(K, tk_t, 128)
    else:
        tk, Kp = _balanced_tile(K, tk_t, 128)

    # Keep the double-buffered working set inside the budget (shrink tk first).
    def _wset(tk_):
        return (2 * tm * tk_ * in_bytes + 2 * tk_ * tn * in_bytes
                + 2 * tm * tn * out_bytes + tm * tn * 4)
    while tk > 128 and _wset(tk) > int(0.8 * vmem_budget):
        tk = max(128, _round_up(tk // 2, 128))
        Kp = _round_up(K, tk)

    grid_m, grid_n = Mp // tm, Np // tn

    # v7x megacore: make sure both TensorCores get at least one parallel block.
    if grid_m * grid_n < _num_tensorcores(kind):
        if tm_user is None and M >= 2 * m_align:
            tm, Mp = _balanced_tile(M, _round_up(_cdiv(M, 2), m_align), m_align)
        elif tn_user is None and N >= 2 * 128:
            tn, Np = _balanced_tile(N, _round_up(_cdiv(N, 2), 128), 128)
        grid_m, grid_n = Mp // tm, Np // tn

    grid_k = Kp // tk
    single_k = grid_k == 1
    use_scratch = (not single_k) and jnp.dtype(out_dtype) != jnp.float32

    # Cast (optional) then zero-pad to tile multiples; zero K-padding is exact.
    # TODO(synk): for repeated inference, hoist/cache the weight cast+pad at init time
    # (as written it re-reads K*N from HBM on every call before the kernel starts).
    x_c = x.astype(cdt) if x.dtype != cdt else x
    w_c = weight.astype(cdt) if weight.dtype != cdt else weight
    if (Mp, Kp) != (M, K):
        x_c = jnp.pad(x_c, ((0, Mp - M), (0, Kp - K)))
    if (Kp, Np) != (K, N):
        w_c = jnp.pad(w_c, ((0, Kp - K), (0, Np - N)))

    if single_k:
        kernel = partial(_mm_kernel_single_k, precision=precision)
        grid = (grid_m, grid_n)
        in_specs = [
            pl.BlockSpec((tm, Kp), lambda i, j: (i, 0)),
            pl.BlockSpec((Kp, tn), lambda i, j: (0, j)),
        ]
        out_spec = pl.BlockSpec((tm, tn), lambda i, j: (i, j))
        scratch_shapes = []
        dim_sem = ("parallel", "parallel")
    else:
        kernel = partial(_mm_kernel_scratch if use_scratch else _mm_kernel_acc_out,
                         precision=precision)
        # K must stay innermost and "arbitrary" for the accumulation to be correct.
        grid = (grid_m, grid_n, grid_k)
        in_specs = [
            pl.BlockSpec((tm, tk), lambda i, j, k: (i, k)),
            pl.BlockSpec((tk, tn), lambda i, j, k: (k, j)),
        ]
        out_spec = pl.BlockSpec((tm, tn), lambda i, j, k: (i, j))
        scratch_shapes = [pltpu.VMEM((tm, tn), jnp.float32)] if use_scratch else []
        dim_sem = ("parallel", "parallel", "arbitrary")

    tk_eff = Kp if single_k else tk
    vmem_est = (2 * tm * tk_eff * in_bytes          # double-buffered x tiles
                + 2 * tk_eff * tn * in_bytes        # double-buffered weight tiles
                + 2 * tm * tn * out_bytes           # double-buffered output tiles
                + (tm * tn * 4 if use_scratch else 0))
    vmem_limit = int(min(max(2 * vmem_est, 32 * 1024 * 1024), vmem_budget))

    cost = pl.CostEstimate(
        flops=int(2 * Mp * Np * Kp),
        transcendentals=0,
        bytes_accessed=int(grid_n * Mp * Kp * in_bytes     # x re-read once per N tile
                           + grid_m * Kp * Np * in_bytes   # w re-read once per M tile
                           + Mp * Np * out_bytes),
    )

    out_p = pl.pallas_call(
        kernel,
        out_shape=jax.ShapeDtypeStruct((Mp, Np), out_dtype),
        grid_spec=pltpu.PrefetchScalarGridSpec(
            num_scalar_prefetch=0,
            grid=grid,
            in_specs=in_specs,
            out_specs=out_spec,
            scratch_shapes=scratch_shapes,
        ),
        compiler_params=pltpu.CompilerParams(
            dimension_semantics=dim_sem,
            vmem_limit_bytes=vmem_limit,
        ),
        cost_estimate=cost,
    )(x_c, w_c)

    if (Mp, Np) != (M, N):
        out_p = out_p[:M, :N]
    return out_p


def glorot_init(key, input_dim, output_dim, dtype=jnp.float32):
    """Deterministic glorot-uniform init matching the PyTorch `glorot` helper."""
    stdv = math.sqrt(6.0 / (input_dim + output_dim))
    return jax.random.uniform(
        key, (input_dim, output_dim), dtype=dtype, minval=-stdv, maxval=stdv
    )


def _rel_err(a, b):
    a = a.astype(jnp.float32)
    b = b.astype(jnp.float32)
    return jnp.max(jnp.abs(a - b)) / (jnp.max(jnp.abs(b)) + 1e-6)


if __name__ == "__main__":
    key = jax.random.PRNGKey(0)
    k1, k2, k3, k4, k5, k6 = jax.random.split(key, 6)

    # 1) Tiny shape typical of the module (N nodes x input_dim) -> small-shape bypass.
    n_nodes, input_dim, output_dim = 8, 32, 16
    x = jax.random.normal(k1, (n_nodes, input_dim), dtype=jnp.float32)
    w = glorot_init(k2, input_dim, output_dim)
    out = jax.block_until_ready(mlp_forward(x, w))
    assert out.shape == (n_nodes, output_dim)
    assert jnp.allclose(out, x @ w, atol=1e-5, rtol=1e-5)

    # 2) f32 path, weight-resident single-K-step kernel (K fits in VMEM budget).
    M, K, N = 512, 1024, 384
    x2 = jax.random.normal(k3, (M, K), dtype=jnp.float32)
    w2 = glorot_init(k4, K, N)
    ref2 = jnp.dot(x2, w2, precision=jax.lax.Precision.HIGHEST)
    out2 = jax.block_until_ready(mlp_forward(x2, w2))
    assert out2.shape == (M, N)
    assert _rel_err(out2, ref2) < 1e-2

    # 3) f32 path with an explicit small tk -> multi-K accumulate-into-output kernel.
    out3 = jax.block_until_ready(mlp_forward(x2, w2, tk=256))
    assert out3.shape == (M, N)
    assert _rel_err(out3, ref2) < 1e-2

    # 4) bf16-in / bf16-out path with multi-K grid -> f32 VMEM scratch accumulator.
    M4, K4, N4 = 256, 512, 640
    x4 = jax.random.normal(k5, (M4, K4), dtype=jnp.float32)
    w4 = glorot_init(k6, K4, N4)
    x4b, w4b = x4.astype(jnp.bfloat16), w4.astype(jnp.bfloat16)
    ref4 = jnp.dot(x4b.astype(jnp.float32), w4b.astype(jnp.float32),
                   precision=jax.lax.Precision.HIGHEST)
    out4 = jax.block_until_ready(mlp_forward(x4b, w4b, tk=256))
    assert out4.dtype == jnp.bfloat16 and out4.shape == (M4, N4)
    assert _rel_err(out4, ref4) < 5e-2

    # 5) bf16-compute / f32-output path (direct f32 accumulation into o_ref).
    out5 = jax.block_until_ready(mlp_forward(x2, w2, compute_dtype=jnp.bfloat16))
    assert out5.dtype == jnp.float32
    assert _rel_err(out5, ref2) < 5e-2

    print("KERNEL_OK")
</pallas_src>

<mosaic_0001>
module attributes {stable_mosaic.version = 11 : i64} {
  func.func @_mm_kernel_single_k(%arg0: i32, %arg1: i32, %arg2: memref<512x1024xf32, #tpu.memory_space<vmem>>, %arg3: memref<1024x384xf32, #tpu.memory_space<vmem>>, %arg4: memref<512x384xf32, #tpu.memory_space<vmem>>) attributes {dimension_semantics = [#tpu.dimension_semantics<parallel>, #tpu.dimension_semantics<parallel>], iteration_bounds = array<i64: 1, 1>, scalar_prefetch = 0 : i64, scratch_operands = 0 : i64, tpu.core_type = #tpu.core_type<tc>, window_params = [{transform_indices = @transform_0, window_bounds = array<i64: 512, 1024>}, {transform_indices = @transform_1, window_bounds = array<i64: 1024, 384>}, {transform_indices = @transform_2, window_bounds = array<i64: 512, 384>}]} {
    %c0 = arith.constant 0 : index
    %c0_0 = arith.constant 0 : index
    %0 = vector.load %arg2[%c0, %c0_0] : memref<512x1024xf32, #tpu.memory_space<vmem>>, vector<512x1024xf32>
    %c0_1 = arith.constant 0 : index
    %c0_2 = arith.constant 0 : index
    %1 = vector.load %arg3[%c0_1, %c0_2] : memref<1024x384xf32, #tpu.memory_space<vmem>>, vector<1024x384xf32>
    %cst = arith.constant dense<0.000000e+00> : vector<512x384xf32>
    %2 = tpu.matmul %0, %1, %cst {dimension_numbers = #tpu.dot_dimension_numbers<[1], [0], [0], [1], [0, 0, 1, 1], [], []>} : vector<512x1024xf32>, vector<1024x384xf32>, vector<512x384xf32> -> vector<512x384xf32>
    %c0_3 = arith.constant 0 : index
    %c0_4 = arith.constant 0 : index
    %3 = vector.load %arg4[%c0_3, %c0_4] : memref<512x384xf32, #tpu.memory_space<vmem>>, vector<512x384xf32>
    tpu.vector_store %arg4[%c0_3, %c0_4], %2 {strides = array<i32>} : memref<512x384xf32, #tpu.memory_space<vmem>>, vector<512x384xf32>,
    return
  }
  func.func @transform_0(%arg0: i32, %arg1: i32) -> (i32, i32) {
    %c0_i32 = arith.constant 0 : i32
    %c0_i32_0 = arith.constant 0 : i32
    return %arg0, %c0_i32 : i32, i32
  }
  func.func @transform_1(%arg0: i32, %arg1: i32) -> (i32, i32) {
    %c0_i32 = arith.constant 0 : i32
    %c0_i32_0 = arith.constant 0 : i32
    return %c0_i32, %arg1 : i32, i32
  }
  func.func @transform_2(%arg0: i32, %arg1: i32) -> (i32, i32) {
    %c0_i32 = arith.constant 0 : i32
    return %arg0, %arg1 : i32, i32
  }
}

</mosaic_0001>

<llo_original>
// kernel: tpu_custom_call.1
$region0: #{tpu_custom_call.1}
  #allocation0 [shape = 'u32[]', space=smem, size = 0x4, offset = 0x4, fixed_abs, tag = 'smem constant byte address 0x4 - core index']
  #allocation1 [shape = 'u32[144,128]{1,0:T(1,128)}', space=vmem, size = 0x12000, scoped, tag = 'internal scratch']
  %s0 = inlined_call_operand.hbm [shape: f32[512,1024], index: 0, kind: input, shape index: {}]
  %s1 = inlined_call_operand.hbm [shape: f32[1024,384], index: 1, kind: input, shape index: {}]
  %s2 = inlined_call_operand.hbm [shape: f32[512,384], index: 2, kind: output, shape index: {}]
  %s3 = sld [smem:[#allocation0]]
  $region26: #{tpu_custom_call.1} parent=0
    _
  %s5 = ssub.s32 1, %s3
  %s6 = scalar_select 0, %s5, %s3
  $region1: #{tpu_custom_call.1} parent=0
    #allocation2 [shape = 'u8[2097152]{0}', space=vmem, size = 0x200000, scoped, tag = 'input window, operand 0, single buffered']
    #allocation3 [shape = 's32[1]{0}', space=sflag, size = 0x4, scoped, tag = 'scoped memory for tpu_custom_call.1']
    #allocation4 [shape = 's32[1]{0}', space=sflag, size = 0x4, scoped, tag = 'scoped memory for tpu_custom_call.1']
    #allocation5 [shape = 'u8[1572864]{0}', space=vmem, size = 0x180000, scoped, tag = 'input window, operand 1, single buffered']
    #allocation6 [shape = 's32[1]{0}', space=sflag, size = 0x4, scoped, tag = 'scoped memory for tpu_custom_call.1']
    #allocation7 [shape = 'u8[786432]{0}', space=vmem, size = 0xc0000, scoped, tag = 'output window, operand 0, single buffered']
    %7 = vsyncpa [#allocation3], 0
    %8 = vsyncpa [#allocation6], 0
    %9 = vsyncpa [#allocation4], 0
    // Predicated region
    $region2: #{tpu_custom_call.1} parent=1 // pred_check
      _
    $region3: #{tpu_custom_call.1} parent=1 // pred_check_branch
      %11 = sbr.rel (0) target = $region5
    $region4: #{tpu_custom_call.1} parent=1 // pred_region
      %s13 = ssub.s32 65536, 65536
      %14 = vsyncadd [#allocation3], %s13
      %s15 = sshll.u32 [#allocation2], 4
      %s16 = int_to_ptr.vmem [resolvable:$true] %s15
      %21 = dma.hbm_to_vmem [thread:$0]  %s0, 65536, %s16, [#allocation3], 1024, 1024, 64
    $region5: #{tpu_custom_call.1} parent=1 // pred_fallthru
      _
    // Predicated region
    $region6: #{tpu_custom_call.1} parent=1 // pred_check
      _
    $region7: #{tpu_custom_call.1} parent=1 // pred_check_branch
      %23 = sbr.rel (0) target = $region9
    $region8: #{tpu_custom_call.1} parent=1 // pred_region
      %s25 = ssub.s32 49152, 49152
      %26 = vsyncadd [#allocation6], %s25
      %s27 = sshll.u32 [#allocation5], 4
      %s28 = int_to_ptr.vmem [resolvable:$true] %s27
      %33 = dma.hbm_to_vmem [thread:$0]  %s1, 49152, %s28, [#allocation6], 384, 384, 24
    $region9: #{tpu_custom_call.1} parent=1 // pred_fallthru
      _
    // Predicated region
    $region10: #{tpu_custom_call.1} parent=1 // pred_check
      _
    $region11: #{tpu_custom_call.1} parent=1 // pred_check_branch
      %35 = sbr.rel (0) target = $region13
    $region12: #{tpu_custom_call.1} parent=1 // pred_region
      %36 = dma.done [#allocation3], 65536
    $region13: #{tpu_custom_call.1} parent=1 // pred_fallthru
      _
    // Predicated region
    $region14: #{tpu_custom_call.1} parent=1 // pred_check
      _
    $region15: #{tpu_custom_call.1} parent=1 // pred_check_branch
      %38 = sbr.rel (0) target = $region17
    $region16: #{tpu_custom_call.1} parent=1 // pred_region
      %39 = dma.done [#allocation6], 49152
    $region17: #{tpu_custom_call.1} parent=1 // pred_fallthru
      _
    %v40 = vld [vmem:[#allocation2] sm:$0xff]
    %v41 = vld [vmem:[#allocation2 + $0x8] sm:$0xff]
    %v42 = vld [vmem:[#allocation2 + $0x10] sm:$0xff]
    %v43 = vld [vmem:[#allocation2 + $0x18] sm:$0xff]
    %v44 = vld [vmem:[#allocation2 + $0x20] sm:$0xff]
    %v45 = vld [vmem:[#allocation2 + $0x28] sm:$0xff]
    %v46 = vld [vmem:[#allocation2 + $0x30] sm:$0xff]
    %v47 = vld [vmem:[#allocation2 + $0x38] sm:$0xff]
    %v48 = vld [vmem:[#allocation2 + $0x40] sm:$0xff]
    %v49 = vld [vmem:[#allocation2 + $0x48] sm:$0xff]
    %v50 = vld [vmem:[#allocation2 + $0x50] sm:$0xff]
    %v51 = vld [vmem:[#allocation2 + $0x58] sm:$0xff]
    %v52 = vld [vmem:[#allocation2 + $0x60] sm:$0xff]
    %v53 = vld [vmem:[#allocation2 + $0x68] sm:$0xff]
    %v54 = vld [vmem:[#allocation2 + $0x70] sm:$0xff]
    %v55 = vld [vmem:[#allocation2 + $0x78] sm:$0xff]
    %v56 = vld [vmem:[#allocation2 + $0x80] sm:$0xff]
    %v57 = vld [vmem:[#allocation2 + $0x88] sm:$0xff]
    %v58 = vld [vmem:[#allocation2 + $0x90] sm:$0xff]
    %v59 = vld [vmem:[#allocation2 + $0x98] sm:$0xff]
    %v60 = vld [vmem:[#allocation2 + $0xa0] sm:$0xff]
    %v61 = vld [vmem:[#allocation2 + $0xa8] sm:$0xff]
    %v62 = vld [vmem:[#allocation2 + $0xb0] sm:$0xff]
    %v63 = vld [vmem:[#allocation2 + $0xb8] sm:$0xff]
    %v64 = vld [vmem:[#allocation2 + $0xc0] sm:$0xff]
    %v65 = vld [vmem:[#allocation2 + $0xc8] sm:$0xff]
    %v66 = vld [vmem:[#allocation2 + $0xd0] sm:$0xff]
    %v67 = vld [vmem:[#allocation2 + $0xd8] sm:$0xff]
    %v68 = vld [vmem:[#allocation2 + $0xe0] sm:$0xff]
    %v69 = vld [vmem:[#allocation2 + $0xe8] sm:$0xff]
    %v70 = vld [vmem:[#allocation2 + $0xf0] sm:$0xff]
    %v71 = vld [vmem:[#allocation2 + $0xf8] sm:$0xff]
    %v72 = vld [vmem:[#allocation2 + $0x100] sm:$0xff]
    %v73 = vld [vmem:[#allocation2 + $0x108] sm:$0xff]
    %v74 = vld [vmem:[#allocation2 + $0x110] sm:$0xff]
    %v75 = vld [vmem:[#allocation2 + $0x118] sm:$0xff]
    %v76 = vld [vmem:[#allocation2 + $0x120] sm:$0xff]
    %v77 = vld [vmem:[#allocation2 + $0x128] sm:$0xff]
    %v78 = vld [vmem:[#allocation2 + $0x130] sm:$0xff]
    %v79 = vld [vmem:[#allocation2 + $0x138] sm:$0xff]
    %v80 = vld [vmem:[#allocation2 + $0x140] sm:$0xff]
    %v81 = vld [vmem:[#allocation2 + $0x148] sm:$0xff]
    %v82 = vld [vmem:[#allocation2 + $0x150] sm:$0xff]
    %v83 = vld [vmem:[#allocation2 + $0x158] sm:$0xff]
    %v84 = vld [vmem:[#allocation2 + $0x160] sm:$0xff]
    %v85 = vld [vmem:[#allocation2 + $0x168] sm:$0xff]
    %v86 = vld [vmem:[#allocation2 + $0x170] sm:$0xff]
    %v87 = vld [vmem:[#allocation2 + $0x178] sm:$0xff]
    %v88 = vld [vmem:[#allocation2 + $0x180] sm:$0xff]
    %v89 = vld [vmem:[#allocation2 + $0x188] sm:$0xff]
    %v90 = vld [vmem:[#allocation2 + $0x190] sm:$0xff]
    %v91 = vld [vmem:[#allocation2 + $0x198] sm:$0xff]
    %v92 = vld [vmem:[#allocation2 + $0x1a0] sm:$0xff]
    %v93 = vld [vmem:[#allocation2 + $0x1a8] sm:$0xff]
    %v94 = vld [vmem:[#allocation2 + $0x1b0] sm:$0xff]
    %v95 = vld [vmem:[#allocation2 + $0x1b8] sm:$0xff]
    %v96 = vld [vmem:[#allocation2 + $0x1c0] sm:$0xff]
    %v97 = vld [vmem:[#allocation2 + $0x1c8] sm:$0xff]
    %v98 = vld [vmem:[#allocation2 + $0x1d0] sm:$0xff]
    %v99 = vld [vmem:[#allocation2 + $0x1d8] sm:$0xff]
    %v100 = vld [vmem:[#allocation2 + $0x1e0] sm:$0xff]
    %v101 = vld [vmem:[#allocation2 + $0x1e8] sm:$0xff]
    %v102 = vld [vmem:[#allocation2 + $0x1f0] sm:$0xff]
    %v103 = vld [vmem:[#allocation2 + $0x1f8] sm:$0xff]
    %v104 = vld [vmem:[#allocation2 + $0x200] sm:$0xff]
    %v105 = vld [vmem:[#allocation2 + $0x208] sm:$0xff]
    %v106 = vld [vmem:[#allocation2 + $0x210] sm:$0xff]
    %v107 = vld [vmem:[#allocation2 + $0x218] sm:$0xff]
    %v108 = vld [vmem:[#allocation2 + $0x220] sm:$0xff]
    %v109 = vld [vmem:[#allocation2 + $0x228] sm:$0xff]
    %v110 = vld [vmem:[#allocation2 + $0x230] sm:$0xff]
    %v111 = vld [vmem:[#allocation2 + $0x238] sm:$0xff]
    %v112 = vld [vmem:[#allocation2 + $0x240] sm:$0xff]
    %v113 = vld [vmem:[#allocation2 + $0x248] sm:$0xff]
    %v114 = vld [vmem:[#allocation2 + $0x250] sm:$0xff]
    %v115 = vld [vmem:[#allocation2 + $0x258] sm:$0xff]
    %v116 = vld [vmem:[#allocation2 + $0x260] sm:$0xff]
    %v117 = vld [vmem:[#allocation2 + $0x268] sm:$0xff]
    %v118 = vld [vmem:[#allocation2 + $0x270] sm:$0xff]
    %v119 = vld [vmem:[#allocation2 + $0x278] sm:$0xff]
    %v120 = vld [vmem:[#allocation2 + $0x280] sm:$0xff]
    %v121 = vld [vmem:[#allocation2 + $0x288] sm:$0xff]
    %v122 = vld [vmem:[#allocation2 + $0x290] sm:$0xff]
    %v123 = vld [vmem:[#allocation2 + $0x298] sm:$0xff]
    %v124 = vld [vmem:[#allocation2 + $0x2a0] sm:$0xff]
    %v125 = vld [vmem:[#allocation2 + $0x2a8] sm:$0xff]
    %v126 = vld [vmem:[#allocation2 + $0x2b0] sm:$0xff]
    %v127 = vld [vmem:[#allocation2 + $0x2b8] sm:$0xff]
    %v128 = vld [vmem:[#allocation2 + $0x2c0] sm:$0xff]
    %v129 = vld [vmem:[#allocation2 + $0x2c8] sm:$0xff]
    %v130 = vld [vmem:[#allocation2 + $0x2d0] sm:$0xff]
    %v131 = vld [vmem:[#allocation2 + $0x2d8] sm:$0xff]
    %v132 = vld [vmem:[#allocation2 + $0x2e0] sm:$0xff]
    %v133 = vld [vmem:[#allocation2 + $0x2e8] sm:$0xff]
    %v134 = vld [vmem:[#allocation2 + $0x2f0] sm:$0xff]
    %v135 = vld [vmem:[#allocation2 + $0x2f8] sm:$0xff]
    %v136 = vld [vmem:[#allocation2 + $0x300] sm:$0xff]
    %v137 = vld [vmem:[#allocation2 + $0x308] sm:$0xff]
    %v138 = vld [vmem:[#allocation2 + $0x310] sm:$0xff]
    %v139 = vld [vmem:[#allocation2 + $0x318] sm:$0xff]
    %v140 = vld [vmem:[#allocation2 + $0x320] sm:$0xff]
    %v141 = vld [vmem:[#allocation2 + $0x328] sm:$0xff]
    %v142 = vld [vmem:[#allocation2 + $0x330] sm:$0xff]
    %v143 = vld [vmem:[#allocation2 + $0x338] sm:$0xff]
    %v144 = vld [vmem:[#allocation2 + $0x340] sm:$0xff]
    %v145 = vld [vmem:[#allocation2 + $0x348] sm:$0xff]
    %v146 = vld [vmem:[#allocation2 + $0x350] sm:$0xff]
    %v147 = vld [vmem:[#allocation2 + $0x358] sm:$0xff]
    %v148 = vld [vmem:[#allocation2 + $0x360] sm:$0xff]
    %v149 = vld [vmem:[#allocation2 + $0x368] sm:$0xff]
    %v150 = vld [vmem:[#allocation2 + $0x370] sm:$0xff]
    %v151 = vld [vmem:[#allocation2 + $0x378] sm:$0xff]
    %v152 = vld [vmem:[#allocation2 + $0x380] sm:$0xff]
    %v153 = vld [vmem:[#allocation2 + $0x388] sm:$0xff]
    %v154 = vld [vmem:[#allocation2 + $0x390] sm:$0xff]
    %v155 = vld [vmem:[#allocation2 + $0x398] sm:$0xff]
    %v156 = vld [vmem:[#allocation2 + $0x3a0] sm:$0xff]
    %v157 = vld [vmem:[#allocation2 + $0x3a8] sm:$0xff]
    %v158 = vld [vmem:[#allocation2 + $0x3b0] sm:$0xff]
    %v159 = vld [vmem:[#allocation2 + $0x3b8] sm:$0xff]
    %v160 = vld [vmem:[#allocation2 + $0x3c0] sm:$0xff]
    %v161 = vld [vmem:[#allocation2 + $0x3c8] sm:$0xff]
    %v162 = vld [vmem:[#allocation2 + $0x3d0] sm:$0xff]
    %v163 = vld [vmem:[#allocation2 + $0x3d8] sm:$0xff]
    %v164 = vld [vmem:[#allocation2 + $0x3e0] sm:$0xff]
    %v165 = vld [vmem:[#allocation2 + $0x3e8] sm:$0xff]
    %v166 = vld [vmem:[#allocation2 + $0x3f0] sm:$0xff]
    %v167 = vld [vmem:[#allocation2 + $0x3f8] sm:$0xff]
    %v168 = vld [vmem:[#allocation2 + $0x400] sm:$0xff]
    %v169 = vld [vmem:[#allocation2 + $0x408] sm:$0xff]
    %v170 = vld [vmem:[#allocation2 + $0x410] sm:$0xff]
    %v171 = vld [vmem:[#allocation2 + $0x418] sm:$0xff]
    %v172 = vld [vmem:[#allocation2 + $0x420] sm:$0xff]
    %v173 = vld [vmem:[#allocation2 + $0x428] sm:$0xff]
    %v174 = vld [vmem:[#allocation2 + $0x430] sm:$0xff]
    %v175 = vld [vmem:[#allocation2 + $0x438] sm:$0xff]
    %v176 = vld [vmem:[#allocation2 + $0x440] sm:$0xff]
    %v177 = vld [vmem:[#allocation2 + $0x448] sm:$0xff]
    %v178 = vld [vmem:[#allocation2 + $0x450] sm:$0xff]
    %v179 = vld [vmem:[#allocation2 + $0x458] sm:$0xff]
    %v180 = vld [vmem:[#allocation2 + $0x460] sm:$0xff]
    %v181 = vld [vmem:[#allocation2 + $0x468] sm:$0xff]
    %v182 = vld [vmem:[#allocation2 + $0x470] sm:$0xff]
    %v183 = vld [vmem:[#allocation2 + $0x478] sm:$0xff]
    %v184 = vld [vmem:[#allocation2 + $0x480] sm:$0xff]
    %v185 = vld [vmem:[#allocation2 + $0x488] sm:$0xff]
    %v186 = vld [vmem:[#allocation2 + $0x490] sm:$0xff]
    %v187 = vld [vmem:[#allocation2 + $0x498] sm:$0xff]
    %v188 = vld [vmem:[#allocation2 + $0x4a0] sm:$0xff]
    %v189 = vld [vmem:[#allocation2 + $0x4a8] sm:$0xff]
    %v190 = vld [vmem:[#allocation2 + $0x4b0] sm:$0xff]
    %v191 = vld [vmem:[#allocation2 + $0x4b8] sm:$0xff]
    %v192 = vld [vmem:[#allocation2 + $0x4c0] sm:$0xff]
    %v193 = vld [vmem:[#allocation2 + $0x4c8] sm:$0xff]
    %v194 = vld [vmem:[#allocation2 + $0x4d0] sm:$0xff]
    %v195 = vld [vmem:[#allocation2 + $0x4d8] sm:$0xff]
    %v196 = vld [vmem:[#allocation2 + $0x4e0] sm:$0xff]
    %v197 = vld [vmem:[#allocation2 + $0x4e8] sm:$0xff]
    %v198 = vld [vmem:[#allocation2 + $0x4f0] sm:$0xff]
    %v199 = vld [vmem:[#allocation2 + $0x4f8] sm:$0xff]
    %v200 = vld [vmem:[#allocation2 + $0x500] sm:$0xff]
    %v201 = vld [vmem:[#allocation2 + $0x508] sm:$0xff]
    %v202 = vld [vmem:[#allocation2 + $0x510] sm:$0xff]
    %v203 = vld [vmem:[#allocation2 + $0x518] sm:$0xff]
    %v204 = vld [vmem:[#allocation2 + $0x520] sm:$0xff]
    %v205 = vld [vmem:[#allocation2 + $0x528] sm:$0xff]
    %v206 = vld [vmem:[#allocation2 + $0x530] sm:$0xff]
    %v207 = vld [vmem:[#allocation2 + $0x538] sm:$0xff]
    %v208 = vld [vmem:[#allocation2 + $0x540] sm:$0xff]
    %v209 = vld [vmem:[#allocation2 + $0x548] sm:$0xff]
    %v210 = vld [vmem:[#allocation2 + $0x550] sm:$0xff]
    %v211 = vld [vmem:[#allocation2 + $0x558] sm:$0xff]
    %v212 = vld [vmem:[#allocation2 + $0x560] sm:$0xff]
    %v213 = vld [vmem:[#allocation2 + $0x568] sm:$0xff]
    %v214 = vld [vmem:[#allocation2 + $0x570] sm:$0xff]
    %v215 = vld [vmem:[#allocation2 + $0x578] sm:$0xff]
    %v216 = vld [vmem:[#allocation2 + $0x580] sm:$0xff]
    %v217 = vld [vmem:[#allocation2 + $0x588] sm:$0xff]
    %v218 = vld [vmem:[#allocation2 + $0x590] sm:$0xff]
    %v219 = vld [vmem:[#allocation2 + $0x598] sm:$0xff]
    %v220 = vld [vmem:[#allocation2 + $0x5a0] sm:$0xff]
    %v221 = vld [vmem:[#allocation2 + $0x5a8] sm:$0xff]
    %v222 = vld [vmem:[#allocation2 + $0x5b0] sm:$0xff]
    %v223 = vld [vmem:[#allocation2 + $0x5b8] sm:$0xff]
    %v224 = vld [vmem:[#allocation2 + $0x5c0] sm:$0xff]
    %v225 = vld [vmem:[#allocation2 + $0x5c8] sm:$0xff]
    %v226 = vld [vmem:[#allocation2 + $0x5d0] sm:$0xff]
    %v227 = vld [vmem:[#allocation2 + $0x5d8] sm:$0xff]
    %v228 = vld [vmem:[#allocation2 + $0x5e0] sm:$0xff]
    %v229 = vld [vmem:[#allocation2 + $0x5e8] sm:$0xff]
    %v230 = vld [vmem:[#allocation2 + $0x5f0] sm:$0xff]
    %v231 = vld [vmem:[#allocation2 + $0x5f8] sm:$0xff]
    %v232 = vld [vmem:[#allocation2 + $0x600] sm:$0xff]
    %v233 = vld [vmem:[#allocation2 + $0x608] sm:$0xff]
    %v234 = vld [vmem:[#allocation2 + $0x610] sm:$0xff]
    %v235 = vld [vmem:[#allocation2 + $0x618] sm:$0xff]
    %v236 = vld [vmem:[#allocation2 + $0x620] sm:$0xff]
    %v237 = vld [vmem:[#allocation2 + $0x628] sm:$0xff]
    %v238 = vld [vmem:[#allocation2 + $0x630] sm:$0xff]
    %v239 = vld [vmem:[#allocation2 + $0x638] sm:$0xff]
    %v240 = vld [vmem:[#allocation2 + $0x640] sm:$0xff]
    %v241 = vld [vmem:[#allocation2 + $0x648] sm:$0xff]
    %v242 = vld [vmem:[#allocation2 + $0x650] sm:$0xff]
    %v243 = vld [vmem:[#allocation2 + $0x658] sm:$0xff]
    %v244 = vld [vmem:[#allocation2 + $0x660] sm:$0xff]
    %v245 = vld [vmem:[#allocation2 + $0x668] sm:$0xff]
    %v246 = vld [vmem:[#allocation2 + $0x670] sm:$0xff]
    %v247 = vld [vmem:[#allocation2 + $0x678] sm:$0xff]
    %v248 = vld [vmem:[#allocation2 + $0x680] sm:$0xff]
    %v249 = vld [vmem:[#allocation2 + $0x688] sm:$0xff]
    %v250 = vld [vmem:[#allocation2 + $0x690] sm:$0xff]
    %v251 = vld [vmem:[#allocation2 + $0x698] sm:$0xff]
    %v252 = vld [vmem:[#allocation2 + $0x6a0] sm:$0xff]
    %v253 = vld [vmem:[#allocation2 + $0x6a8] sm:$0xff]
    %v254 = vld [vmem:[#allocation2 + $0x6b0] sm:$0xff]
    %v255 = vld [vmem:[#allocation2 + $0x6b8] sm:$0xff]
    %v256 = vld [vmem:[#allocation2 + $0x6c0] sm:$0xff]
    %v257 = vld [vmem:[#allocation2 + $0x6c8] sm:$0xff]
    %v258 = vld [vmem:[#allocation2 + $0x6d0] sm:$0xff]
    %v259 = vld [vmem:[#allocation2 + $0x6d8] sm:$0xff]
    %v260 = vld [vmem:[#allocation2 + $0x6e0] sm:$0xff]
    %v261 = vld [vmem:[#allocation2 + $0x6e8] sm:$0xff]
    %v262 = vld [vmem:[#allocation2 + $0x6f0] sm:$0xff]
    %v263 = vld [vmem:[#allocation2 + $0x6f8] sm:$0xff]
    %v264 = vld [vmem:[#allocation2 + $0x700] sm:$0xff]
    %v265 = vld [vmem:[#allocation2 + $0x708] sm:$0xff]
    %v266 = vld [vmem:[#allocation2 + $0x710] sm:$0xff]
    %v267 = vld [vmem:[#allocation2 + $0x718] sm:$0xff]
    %v268 = vld [vmem:[#allocation2 + $0x720] sm:$0xff]
    %v269 = vld [vmem:[#allocation2 + $0x728] sm:$0xff]
    %v270 = vld [vmem:[#allocation2 + $0x730] sm:$0xff]
    %v271 = vld [vmem:[#allocation2 + $0x738] sm:$0xff]
    %v272 = vld [vmem:[#allocation2 + $0x740] sm:$0xff]
    %v273 = vld [vmem:[#allocation2 + $0x748] sm:$0xff]
    %v274 = vld [vmem:[#allocation2 + $0x750] sm:$0xff]
    %v275 = vld [vmem:[#allocation2 + $0x758] sm:$0xff]
    %v276 = vld [vmem:[#allocation2 + $0x760] sm:$0xff]
    %v277 = vld [vmem:[#allocation2 + $0x768] sm:$0xff]
    %v278 = vld [vmem:[#allocation2 + $0x770] sm:$0xff]
    %v279 = vld [vmem:[#allocation2 + $0x778] sm:$0xff]
    %v280 = vld [vmem:[#allocation2 + $0x780] sm:$0xff]
    %v281 = vld [vmem:[#allocation2 + $0x788] sm:$0xff]
    %v282 = vld [vmem:[#allocation2 + $0x790] sm:$0xff]
    %v283 = vld [vmem:[#allocation2 + $0x798] sm:$0xff]
    %v284 = vld [vmem:[#allocation2 + $0x7a0] sm:$0xff]
    %v285 = vld [vmem:[#allocation2 + $0x7a8] sm:$0xff]
    %v286 = vld [vmem:[#allocation2 + $0x7b0] sm:$0xff]
    %v287 = vld [vmem:[#allocation2 + $0x7b8] sm:$0xff]
    %v288 = vld [vmem:[#allocation2 + $0x7c0] sm:$0xff]
    %v289 = vld [vmem:[#allocation2 + $0x7c8] sm:$0xff]
    %v290 = vld [vmem:[#allocation2 + $0x7d0] sm:$0xff]
    %v291 = vld [vmem:[#allocation2 + $0x7d8] sm:$0xff]
    %v292 = vld [vmem:[#allocation2 + $0x7e0] sm:$0xff]
    %v293 = vld [vmem:[#allocation2 + $0x7e8] sm:$0xff]
    %v294 = vld [vmem:[#allocation2 + $0x7f0] sm:$0xff]
    %v295 = vld [vmem:[#allocation2 + $0x7f8] sm:$0xff]
    %v296 = vld [vmem:[#allocation2 + $0x800] sm:$0xff]
    %v297 = vld [vmem:[#allocation2 + $0x808] sm:$0xff]
    %v298 = vld [vmem:[#allocation2 + $0x810] sm:$0xff]
    %v299 = vld [vmem:[#allocation2 + $0x818] sm:$0xff]
    %v300 = vld [vmem:[#allocation2 + $0x820] sm:$0xff]
    %v301 = vld [vmem:[#allocation2 + $0x828] sm:$0xff]
    %v302 = vld [vmem:[#allocation2 + $0x830] sm:$0xff]
    %v303 = vld [vmem:[#allocation2 + $0x838] sm:$0xff]
    %v304 = vld [vmem:[#allocation2 + $0x840] sm:$0xff]
    %v305 = vld [vmem:[#allocation2 + $0x848] sm:$0xff]
    %v306 = vld [vmem:[#allocation2 + $0x850] sm:$0xff]
    %v307 = vld [vmem:[#allocation2 + $0x858] sm:$0xff]
    %v308 = vld [vmem:[#allocation2 + $0x860] sm:$0xff]
    %v309 = vld [vmem:[#allocation2 + $0x868] sm:$0xff]
    %v310 = vld [vmem:[#allocation2 + $0x870] sm:$0xff]
    %v311 = vld [vmem:[#allocation2 + $0x878] sm:$0xff]
    %v312 = vld [vmem:[#allocation2 + $0x880] sm:$0xff]
    %v313 = vld [vmem:[#allocation2 + $0x888] sm:$0xff]
    %v314 = vld [vmem:[#allocation2 + $0x890] sm:$0xff]
    %v315 = vld [vmem:[#allocation2 + $0x898] sm:$0xff]
    %v316 = vld [vmem:[#allocation2 + $0x8a0] sm:$0xff]
    %v317 = vld [vmem:[#allocation2 + $0x8a8] sm:$0xff]
    %v318 = vld [vmem:[#allocation2 + $0x8b0] sm:$0xff]
    %v319 = vld [vmem:[#allocation2 + $0x8b8] sm:$0xff]
    %v320 = vld [vmem:[#allocation2 + $0x8c0] sm:$0xff]
    %v321 = vld [vmem:[#allocation2 + $0x8c8] sm:$0xff]
    %v322 = vld [vmem:[#allocation2 + $0x8d0] sm:$0xff]
    %v323 = vld [vmem:[#allocation2 + $0x8d8] sm:$0xff]
    %v324 = vld [vmem:[#allocation2 + $0x8e0] sm:$0xff]
    %v325 = vld [vmem:[#allocation2 + $0x8e8] sm:$0xff]
    %v326 = vld [vmem:[#allocation2 + $0x8f0] sm:$0xff]
    %v327 = vld [vmem:[#allocation2 + $0x8f8] sm:$0xff]
    %v328 = vld [vmem:[#allocation2 + $0x900] sm:$0xff]
    %v329 = vld [vmem:[#allocation2 + $0x908] sm:$0xff]
    %v330 = vld [vmem:[#allocation2 + $0x910] sm:$0xff]
    %v331 = vld [vmem:[#allocation2 + $0x918] sm:$0xff]
    %v332 = vld [vmem:[#allocation2 + $0x920] sm:$0xff]
    %v333 = vld [vmem:[#allocation2 + $0x928] sm:$0xff]
    %v334 = vld [vmem:[#allocation2 + $0x930] sm:$0xff]
    %v335 = vld [vmem:[#allocation2 + $0x938] sm:$0xff]
    %v336 = vld [vmem:[#allocation2 + $0x940] sm:$0xff]
    %v337 = vld [vmem:[#allocation2 + $0x948] sm:$0xff]
    %v338 = vld [vmem:[#allocation2 + $0x950] sm:$0xff]
    %v339 = vld [vmem:[#allocation2 + $0x958] sm:$0xff]
    %v340 = vld [vmem:[#allocation2 + $0x960] sm:$0xff]
    %v341 = vld [vmem:[#allocation2 + $0x968] sm:$0xff]
    %v342 = vld [vmem:[#allocation2 + $0x970] sm:$0xff]
    %v343 = vld [vmem:[#allocation2 + $0x978] sm:$0xff]
    %v344 = vld [vmem:[#allocation2 + $0x980] sm:$0xff]
    %v345 = vld [vmem:[#allocation2 + $0x988] sm:$0xff]
    %v346 = vld [vmem:[#allocation2 + $0x990] sm:$0xff]
    %v347 = vld [vmem:[#allocation2 + $0x998] sm:$0xff]
    %v348 = vld [vmem:[#allocation2 + $0x9a0] sm:$0xff]
    %v349 = vld [vmem:[#allocation2 + $0x9a8] sm:$0xff]
    %v350 = vld [vmem:[#allocation2 + $0x9b0] sm:$0xff]
    %v351 = vld [vmem:[#allocation2 + $0x9b8] sm:$0xff]
    %v352 = vld [vmem:[#allocation2 + $0x9c0] sm:$0xff]
    %v353 = vld [vmem:[#allocation2 + $0x9c8] sm:$0xff]
    %v354 = vld [vmem:[#allocation2 + $0x9d0] sm:$0xff]
    %v355 = vld [vmem:[#allocation2 + $0x9d8] sm:$0xff]
    %v356 = vld [vmem:[#allocation2 + $0x9e0] sm:$0xff]
    %v357 = vld [vmem:[#allocation2 + $0x9e8] sm:$0xff]
    %v358 = vld [vmem:[#allocation2 + $0x9f0] sm:$0xff]
    %v359 = vld [vmem:[#allocation2 + $0x9f8] sm:$0xff]
    %v360 = vld [vmem:[#allocation2 + $0xa00] sm:$0xff]
    %v361 = vld [vmem:[#allocation2 + $0xa08] sm:$0xff]
    %v362 = vld [vmem:[#allocation2 + $0xa10] sm:$0xff]
    %v363 = vld [vmem:[#allocation2 + $0xa18] sm:$0xff]
    %v364 = vld [vmem:[#allocation2 + $0xa20] sm:$0xff]
    %v365 = vld [vmem:[#allocation2 + $0xa28] sm:$0xff]
    %v366 = vld [vmem:[#allocation2 + $0xa30] sm:$0xff]
    %v367 = vld [vmem:[#allocation2 + $0xa38] sm:$0xff]
    %v368 = vld [vmem:[#allocation2 + $0xa40] sm:$0xff]
    %v369 = vld [vmem:[#allocation2 + $0xa48] sm:$0xff]
    %v370 = vld [vmem:[#allocation2 + $0xa50] sm:$0xff]
    %v371 = vld [vmem:[#allocation2 + $0xa58] sm:$0xff]
    %v372 = vld [vmem:[#allocation2 + $0xa60] sm:$0xff]
    %v373 = vld [vmem:[#allocation2 + $0xa68] sm:$0xff]
    %v374 = vld [vmem:[#allocation2 + $0xa70] sm:$0xff]
    %v375 = vld [vmem:[#allocation2 + $0xa78] sm:$0xff]
    %v376 = vld [vmem:[#allocation2 + $0xa80] sm:$0xff]
    %v377 = vld [vmem:[#allocation2 + $0xa88] sm:$0xff]
    %v378 = vld [vmem:[#allocation2 + $0xa90] sm:$0xff]
    %v379 = vld [vmem:[#allocation2 + $0xa98] sm:$0xff]
    %v380 = vld [vmem:[#allocation2 + $0xaa0] sm:$0xff]
    %v381 = vld [vmem:[#allocation2 + $0xaa8] sm:$0xff]
    %v382 = vld [vmem:[#allocation2 + $0xab0] sm:$0xff]
    %v383 = vld [vmem:[#allocation2 + $0xab8] sm:$0xff]
    %v384 = vld [vmem:[#allocation2 + $0xac0] sm:$0xff]
    %v385 = vld [vmem:[#allocation2 + $0xac8] sm:$0xff]
    %v386 = vld [vmem:[#allocation2 + $0xad0] sm:$0xff]
    %v387 = vld [vmem:[#allocation2 + $0xad8] sm:$0xff]
    %v388 = vld [vmem:[#allocation2 + $0xae0] sm:$0xff]
    %v389 = vld [vmem:[#allocation2 + $0xae8] sm:$0xff]
    %v390 = vld [vmem:[#allocation2 + $0xaf0] sm:$0xff]
    %v391 = vld [vmem:[#allocation2 + $0xaf8] sm:$0xff]
    %v392 = vld [vmem:[#allocation2 + $0xb00] sm:$0xff]
    %v393 = vld [vmem:[#allocation2 + $0xb08] sm:$0xff]
    %v394 = vld [vmem:[#allocation2 + $0xb10] sm:$0xff]
    %v395 = vld [vmem:[#allocation2 + $0xb18] sm:$0xff]
    %v396 = vld [vmem:[#allocation2 + $0xb20] sm:$0xff]
    %v397 = vld [vmem:[#allocation2 + $0xb28] sm:$0xff]
    %v398 = vld [vmem:[#allocation2 + $0xb30] sm:$0xff]
    %v399 = vld [vmem:[#allocation2 + $0xb38] sm:$0xff]
    %v400 = vld [vmem:[#allocation2 + $0xb40] sm:$0xff]
    %v401 = vld [vmem:[#allocation2 + $0xb48] sm:$0xff]
    %v402 = vld [vmem:[#allocation2 + $0xb50] sm:$0xff]
    %v403 = vld [vmem:[#allocation2 + $0xb58] sm:$0xff]
    %v404 = vld [vmem:[#allocation2 + $0xb60] sm:$0xff]
    %v405 = vld [vmem:[#allocation2 + $0xb68] sm:$0xff]
    %v406 = vld [vmem:[#allocation2 + $0xb70] sm:$0xff]
    %v407 = vld [vmem:[#allocation2 + $0xb78] sm:$0xff]
    %v408 = vld [vmem:[#allocation2 + $0xb80] sm:$0xff]
    %v409 = vld [vmem:[#allocation2 + $0xb88] sm:$0xff]
    %v410 = vld [vmem:[#allocation2 + $0xb90] sm:$0xff]
    %v411 = vld [vmem:[#allocation2 + $0xb98] sm:$0xff]
    %v412 = vld [vmem:[#allocation2 + $0xba0] sm:$0xff]
    %v413 = vld [vmem:[#allocation2 + $0xba8] sm:$0xff]
    %v414 = vld [vmem:[#allocation2 + $0xbb0] sm:$0xff]
    %v415 = vld [vmem:[#allocation2 + $0xbb8] sm:$0xff]
    %v416 = vld [vmem:[#allocation2 + $0xbc0] sm:$0xff]
    %v417 = vld [vmem:[#allocation2 + $0xbc8] sm:$0xff]
    %v418 = vld [vmem:[#allocation2 + $0xbd0] sm:$0xff]
    %v419 = vld [vmem:[#allocation2 + $0xbd8] sm:$0xff]
    %v420 = vld [vmem:[#allocation2 + $0xbe0] sm:$0xff]
    %v421 = vld [vmem:[#allocation2 + $0xbe8] sm:$0xff]
    %v422 = vld [vmem:[#allocation2 + $0xbf0] sm:$0xff]
    %v423 = vld [vmem:[#allocation2 + $0xbf8] sm:$0xff]
    %v424 = vld [vmem:[#allocation2 + $0xc00] sm:$0xff]
    %v425 = vld [vmem:[#allocation2 + $0xc08] sm:$0xff]
    %v426 = vld [vmem:[#allocation2 + $0xc10] sm:$0xff]
    %v427 = vld [vmem:[#allocation2 + $0xc18] sm:$0xff]
    %v428 = vld [vmem:[#allocation2 + $0xc20] sm:$0xff]
    %v429 = vld [vmem:[#allocation2 + $0xc28] sm:$0xff]
    %v430 = vld [vmem:[#allocation2 + $0xc30] sm:$0xff]
    %v431 = vld [vmem:[#allocation2 + $0xc38] sm:$0xff]
    %v432 = vld [vmem:[#allocation2 + $0xc40] sm:$0xff]
    %v433 = vld [vmem:[#allocation2 + $0xc48] sm:$0xff]
    %v434 = vld [vmem:[#allocation2 + $0xc50] sm:$0xff]
    %v435 = vld [vmem:[#allocation2 + $0xc58] sm:$0xff]
    %v436 = vld [vmem:[#allocation2 + $0xc60] sm:$0xff]
    %v437 = vld [vmem:[#allocation2 + $0xc68] sm:$0xff]
    %v438 = vld [vmem:[#allocation2 + $0xc70] sm:$0xff]
    %v439 = vld [vmem:[#allocation2 + $0xc78] sm:$0xff]
    %v440 = vld [vmem:[#allocation2 + $0xc80] sm:$0xff]
    %v441 = vld [vmem:[#allocation2 + $0xc88] sm:$0xff]
    %v442 = vld [vmem:[#allocation2 + $0xc90] sm:$0xff]
    %v443 = vld [vmem:[#allocation2 + $0xc98] sm:$0xff]
    %v444 = vld [vmem:[#allocation2 + $0xca0] sm:$0xff]
    %v445 = vld [vmem:[#allocation2 + $0xca8] sm:$0xff]
    %v446 = vld [vmem:[#allocation2 + $0xcb0] sm:$0xff]
    %v447 = vld [vmem:[#allocation2 + $0xcb8] sm:$0xff]
    %v448 = vld [vmem:[#allocation2 + $0xcc0] sm:$0xff]
    %v449 = vld [vmem:[#allocation2 + $0xcc8] sm:$0xff]
    %v450 = vld [vmem:[#allocation2 + $0xcd0] sm:$0xff]
    %v451 = vld [vmem:[#allocation2 + $0xcd8] sm:$0xff]
    %v452 = vld [vmem:[#allocation2 + $0xce0] sm:$0xff]
    %v453 = vld [vmem:[#allocation2 + $0xce8] sm:$0xff]
    %v454 = vld [vmem:[#allocation2 + $0xcf0] sm:$0xff]
    %v455 = vld [vmem:[#allocation2 + $0xcf8] sm:$0xff]
    %v456 = vld [vmem:[#allocation2 + $0xd00] sm:$0xff]
    %v457 = vld [vmem:[#allocation2 + $0xd08] sm:$0xff]
    %v458 = vld [vmem:[#allocation2 + $0xd10] sm:$0xff]
    %v459 = vld [vmem:[#allocation2 + $0xd18] sm:$0xff]
    %v460 = vld [vmem:[#allocation2 + $0xd20] sm:$0xff]
    %v461 = vld [vmem:[#allocation2 + $0xd28] sm:$0xff]
    %v462 = vld [vmem:[#allocation2 + $0xd30] sm:$0xff]
    %v463 = vld [vmem:[#allocation2 + $0xd38] sm:$0xff]
    %v464 = vld [vmem:[#allocation2 + $0xd40] sm:$0xff]
    %v465 = vld [vmem:[#allocation2 + $0xd48] sm:$0xff]
    %v466 = vld [vmem:[#allocation2 + $0xd50] sm:$0xff]
    %v467 = vld [vmem:[#allocation2 + $0xd58] sm:$0xff]
    %v468 = vld [vmem:[#allocation2 + $0xd60] sm:$0xff]
    %v469 = vld [vmem:[#allocation2 + $0xd68] sm:$0xff]
    %v470 = vld [vmem:[#allocation2 + $0xd70] sm:$0xff]
    %v471 = vld [vmem:[#allocation2 + $0xd78] sm:$0xff]
    %v472 = vld [vmem:[#allocation2 + $0xd80] sm:$0xff]
    %v473 = vld [vmem:[#allocation2 + $0xd88] sm:$0xff]
    %v474 = vld [vmem:[#allocation2 + $0xd90] sm:$0xff]
    %v475 = vld [vmem:[#allocation2 + $0xd98] sm:$0xff]
    %v476 = vld [vmem:[#allocation2 + $0xda0] sm:$0xff]
    %v477 = vld [vmem:[#allocation2 + $0xda8] sm:$0xff]
    %v478 = vld [vmem:[#allocation2 + $0xdb0] sm:$0xff]
    %v479 = vld [vmem:[#allocation2 + $0xdb8] sm:$0xff]
    %v480 = vld [vmem:[#allocation2 + $0xdc0] sm:$0xff]
    %v481 = vld [vmem:[#allocation2 + $0xdc8] sm:$0xff]
    %v482 = vld [vmem:[#allocation2 + $0xdd0] sm:$0xff]
    %v483 = vld [vmem:[#allocation2 + $0xdd8] sm:$0xff]
    %v484 = vld [vmem:[#allocation2 + $0xde0] sm:$0xff]
    %v485 = vld [vmem:[#allocation2 + $0xde8] sm:$0xff]
    %v486 = vld [vmem:[#allocation2 + $0xdf0] sm:$0xff]
    %v487 = vld [vmem:[#allocation2 + $0xdf8] sm:$0xff]
    %v488 = vld [vmem:[#allocation2 + $0xe00] sm:$0xff]
    %v489 = vld [vmem:[#allocation2 + $0xe08] sm:$0xff]
    %v490 = vld [vmem:[#allocation2 + $0xe10] sm:$0xff]
    %v491 = vld [vmem:[#allocation2 + $0xe18] sm:$0xff]
    %v492 = vld [vmem:[#allocation2 + $0xe20] sm:$0xff]
    %v493 = vld [vmem:[#allocation2 + $0xe28] sm:$0xff]
    %v494 = vld [vmem:[#allocation2 + $0xe30] sm:$0xff]
    %v495 = vld [vmem:[#allocation2 + $0xe38] sm:$0xff]
    %v496 = vld [vmem:[#allocation2 + $0xe40] sm:$0xff]
    %v497 = vld [vmem:[#allocation2 + $0xe48] sm:$0xff]
    %v498 = vld [vmem:[#allocation2 + $0xe50] sm:$0xff]
    %v499 = vld [vmem:[#allocation2 + $0xe58] sm:$0xff]
    %v500 = vld [vmem:[#allocation2 + $0xe60] sm:$0xff]
    %v501 = vld [vmem:[#allocation2 + $0xe68] sm:$0xff]
    %v502 = vld [vmem:[#allocation2 + $0xe70] sm:$0xff]
    %v503 = vld [vmem:[#allocation2 + $0xe78] sm:$0xff]
    %v504 = vld [vmem:[#allocation2 + $0xe80] sm:$0xff]
    %v505 = vld [vmem:[#allocation2 + $0xe88] sm:$0xff]
    %v506 = vld [vmem:[#allocation2 + $0xe90] sm:$0xff]
    %v507 = vld [vmem:[#allocation2 + $0xe98] sm:$0xff]
    %v508 = vld [vmem:[#allocation2 + $0xea0] sm:$0xff]
    %v509 = vld [vmem:[#allocation2 + $0xea8] sm:$0xff]
    %v510 = vld [vmem:[#allocation2 + $0xeb0] sm:$0xff]
    %v511 = vld [vmem:[#allocation2 + $0xeb8] sm:$0xff]
    %v512 = vld [vmem:[#allocation2 + $0xec0] sm:$0xff]
    %v513 = vld [vmem:[#allocation2 + $0xec8] sm:$0xff]
    %v514 = vld [vmem:[#allocation2 + $0xed0] sm:$0xff]
    %v515 = vld [vmem:[#allocation2 + $0xed8] sm:$0xff]
    %v516 = vld [vmem:[#allocation2 + $0xee0] sm:$0xff]
    %v517 = vld [vmem:[#allocation2 + $0xee8] sm:$0xff]
    %v518 = vld [vmem:[#allocation2 + $0xef0] sm:$0xff]
    %v519 = vld [vmem:[#allocation2 + $0xef8] sm:$0xff]
    %v520 = vld [vmem:[#allocation2 + $0xf00] sm:$0xff]
    %v521 = vld [vmem:[#allocation2 + $0xf08] sm:$0xff]
    %v522 = vld [vmem:[#allocation2 + $0xf10] sm:$0xff]
    %v523 = vld [vmem:[#allocation2 + $0xf18] sm:$0xff]
    %v524 = vld [vmem:[#allocation2 + $0xf20] sm:$0xff]
    %v525 = vld [vmem:[#allocation2 + $0xf28] sm:$0xff]
    %v526 = vld [vmem:[#allocation2 + $0xf30] sm:$0xff]
    %v527 = vld [vmem:[#allocation2 + $0xf38] sm:$0xff]
    %v528 = vld [vmem:[#allocation2 + $0xf40] sm:$0xff]
    %v529 = vld [vmem:[#allocation2 + $0xf48] sm:$0xff]
    %v530 = vld [vmem:[#allocation2 + $0xf50] sm:$0xff]
    %v531 = vld [vmem:[#allocation2 + $0xf58] sm:$0xff]
    %v532 = vld [vmem:[#allocation2 + $0xf60] sm:$0xff]
    %v533 = vld [vmem:[#allocation2 + $0xf68] sm:$0xff]
    %v534 = vld [vmem:[#allocation2 + $0xf70] sm:$0xff]
    %v535 = vld [vmem:[#allocation2 + $0xf78] sm:$0xff]
    %v536 = vld [vmem:[#allocation2 + $0xf80] sm:$0xff]
    %v537 = vld [vmem:[#allocation2 + $0xf88] sm:$0xff]
    %v538 = vld [vmem:[#allocation2 + $0xf90] sm:$0xff]
    %v539 = vld [vmem:[#allocation2 + $0xf98] sm:$0xff]
    %v540 = vld [vmem:[#allocation2 + $0xfa0] sm:$0xff]
    %v541 = vld [vmem:[#allocation2 + $0xfa8] sm:$0xff]
    %v542 = vld [vmem:[#allocation2 + $0xfb0] sm:$0xff]
    %v543 = vld [vmem:[#allocation2 + $0xfb8] sm:$0xff]
    %v544 = vld [vmem:[#allocation2 + $0xfc0] sm:$0xff]
    %v545 = vld [vmem:[#allocation2 + $0xfc8] sm:$0xff]
    %v546 = vld [vmem:[#allocation2 + $0xfd0] sm:$0xff]
    %v547 = vld [vmem:[#allocation2 + $0xfd8] sm:$0xff]
    %v548 = vld [vmem:[#allocation2 + $0xfe0] sm:$0xff]
    %v549 = vld [vmem:[#allocation2 + $0xfe8] sm:$0xff]
    %v550 = vld [vmem:[#allocation2 + $0xff0] sm:$0xff]
    %v551 = vld [vmem:[#allocation2 + $0xff8] sm:$0xff]
    %v552 = vld [vmem:[#allocation5] sm:$0xff]
    %v553 = vld [vmem:[#allocation5 + $0x8] sm:$0xff]
    %v554 = vld [vmem:[#allocation5 + $0x10] sm:$0xff]
    %v555 = vld [vmem:[#allocation5 + $0x18] sm:$0xff]
    %v556 = vld [vmem:[#allocation5 + $0x20] sm:$0xff]
    %v557 = vld [vmem:[#allocation5 + $0x28] sm:$0xff]
    %v558 = vld [vmem:[#allocation5 + $0x30] sm:$0xff]
    %v559 = vld [vmem:[#allocation5 + $0x38] sm:$0xff]
    %v560 = vld [vmem:[#allocation5 + $0x40] sm:$0xff]
    %v561 = vld [vmem:[#allocation5 + $0x48] sm:$0xff]
    %v562 = vld [vmem:[#allocation5 + $0x50] sm:$0xff]
    %v563 = vld [vmem:[#allocation5 + $0x58] sm:$0xff]
    %v564 = vld [vmem:[#allocation5 + $0x60] sm:$0xff]
    %v565 = vld [vmem:[#allocation5 + $0x68] sm:$0xff]
    %v566 = vld [vmem:[#allocation5 + $0x70] sm:$0xff]
    %v567 = vld [vmem:[#allocation5 + $0x78] sm:$0xff]
    %v568 = vld [vmem:[#allocation5 + $0x80] sm:$0xff]
    %v569 = vld [vmem:[#allocation5 + $0x88] sm:$0xff]
    %v570 = vld [vmem:[#allocation5 + $0x90] sm:$0xff]
    %v571 = vld [vmem:[#allocation5 + $0x98] sm:$0xff]
    %v572 = vld [vmem:[#allocation5 + $0xa0] sm:$0xff]
    %v573 = vld [vmem:[#allocation5 + $0xa8] sm:$0xff]
    %v574 = vld [vmem:[#allocation5 + $0xb0] sm:$0xff]
    %v575 = vld [vmem:[#allocation5 + $0xb8] sm:$0xff]
    %v576 = vld [vmem:[#allocation5 + $0xc0] sm:$0xff]
    %v577 = vld [vmem:[#allocation5 + $0xc8] sm:$0xff]
    %v578 = vld [vmem:[#allocation5 + $0xd0] sm:$0xff]
    %v579 = vld [vmem:[#allocation5 + $0xd8] sm:$0xff]
    %v580 = vld [vmem:[#allocation5 + $0xe0] sm:$0xff]
    %v581 = vld [vmem:[#allocation5 + $0xe8] sm:$0xff]
    %v582 = vld [vmem:[#allocation5 + $0xf0] sm:$0xff]
    %v583 = vld [vmem:[#allocation5 + $0xf8] sm:$0xff]
    %v584 = vld [vmem:[#allocation5 + $0x100] sm:$0xff]
    %v585 = vld [vmem:[#allocation5 + $0x108] sm:$0xff]
    %v586 = vld [vmem:[#allocation5 + $0x110] sm:$0xff]
    %v587 = vld [vmem:[#allocation5 + $0x118] sm:$0xff]
    %v588 = vld [vmem:[#allocation5 + $0x120] sm:$0xff]
    %v589 = vld [vmem:[#allocation5 + $0x128] sm:$0xff]
    %v590 = vld [vmem:[#allocation5 + $0x130] sm:$0xff]
    %v591 = vld [vmem:[#allocation5 + $0x138] sm:$0xff]
    %v592 = vld [vmem:[#allocation5 + $0x140] sm:$0xff]
    %v593 = vld [vmem:[#allocation5 + $0x148] sm:$0xff]
    %v594 = vld [vmem:[#allocation5 + $0x150] sm:$0xff]
    %v595 = vld [vmem:[#allocation5 + $0x158] sm:$0xff]
    %v596 = vld [vmem:[#allocation5 + $0x160] sm:$0xff]
    %v597 = vld [vmem:[#allocation5 + $0x168] sm:$0xff]
    %v598 = vld [vmem:[#allocation5 + $0x170] sm:$0xff]
    %v599 = vld [vmem:[#allocation5 + $0x178] sm:$0xff]
    %v600 = vld [vmem:[#allocation5 + $0x180] sm:$0xff]
    %v601 = vld [vmem:[#allocation5 + $0x188] sm:$0xff]
    %v602 = vld [vmem:[#allocation5 + $0x190] sm:$0xff]
    %v603 = vld [vmem:[#allocation5 + $0x198] sm:$0xff]
    %v604 = vld [vmem:[#allocation5 + $0x1a0] sm:$0xff]
    %v605 = vld [vmem:[#allocation5 + $0x1a8] sm:$0xff]
    %v606 = vld [vmem:[#allocation5 + $0x1b0] sm:$0xff]
    %v607 = vld [vmem:[#allocation5 + $0x1b8] sm:$0xff]
    %v608 = vld [vmem:[#allocation5 + $0x1c0] sm:$0xff]
    %v609 = vld [vmem:[#allocation5 + $0x1c8] sm:$0xff]
    %v610 = vld [vmem:[#allocation5 + $0x1d0] sm:$0xff]
    %v611 = vld [vmem:[#allocation5 + $0x1d8] sm:$0xff]
    %v612 = vld [vmem:[#allocation5 + $0x1e0] sm:$0xff]
    %v613 = vld [vmem:[#allocation5 + $0x1e8] sm:$0xff]
    %v614 = vld [vmem:[#allocation5 + $0x1f0] sm:$0xff]
    %v615 = vld [vmem:[#allocation5 + $0x1f8] sm:$0xff]
    %v616 = vld [vmem:[#allocation5 + $0x200] sm:$0xff]
    %v617 = vld [vmem:[#allocation5 + $0x208] sm:$0xff]
    %v618 = vld [vmem:[#allocation5 + $0x210] sm:$0xff]
    %v619 = vld [vmem:[#allocation5 + $0x218] sm:$0xff]
    %v620 = vld [vmem:[#allocation5 + $0x220] sm:$0xff]
    %v621 = vld [vmem:[#allocation5 + $0x228] sm:$0xff]
    %v622 = vld [vmem:[#allocation5 + $0x230] sm:$0xff]
    %v623 = vld [vmem:[#allocation5 + $0x238] sm:$0xff]
    %v624 = vld [vmem:[#allocation5 + $0x240] sm:$0xff]
    %v625 = vld [vmem:[#allocation5 + $0x248] sm:$0xff]
    %v626 = vld [vmem:[#allocation5 + $0x250] sm:$0xff]
    %v627 = vld [vmem:[#allocation5 + $0x258] sm:$0xff]
    %v628 = vld [vmem:[#allocation5 + $0x260] sm:$0xff]
    %v629 = vld [vmem:[#allocation5 + $0x268] sm:$0xff]
    %v630 = vld [vmem:[#allocation5 + $0x270] sm:$0xff]
    %v631 = vld [vmem:[#allocation5 + $0x278] sm:$0xff]
    %v632 = vld [vmem:[#allocation5 + $0x280] sm:$0xff]
    %v633 = vld [vmem:[#allocation5 + $0x288] sm:$0xff]
    %v634 = vld [vmem:[#allocation5 + $0x290] sm:$0xff]
    %v635 = vld [vmem:[#allocation5 + $0x298] sm:$0xff]
    %v636 = vld [vmem:[#allocation5 + $0x2a0] sm:$0xff]
    %v637 = vld [vmem:[#allocation5 + $0x2a8] sm:$0xff]
    %v638 = vld [vmem:[#allocation5 + $0x2b0] sm:$0xff]
    %v639 = vld [vmem:[#allocation5 + $0x2b8] sm:$0xff]
    %v640 = vld [vmem:[#allocation5 + $0x2c0] sm:$0xff]
    %v641 = vld [vmem:[#allocation5 + $0x2c8] sm:$0xff]
    %v642 = vld [vmem:[#allocation5 + $0x2d0] sm:$0xff]
    %v643 = vld [vmem:[#allocation5 + $0x2d8] sm:$0xff]
    %v644 = vld [vmem:[#allocation5 + $0x2e0] sm:$0xff]
    %v645 = vld [vmem:[#allocation5 + $0x2e8] sm:$0xff]
    %v646 = vld [vmem:[#allocation5 + $0x2f0] sm:$0xff]
    %v647 = vld [vmem:[#allocation5 + $0x2f8] sm:$0xff]
    %v648 = vld [vmem:[#allocation5 + $0x300] sm:$0xff]
    %v649 = vld [vmem:[#allocation5 + $0x308] sm:$0xff]
    %v650 = vld [vmem:[#allocation5 + $0x310] sm:$0xff]
    %v651 = vld [vmem:[#allocation5 + $0x318] sm:$0xff]
    %v652 = vld [vmem:[#allocation5 + $0x320] sm:$0xff]
    %v653 = vld [vmem:[#allocation5 + $0x328] sm:$0xff]
    %v654 = vld [vmem:[#allocation5 + $0x330] sm:$0xff]
    %v655 = vld [vmem:[#allocation5 + $0x338] sm:$0xff]
    %v656 = vld [vmem:[#allocation5 + $0x340] sm:$0xff]
    %v657 = vld [vmem:[#allocation5 + $0x348] sm:$0xff]
    %v658 = vld [vmem:[#allocation5 + $0x350] sm:$0xff]
    %v659 = vld [vmem:[#allocation5 + $0x358] sm:$0xff]
    %v660 = vld [vmem:[#allocation5 + $0x360] sm:$0xff]
    %v661 = vld [vmem:[#allocation5 + $0x368] sm:$0xff]
    %v662 = vld [vmem:[#allocation5 + $0x370] sm:$0xff]
    %v663 = vld [vmem:[#allocation5 + $0x378] sm:$0xff]
    %v664 = vld [vmem:[#allocation5 + $0x380] sm:$0xff]
    %v665 = vld [vmem:[#allocation5 + $0x388] sm:$0xff]
    %v666 = vld [vmem:[#allocation5 + $0x390] sm:$0xff]
    %v667 = vld [vmem:[#allocation5 + $0x398] sm:$0xff]
    %v668 = vld [vmem:[#allocation5 + $0x3a0] sm:$0xff]
    %v669 = vld [vmem:[#allocation5 + $0x3a8] sm:$0xff]
    %v670 = vld [vmem:[#allocation5 + $0x3b0] sm:$0xff]
    %v671 = vld [vmem:[#allocation5 + $0x3b8] sm:$0xff]
    %v672 = vld [vmem:[#allocation5 + $0x3c0] sm:$0xff]
    %v673 = vld [vmem:[#allocation5 + $0x3c8] sm:$0xff]
    %v674 = vld [vmem:[#allocation5 + $0x3d0] sm:$0xff]
    %v675 = vld [vmem:[#allocation5 + $0x3d8] sm:$0xff]
    %v676 = vld [vmem:[#allocation5 + $0x3e0] sm:$0xff]
    %v677 = vld [vmem:[#allocation5 + $0x3e8] sm:$0xff]
    %v678 = vld [vmem:[#allocation5 + $0x3f0] sm:$0xff]
    %v679 = vld [vmem:[#allocation5 + $0x3f8] sm:$0xff]
    %v680 = vld [vmem:[#allocation5 + $0x400] sm:$0xff]
    %v681 = vld [vmem:[#allocation5 + $0x408] sm:$0xff]
    %v682 = vld [vmem:[#allocation5 + $0x410] sm:$0xff]
    %v683 = vld [vmem:[#allocation5 + $0x418] sm:$0xff]
    %v684 = vld [vmem:[#allocation5 + $0x420] sm:$0xff]
    %v685 = vld [vmem:[#allocation5 + $0x428] sm:$0xff]
    %v686 = vld [vmem:[#allocation5 + $0x430] sm:$0xff]
    %v687 = vld [vmem:[#allocation5 + $0x438] sm:$0xff]
    %v688 = vld [vmem:[#allocation5 + $0x440] sm:$0xff]
    %v689 = vld [vmem:[#allocation5 + $0x448] sm:$0xff]
    %v690 = vld [vmem:[#allocation5 + $0x450] sm:$0xff]
    %v691 = vld [vmem:[#allocation5 + $0x458] sm:$0xff]
    %v692 = vld [vmem:[#allocation5 + $0x460] sm:$0xff]
    %v693 = vld [vmem:[#allocation5 + $0x468] sm:$0xff]
    %v694 = vld [vmem:[#allocation5 + $0x470] sm:$0xff]
    %v695 = vld [vmem:[#allocation5 + $0x478] sm:$0xff]
    %v696 = vld [vmem:[#allocation5 + $0x480] sm:$0xff]
    %v697 = vld [vmem:[#allocation5 + $0x488] sm:$0xff]
    %v698 = vld [vmem:[#allocation5 + $0x490] sm:$0xff]
    %v699 = vld [vmem:[#allocation5 + $0x498] sm:$0xff]
    %v700 = vld [vmem:[#allocation5 + $0x4a0] sm:$0xff]
    %v701 = vld [vmem:[#allocation5 + $0x4a8] sm:$0xff]
    %v702 = vld [vmem:[#allocation5 + $0x4b0] sm:$0xff]
    %v703 = vld [vmem:[#allocation5 + $0x4b8] sm:$0xff]
    %v704 = vld [vmem:[#allocation5 + $0x4c0] sm:$0xff]
    %v705 = vld [vmem:[#allocation5 + $0x4c8] sm:$0xff]
    %v706 = vld [vmem:[#allocation5 + $0x4d0] sm:$0xff]
    %v707 = vld [vmem:[#allocation5 + $0x4d8] sm:$0xff]
    %v708 = vld [vmem:[#allocation5 + $0x4e0] sm:$0xff]
    %v709 = vld [vmem:[#allocation5 + $0x4e8] sm:$0xff]
    %v710 = vld [vmem:[#allocation5 + $0x4f0] sm:$0xff]
    %v711 = vld [vmem:[#allocation5 + $0x4f8] sm:$0xff]
    %v712 = vld [vmem:[#allocation5 + $0x500] sm:$0xff]
    %v713 = vld [vmem:[#allocation5 + $0x508] sm:$0xff]
    %v714 = vld [vmem:[#allocation5 + $0x510] sm:$0xff]
    %v715 = vld [vmem:[#allocation5 + $0x518] sm:$0xff]
    %v716 = vld [vmem:[#allocation5 + $0x520] sm:$0xff]
    %v717 = vld [vmem:[#allocation5 + $0x528] sm:$0xff]
    %v718 = vld [vmem:[#allocation5 + $0x530] sm:$0xff]
    %v719 = vld [vmem:[#allocation5 + $0x538] sm:$0xff]
    %v720 = vld [vmem:[#allocation5 + $0x540] sm:$0xff]
    %v721 = vld [vmem:[#allocation5 + $0x548] sm:$0xff]
    %v722 = vld [vmem:[#allocation5 + $0x550] sm:$0xff]
    %v723 = vld [vmem:[#allocation5 + $0x558] sm:$0xff]
    %v724 = vld [vmem:[#allocation5 + $0x560] sm:$0xff]
    %v725 = vld [vmem:[#allocation5 + $0x568] sm:$0xff]
    %v726 = vld [vmem:[#allocation5 + $0x570] sm:$0xff]
    %v727 = vld [vmem:[#allocation5 + $0x578] sm:$0xff]
    %v728 = vld [vmem:[#allocation5 + $0x580] sm:$0xff]
    %v729 = vld [vmem:[#allocation5 + $0x588] sm:$0xff]
    %v730 = vld [vmem:[#allocation5 + $0x590] sm:$0xff]
    %v731 = vld [vmem:[#allocation5 + $0x598] sm:$0xff]
    %v732 = vld [vmem:[#allocation5 + $0x5a0] sm:$0xff]
    %v733 = vld [vmem:[#allocation5 + $0x5a8] sm:$0xff]
    %v734 = vld [vmem:[#allocation5 + $0x5b0] sm:$0xff]
    %v735 = vld [vmem:[#allocation5 + $0x5b8] sm:$0xff]
    %v736 = vld [vmem:[#allocation5 + $0x5c0] sm:$0xff]
    %v737 = vld [vmem:[#allocation5 + $0x5c8] sm:$0xff]
    %v738 = vld [vmem:[#allocation5 + $0x5d0] sm:$0xff]
    %v739 = vld [vmem:[#allocation5 + $0x5d8] sm:$0xff]
    %v740 = vld [vmem:[#allocation5 + $0x5e0] sm:$0xff]
    %v741 = vld [vmem:[#allocation5 + $0x5e8] sm:$0xff]
    %v742 = vld [vmem:[#allocation5 + $0x5f0] sm:$0xff]
    %v743 = vld [vmem:[#allocation5 + $0x5f8] sm:$0xff]
    %v744 = vld [vmem:[#allocation5 + $0x600] sm:$0xff]
    %v745 = vld [vmem:[#allocation5 + $0x608] sm:$0xff]
    %v746 = vld [vmem:[#allocation5 + $0x610] sm:$0xff]
    %v747 = vld [vmem:[#allocation5 + $0x618] sm:$0xff]
    %v748 = vld [vmem:[#allocation5 + $0x620] sm:$0xff]
    %v749 = vld [vmem:[#allocation5 + $0x628] sm:$0xff]
    %v750 = vld [vmem:[#allocation5 + $0x630] sm:$0xff]
    %v751 = vld [vmem:[#allocation5 + $0x638] sm:$0xff]
    %v752 = vld [vmem:[#allocation5 + $0x640] sm:$0xff]
    %v753 = vld [vmem:[#allocation5 + $0x648] sm:$0xff]
    %v754 = vld [vmem:[#allocation5 + $0x650] sm:$0xff]
    %v755 = vld [vmem:[#allocation5 + $0x658] sm:$0xff]
    %v756 = vld [vmem:[#allocation5 + $0x660] sm:$0xff]
    %v757 = vld [vmem:[#allocation5 + $0x668] sm:$0xff]
    %v758 = vld [vmem:[#allocation5 + $0x670] sm:$0xff]
    %v759 = vld [vmem:[#allocation5 + $0x678] sm:$0xff]
    %v760 = vld [vmem:[#allocation5 + $0x680] sm:$0xff]
    %v761 = vld [vmem:[#allocation5 + $0x688] sm:$0xff]
    %v762 = vld [vmem:[#allocation5 + $0x690] sm:$0xff]
    %v763 = vld [vmem:[#allocation5 + $0x698] sm:$0xff]
    %v764 = vld [vmem:[#allocation5 + $0x6a0] sm:$0xff]
    %v765 = vld [vmem:[#allocation5 + $0x6a8] sm:$0xff]
    %v766 = vld [vmem:[#allocation5 + $0x6b0] sm:$0xff]
    %v767 = vld [vmem:[#allocation5 + $0x6b8] sm:$0xff]
    %v768 = vld [vmem:[#allocation5 + $0x6c0] sm:$0xff]
    %v769 = vld [vmem:[#allocation5 + $0x6c8] sm:$0xff]
    %v770 = vld [vmem:[#allocation5 + $0x6d0] sm:$0xff]
    %v771 = vld [vmem:[#allocation5 + $0x6d8] sm:$0xff]
    %v772 = vld [vmem:[#allocation5 + $0x6e0] sm:$0xff]
    %v773 = vld [vmem:[#allocation5 + $0x6e8] sm:$0xff]
    %v774 = vld [vmem:[#allocation5 + $0x6f0] sm:$0xff]
    %v775 = vld [vmem:[#allocation5 + $0x6f8] sm:$0xff]
    %v776 = vld [vmem:[#allocation5 + $0x700] sm:$0xff]
    %v777 = vld [vmem:[#allocation5 + $0x708] sm:$0xff]
    %v778 = vld [vmem:[#allocation5 + $0x710] sm:$0xff]
    %v779 = vld [vmem:[#allocation5 + $0x718] sm:$0xff]
    %v780 = vld [vmem:[#allocation5 + $0x720] sm:$0xff]
    %v781 = vld [vmem:[#allocation5 + $0x728] sm:$0xff]
    %v782 = vld [vmem:[#allocation5 + $0x730] sm:$0xff]
    %v783 = vld [vmem:[#allocation5 + $0x738] sm:$0xff]
    %v784 = vld [vmem:[#allocation5 + $0x740] sm:$0xff]
    %v785 = vld [vmem:[#allocation5 + $0x748] sm:$0xff]
    %v786 = vld [vmem:[#allocation5 + $0x750] sm:$0xff]
    %v787 = vld [vmem:[#allocation5 + $0x758] sm:$0xff]
    %v788 = vld [vmem:[#allocation5 + $0x760] sm:$0xff]
    %v789 = vld [vmem:[#allocation5 + $0x768] sm:$0xff]
    %v790 = vld [vmem:[#allocation5 + $0x770] sm:$0xff]
    %v791 = vld [vmem:[#allocation5 + $0x778] sm:$0xff]
    %v792 = vld [vmem:[#allocation5 + $0x780] sm:$0xff]
    %v793 = vld [vmem:[#allocation5 + $0x788] sm:$0xff]
    %v794 = vld [vmem:[#allocation5 + $0x790] sm:$0xff]
    %v795 = vld [vmem:[#allocation5 + $0x798] sm:$0xff]
    %v796 = vld [vmem:[#allocation5 + $0x7a0] sm:$0xff]
    %v797 = vld [vmem:[#allocation5 + $0x7a8] sm:$0xff]
    %v798 = vld [vmem:[#allocation5 + $0x7b0] sm:$0xff]
    %v799 = vld [vmem:[#allocation5 + $0x7b8] sm:$0xff]
    %v800 = vld [vmem:[#allocation5 + $0x7c0] sm:$0xff]
    %v801 = vld [vmem:[#allocation5 + $0x7c8] sm:$0xff]
    %v802 = vld [vmem:[#allocation5 + $0x7d0] sm:$0xff]
    %v803 = vld [vmem:[#allocation5 + $0x7d8] sm:$0xff]
    %v804 = vld [vmem:[#allocation5 + $0x7e0] sm:$0xff]
    %v805 = vld [vmem:[#allocation5 + $0x7e8] sm:$0xff]
    %v806 = vld [vmem:[#allocation5 + $0x7f0] sm:$0xff]
    %v807 = vld [vmem:[#allocation5 + $0x7f8] sm:$0xff]
    %v808 = vld [vmem:[#allocation5 + $0x800] sm:$0xff]
    %v809 = vld [vmem:[#allocation5 + $0x808] sm:$0xff]
    %v810 = vld [vmem:[#allocation5 + $0x810] sm:$0xff]
    %v811 = vld [vmem:[#allocation5 + $0x818] sm:$0xff]
    %v812 = vld [vmem:[#allocation5 + $0x820] sm:$0xff]
    %v813 = vld [vmem:[#allocation5 + $0x828] sm:$0xff]
    %v814 = vld [vmem:[#allocation5 + $0x830] sm:$0xff]
    %v815 = vld [vmem:[#allocation5 + $0x838] sm:$0xff]
    %v816 = vld [vmem:[#allocation5 + $0x840] sm:$0xff]
    %v817 = vld [vmem:[#allocation5 + $0x848] sm:$0xff]
    %v818 = vld [vmem:[#allocation5 + $0x850] sm:$0xff]
    %v819 = vld [vmem:[#allocation5 + $0x858] sm:$0xff]
    %v820 = vld [vmem:[#allocation5 + $0x860] sm:$0xff]
    %v821 = vld [vmem:[#allocation5 + $0x868] sm:$0xff]
    %v822 = vld [vmem:[#allocation5 + $0x870] sm:$0xff]
    %v823 = vld [vmem:[#allocation5 + $0x878] sm:$0xff]
    %v824 = vld [vmem:[#allocation5 + $0x880] sm:$0xff]
    %v825 = vld [vmem:[#allocation5 + $0x888] sm:$0xff]
    %v826 = vld [vmem:[#allocation5 + $0x890] sm:$0xff]
    %v827 = vld [vmem:[#allocation5 + $0x898] sm:$0xff]
    %v828 = vld [vmem:[#allocation5 + $0x8a0] sm:$0xff]
    %v829 = vld [vmem:[#allocation5 + $0x8a8] sm:$0xff]
    %v830 = vld [vmem:[#allocation5 + $0x8b0] sm:$0xff]
    %v831 = vld [vmem:[#allocation5 + $0x8b8] sm:$0xff]
    %v832 = vld [vmem:[#allocation5 + $0x8c0] sm:$0xff]
    %v833 = vld [vmem:[#allocation5 + $0x8c8] sm:$0xff]
    %v834 = vld [vmem:[#allocation5 + $0x8d0] sm:$0xff]
    %v835 = vld [vmem:[#allocation5 + $0x8d8] sm:$0xff]
    %v836 = vld [vmem:[#allocation5 + $0x8e0] sm:$0xff]
    %v837 = vld [vmem:[#allocation5 + $0x8e8] sm:$0xff]
    %v838 = vld [vmem:[#allocation5 + $0x8f0] sm:$0xff]
    %v839 = vld [vmem:[#allocation5 + $0x8f8] sm:$0xff]
    %v840 = vld [vmem:[#allocation5 + $0x900] sm:$0xff]
    %v841 = vld [vmem:[#allocation5 + $0x908] sm:$0xff]
    %v842 = vld [vmem:[#allocation5 + $0x910] sm:$0xff]
    %v843 = vld [vmem:[#allocation5 + $0x918] sm:$0xff]
    %v844 = vld [vmem:[#allocation5 + $0x920] sm:$0xff]
    %v845 = vld [vmem:[#allocation5 + $0x928] sm:$0xff]
    %v846 = vld [vmem:[#allocation5 + $0x930] sm:$0xff]
    %v847 = vld [vmem:[#allocation5 + $0x938] sm:$0xff]
    %v848 = vld [vmem:[#allocation5 + $0x940] sm:$0xff]
    %v849 = vld [vmem:[#allocation5 + $0x948] sm:$0xff]
    %v850 = vld [vmem:[#allocation5 + $0x950] sm:$0xff]
    %v851 = vld [vmem:[#allocation5 + $0x958] sm:$0xff]
    %v852 = vld [vmem:[#allocation5 + $0x960] sm:$0xff]
    %v853 = vld [vmem:[#allocation5 + $0x968] sm:$0xff]
    %v854 = vld [vmem:[#allocation5 + $0x970] sm:$0xff]
    %v855 = vld [vmem:[#allocation5 + $0x978] sm:$0xff]
    %v856 = vld [vmem:[#allocation5 + $0x980] sm:$0xff]
    %v857 = vld [vmem:[#allocation5 + $0x988] sm:$0xff]
    %v858 = vld [vmem:[#allocation5 + $0x990] sm:$0xff]
    %v859 = vld [vmem:[#allocation5 + $0x998] sm:$0xff]
    %v860 = vld [vmem:[#allocation5 + $0x9a0] sm:$0xff]
    %v861 = vld [vmem:[#allocation5 + $0x9a8] sm:$0xff]
    %v862 = vld [vmem:[#allocation5 + $0x9b0] sm:$0xff]
    %v863 = vld [vmem:[#allocation5 + $0x9b8] sm:$0xff]
    %v864 = vld [vmem:[#allocation5 + $0x9c0] sm:$0xff]
    %v865 = vld [vmem:[#allocation5 + $0x9c8] sm:$0xff]
    %v866 = vld [vmem:[#allocation5 + $0x9d0] sm:$0xff]
    %v867 = vld [vmem:[#allocation5 + $0x9d8] sm:$0xff]
    %v868 = vld [vmem:[#allocation5 + $0x9e0] sm:$0xff]
    %v869 = vld [vmem:[#allocation5 + $0x9e8] sm:$0xff]
    %v870 = vld [vmem:[#allocation5 + $0x9f0] sm:$0xff]
    %v871 = vld [vmem:[#allocation5 + $0x9f8] sm:$0xff]
    %v872 = vld [vmem:[#allocation5 + $0xa00] sm:$0xff]
    %v873 = vld [vmem:[#allocation5 + $0xa08] sm:$0xff]
    %v874 = vld [vmem:[#allocation5 + $0xa10] sm:$0xff]
    %v875 = vld [vmem:[#allocation5 + $0xa18] sm:$0xff]
    %v876 = vld [vmem:[#allocation5 + $0xa20] sm:$0xff]
    %v877 = vld [vmem:[#allocation5 + $0xa28] sm:$0xff]
    %v878 = vld [vmem:[#allocation5 + $0xa30] sm:$0xff]
    %v879 = vld [vmem:[#allocation5 + $0xa38] sm:$0xff]
    %v880 = vld [vmem:[#allocation5 + $0xa40] sm:$0xff]
    %v881 = vld [vmem:[#allocation5 + $0xa48] sm:$0xff]
    %v882 = vld [vmem:[#allocation5 + $0xa50] sm:$0xff]
    %v883 = vld [vmem:[#allocation5 + $0xa58] sm:$0xff]
    %v884 = vld [vmem:[#allocation5 + $0xa60] sm:$0xff]
    %v885 = vld [vmem:[#allocation5 + $0xa68] sm:$0xff]
    %v886 = vld [vmem:[#allocation5 + $0xa70] sm:$0xff]
    %v887 = vld [vmem:[#allocation5 + $0xa78] sm:$0xff]
    %v888 = vld [vmem:[#allocation5 + $0xa80] sm:$0xff]
    %v889 = vld [vmem:[#allocation5 + $0xa88] sm:$0xff]
    %v890 = vld [vmem:[#allocation5 + $0xa90] sm:$0xff]
    %v891 = vld [vmem:[#allocation5 + $0xa98] sm:$0xff]
    %v892 = vld [vmem:[#allocation5 + $0xaa0] sm:$0xff]
    %v893 = vld [vmem:[#allocation5 + $0xaa8] sm:$0xff]
    %v894 = vld [vmem:[#allocation5 + $0xab0] sm:$0xff]
    %v895 = vld [vmem:[#allocation5 + $0xab8] sm:$0xff]
    %v896 = vld [vmem:[#allocation5 + $0xac0] sm:$0xff]
    %v897 = vld [vmem:[#allocation5 + $0xac8] sm:$0xff]
    %v898 = vld [vmem:[#allocation5 + $0xad0] sm:$0xff]
    %v899 = vld [vmem:[#allocation5 + $0xad8] sm:$0xff]
    %v900 = vld [vmem:[#allocation5 + $0xae0] sm:$0xff]
    %v901 = vld [vmem:[#allocation5 + $0xae8] sm:$0xff]
    %v902 = vld [vmem:[#allocation5 + $0xaf0] sm:$0xff]
    %v903 = vld [vmem:[#allocation5 + $0xaf8] sm:$0xff]
    %v904 = vld [vmem:[#allocation5 + $0xb00] sm:$0xff]
    %v905 = vld [vmem:[#allocation5 + $0xb08] sm:$0xff]
    %v906 = vld [vmem:[#allocation5 + $0xb10] sm:$0xff]
    %v907 = vld [vmem:[#allocation5 + $0xb18] sm:$0xff]
    %v908 = vld [vmem:[#allocation5 + $0xb20] sm:$0xff]
    %v909 = vld [vmem:[#allocation5 + $0xb28] sm:$0xff]
    %v910 = vld [vmem:[#allocation5 + $0xb30] sm:$0xff]
    %v911 = vld [vmem:[#allocation5 + $0xb38] sm:$0xff]
    %v912 = vld [vmem:[#allocation5 + $0xb40] sm:$0xff]
    %v913 = vld [vmem:[#allocation5 + $0xb48] sm:$0xff]
    %v914 = vld [vmem:[#allocation5 + $0xb50] sm:$0xff]
    %v915 = vld [vmem:[#allocation5 + $0xb58] sm:$0xff]
    %v916 = vld [vmem:[#allocation5 + $0xb60] sm:$0xff]
    %v917 = vld [vmem:[#allocation5 + $0xb68] sm:$0xff]
    %v918 = vld [vmem:[#allocation5 + $0xb70] sm:$0xff]
    %v919 = vld [vmem:[#allocation5 + $0xb78] sm:$0xff]
    %v920 = vld [vmem:[#allocation5 + $0xb80] sm:$0xff]
    %v921 = vld [vmem:[#allocation5 + $0xb88] sm:$0xff]
    %v922 = vld [vmem:[#allocation5 + $0xb90] sm:$0xff]
    %v923 = vld [vmem:[#allocation5 + $0xb98] sm:$0xff]
    %v924 = vld [vmem:[#allocation5 + $0xba0] sm:$0xff]
    %v925 = vld [vmem:[#allocation5 + $0xba8] sm:$0xff]
    %v926 = vld [vmem:[#allocation5 + $0xbb0] sm:$0xff]
    %v927 = vld [vmem:[#allocation5 + $0xbb8] sm:$0xff]
    %v928 = vld [vmem:[#allocation5 + $0xbc0] sm:$0xff]
    %v929 = vld [vmem:[#allocation5 + $0xbc8] sm:$0xff]
    %v930 = vld [vmem:[#allocation5 + $0xbd0] sm:$0xff]
    %v931 = vld [vmem:[#allocation5 + $0xbd8] sm:$0xff]
    %v932 = vld [vmem:[#allocation5 + $0xbe0] sm:$0xff]
    %v933 = vld [vmem:[#allocation5 + $0xbe8] sm:$0xff]
    %v934 = vld [vmem:[#allocation5 + $0xbf0] sm:$0xff]
    %v935 = vld [vmem:[#allocation5 + $0xbf8] sm:$0xff]
    %936 = vmatprep.subr.mxu0 %v598
    %937 = vmatpush1.msra.mxu0 %v597
    %938 = vmatprep.subr.mxu0 %v595
    %939 = vmatpush1.msra.mxu0 %v594
    %940 = vmatprep.subr.mxu0 %v592
    %941 = vmatpush1.msra.mxu0 %v591
    %942 = vmatprep.subr.mxu0 %v589
    %943 = vmatpush1.msra.mxu0 %v588
    %944 = vmatprep.subr.mxu0 %v586
    %945 = vmatpush1.msra.mxu0 %v585
    %946 = vmatprep.subr.mxu0 %v583
    %947 = vmatpush1.msra.mxu0 %v582
    %948 = vmatprep.subr.mxu0 %v580
    %949 = vmatpush1.msra.mxu0 %v579
    %950 = vmatprep.subr.mxu0 %v577
    %951 = vmatpush1.msra.mxu0 %v576
    %952 = vmatprep.subr.mxu0 %v574
    %953 = vmatpush1.msra.mxu0 %v573
    %954 = vmatprep.subr.mxu0 %v571
    %955 = vmatpush1.msra.mxu0 %v570
    %956 = vmatprep.subr.mxu0 %v568
    %957 = vmatpush1.msra.mxu0 %v567
    %958 = vmatprep.subr.mxu0 %v565
    %959 = vmatpush1.msra.mxu0 %v564
    %960 = vmatprep.subr.mxu0 %v562
    %961 = vmatpush1.msra.mxu0 %v561
    %962 = vmatprep.subr.mxu0 %v559
    %963 = vmatpush1.msra.mxu0 %v558
    %964 = vmatprep.subr.mxu0 %v556
    %965 = vmatpush1.msra.mxu0 %v555
    %966 = vmatprep.subr.mxu0 %v553
    %967 = vmatpush1.msra.mxu0 %v552
    %968 = vmatprep.subr.mxu0 %v646
    %969 = vmatpush2.msra.mxu0 %v645
    %970 = vmatprep.subr.mxu0 %v643
    %971 = vmatpush2.msra.mxu0 %v642
    %972 = vmatprep.subr.mxu0 %v640
    %973 = vmatpush2.msra.mxu0 %v639
    %974 = vmatprep.subr.mxu0 %v637
    %975 = vmatpush2.msra.mxu0 %v636
    %976 = vmatprep.subr.mxu0 %v634
    %977 = vmatpush2.msra.mxu0 %v633
    %978 = vmatprep.subr.mxu0 %v631
    %979 = vmatpush2.msra.mxu0 %v630
    %980 = vmatprep.subr.mxu0 %v628
    %981 = vmatpush2.msra.mxu0 %v627
    %982 = vmatprep.subr.mxu0 %v625
    %983 = vmatpush2.msra.mxu0 %v624
    %984 = vmatprep.subr.mxu0 %v622
    %985 = vmatpush2.msra.mxu0 %v621
    %986 = vmatprep.subr.mxu0 %v619
    %987 = vmatpush2.msra.mxu0 %v618
    %988 = vmatprep.subr.mxu0 %v616
    %989 = vmatpush2.msra.mxu0 %v615
    %990 = vmatprep.subr.mxu0 %v613
    %991 = vmatpush2.msra.mxu0 %v612
    %992 = vmatprep.subr.mxu0 %v610
    %993 = vmatpush2.msra.mxu0 %v609
    %994 = vmatprep.subr.mxu0 %v607
    %995 = vmatpush2.msra.mxu0 %v606
    %996 = vmatprep.subr.mxu0 %v604
    %997 = vmatpush2.msra.mxu0 %v603
    %998 = vmatprep.subr.mxu0 %v601
    %999 = vmatpush2.msra.mxu0 %v600
    %1000 = vmatprep.mubr.f32.mxu0 %v41
    %1001 = vmatmul.mubr.f32.gmra.mxu0 %v40
    %v1002 = vpop.f32.mrf.mxu0
    %v1003 = vadd.f32 0.0, %v1002
    %v1004 = vpop.f32.mrf.mxu0
    %v1005 = vadd.f32 0.0, %v1004
    %1006 = vmatprep.mubr.f32.mxu0 %v49
    %1007 = vmatmul.mubr.f32.gmra.mxu0 %v48
    %v1008 = vpop.f32.mrf.mxu0
    %v1009 = vadd.f32 0.0, %v1008
    %v1010 = vpop.f32.mrf.mxu0
    %v1011 = vadd.f32 0.0, %v1010
    %1012 = vmatprep.mubr.f32.mxu0 %v57
    %1013 = vmatmul.mubr.f32.gmra.mxu0 %v56
    %v1014 = vpop.f32.mrf.mxu0
    %v1015 = vadd.f32 0.0, %v1014
    %v1016 = vpop.f32.mrf.mxu0
    %v1017 = vadd.f32 0.0, %v1016
    %1018 = vmatprep.mubr.f32.mxu0 %v65
    %1019 = vmatmul.mubr.f32.gmra.mxu0 %v64
    %v1020 = vpop.f32.mrf.mxu0
    %v1021 = vadd.f32 0.0, %v1020
    %v1022 = vpop.f32.mrf.mxu0
    %v1023 = vadd.f32 0.0, %v1022
    %1024 = vmatprep.mubr.f32.mxu0 %v73
    %1025 = vmatmul.mubr.f32.gmra.mxu0 %v72
    %v1026 = vpop.f32.mrf.mxu0
    %v1027 = vadd.f32 0.0, %v1026
    %v1028 = vpop.f32.mrf.mxu0
    %v1029 = vadd.f32 0.0, %v1028
    %1030 = vmatprep.mubr.f32.mxu0 %v81
    %1031 = vmatmul.mubr.f32.gmra.mxu0 %v80
    %v1032 = vpop.f32.mrf.mxu0
    %v1033 = vadd.f32 0.0, %v1032
    %v1034 = vpop.f32.mrf.mxu0
    %v1035 = vadd.f32 0.0, %v1034
    %1036 = vmatprep.mubr.f32.mxu0 %v89
    %1037 = vmatmul.mubr.f32.gmra.mxu0 %v88
    %v1038 = vpop.f32.mrf.mxu0
    %v1039 = vadd.f32 0.0, %v1038
    %v1040 = vpop.f32.mrf.mxu0
    %v1041 = vadd.f32 0.0, %v1040
    %1042 = vmatprep.mubr.f32.mxu0 %v97
    %1043 = vmatmul.mubr.f32.gmra.mxu0 %v96
    %v1044 = vpop.f32.mrf.mxu0
    %v1045 = vadd.f32 0.0, %v1044
    %v1046 = vpop.f32.mrf.mxu0
    %v1047 = vadd.f32 0.0, %v1046
    %1048 = vmatprep.mubr.f32.mxu0 %v105
    %1049 = vmatmul.mubr.f32.gmra.mxu0 %v104
    %v1050 = vpop.f32.mrf.mxu0
    %v1051 = vadd.f32 0.0, %v1050
    %v1052 = vpop.f32.mrf.mxu0
    %v1053 = vadd.f32 0.0, %v1052
    %1054 = vmatprep.mubr.f32.mxu0 %v113
    %1055 = vmatmul.mubr.f32.gmra.mxu0 %v112
    %v1056 = vpop.f32.mrf.mxu0
    %v1057 = vadd.f32 0.0, %v1056
    %v1058 = vpop.f32.mrf.mxu0
    %v1059 = vadd.f32 0.0, %v1058
    %1060 = vmatprep.mubr.f32.mxu0 %v121
    %1061 = vmatmul.mubr.f32.gmra.mxu0 %v120
    %v1062 = vpop.f32.mrf.mxu0
    %v1063 = vadd.f32 0.0, %v1062
    %v1064 = vpop.f32.mrf.mxu0
    %v1065 = vadd.f32 0.0, %v1064
    %1066 = vmatprep.mubr.f32.mxu0 %v129
    %1067 = vmatmul.mubr.f32.gmra.mxu0 %v128
    %v1068 = vpop.f32.mrf.mxu0
    %v1069 = vadd.f32 0.0, %v1068
    %v1070 = vpop.f32.mrf.mxu0
    %v1071 = vadd.f32 0.0, %v1070
    %1072 = vmatprep.mubr.f32.mxu0 %v137
    %1073 = vmatmul.mubr.f32.gmra.mxu0 %v136
    %v1074 = vpop.f32.mrf.mxu0
    %v1075 = vadd.f32 0.0, %v1074
    %v1076 = vpop.f32.mrf.mxu0
    %v1077 = vadd.f32 0.0, %v1076
    %1078 = vmatprep.mubr.f32.mxu0 %v145
    %1079 = vmatmul.mubr.f32.gmra.mxu0 %v144
    %v1080 = vpop.f32.mrf.mxu0
    %v1081 = vadd.f32 0.0, %v1080
    %v1082 = vpop.f32.mrf.mxu0
    %v1083 = vadd.f32 0.0, %v1082
    %1084 = vmatprep.mubr.f32.mxu0 %v153
    %1085 = vmatmul.mubr.f32.gmra.mxu0 %v152
    %v1086 = vpop.f32.mrf.mxu0
    %v1087 = vadd.f32 0.0, %v1086
    %v1088 = vpop.f32.mrf.mxu0
    %v1089 = vadd.f32 0.0, %v1088
    %1090 = vmatprep.mubr.f32.mxu0 %v161
    %1091 = vmatmul.mubr.f32.gmra.mxu0 %v160
    %v1092 = vpop.f32.mrf.mxu0
    %v1093 = vadd.f32 0.0, %v1092
    %v1094 = vpop.f32.mrf.mxu0
    %v1095 = vadd.f32 0.0, %v1094
    %1096 = vmatprep.mubr.f32.mxu0 %v169
    %1097 = vmatmul.mubr.f32.gmra.mxu0 %v168
    %v1098 = vpop.f32.mrf.mxu0
    %v1099 = vadd.f32 0.0, %v1098
    %v1100 = vpop.f32.mrf.mxu0
    %v1101 = vadd.f32 0.0, %v1100
    %1102 = vmatprep.mubr.f32.mxu0 %v177
    %1103 = vmatmul.mubr.f32.gmra.mxu0 %v176
    %v1104 = vpop.f32.mrf.mxu0
    %v1105 = vadd.f32 0.0, %v1104
    %v1106 = vpop.f32.mrf.mxu0
    %v1107 = vadd.f32 0.0, %v1106
    %1108 = vmatprep.mubr.f32.mxu0 %v185
    %1109 = vmatmul.mubr.f32.gmra.mxu0 %v184
    %v1110 = vpop.f32.mrf.mxu0
    %v1111 = vadd.f32 0.0, %v1110
    %v1112 = vpop.f32.mrf.mxu0
    %v1113 = vadd.f32 0.0, %v1112
    %1114 = vmatprep.mubr.f32.mxu0 %v193
    %1115 = vmatmul.mubr.f32.gmra.mxu0 %v192
    %v1116 = vpop.f32.mrf.mxu0
    %v1117 = vadd.f32 0.0, %v1116
    %v1118 = vpop.f32.mrf.mxu0
    %v1119 = vadd.f32 0.0, %v1118
    %1120 = vmatprep.mubr.f32.mxu0 %v201
    %1121 = vmatmul.mubr.f32.gmra.mxu0 %v200
    %v1122 = vpop.f32.mrf.mxu0
    %v1123 = vadd.f32 0.0, %v1122
    %v1124 = vpop.f32.mrf.mxu0
    %v1125 = vadd.f32 0.0, %v1124
    %1126 = vmatprep.mubr.f32.mxu0 %v209
    %1127 = vmatmul.mubr.f32.gmra.mxu0 %v208
    %v1128 = vpop.f32.mrf.mxu0
    %v1129 = vadd.f32 0.0, %v1128
    %v1130 = vpop.f32.mrf.mxu0
    %v1131 = vadd.f32 0.0, %v1130
    %1132 = vmatprep.mubr.f32.mxu0 %v217
    %1133 = vmatmul.mubr.f32.gmra.mxu0 %v216
    %v1134 = vpop.f32.mrf.mxu0
    %v1135 = vadd.f32 0.0, %v1134
    %v1136 = vpop.f32.mrf.mxu0
    %v1137 = vadd.f32 0.0, %v1136
    %1138 = vmatprep.mubr.f32.mxu0 %v225
    %1139 = vmatmul.mubr.f32.gmra.mxu0 %v224
    %v1140 = vpop.f32.mrf.mxu0
    %v1141 = vadd.f32 0.0, %v1140
    %v1142 = vpop.f32.mrf.mxu0
    %v1143 = vadd.f32 0.0, %v1142
    %1144 = vmatprep.mubr.f32.mxu0 %v233
    %1145 = vmatmul.mubr.f32.gmra.mxu0 %v232
    %v1146 = vpop.f32.mrf.mxu0
    %v1147 = vadd.f32 0.0, %v1146
    %v1148 = vpop.f32.mrf.mxu0
    %v1149 = vadd.f32 0.0, %v1148
    %1150 = vmatprep.mubr.f32.mxu0 %v241
    %1151 = vmatmul.mubr.f32.gmra.mxu0 %v240
    %v1152 = vpop.f32.mrf.mxu0
    %v1153 = vadd.f32 0.0, %v1152
    %v1154 = vpop.f32.mrf.mxu0
    %v1155 = vadd.f32 0.0, %v1154
    %1156 = vmatprep.mubr.f32.mxu0 %v249
    %1157 = vmatmul.mubr.f32.gmra.mxu0 %v248
    %v1158 = vpop.f32.mrf.mxu0
    %v1159 = vadd.f32 0.0, %v1158
    %v1160 = vpop.f32.mrf.mxu0
    %v1161 = vadd.f32 0.0, %v1160
    %1162 = vmatprep.mubr.f32.mxu0 %v257
    %1163 = vmatmul.mubr.f32.gmra.mxu0 %v256
    %v1164 = vpop.f32.mrf.mxu0
    %v1165 = vadd.f32 0.0, %v1164
    %v1166 = vpop.f32.mrf.mxu0
    %v1167 = vadd.f32 0.0, %v1166
    %1168 = vmatprep.mubr.f32.mxu0 %v265
    %1169 = vmatmul.mubr.f32.gmra.mxu0 %v264
    %v1170 = vpop.f32.mrf.mxu0
    %v1171 = vadd.f32 0.0, %v1170
    %v1172 = vpop.f32.mrf.mxu0
    %v1173 = vadd.f32 0.0, %v1172
    %1174 = vmatprep.mubr.f32.mxu0 %v273
    %1175 = vmatmul.mubr.f32.gmra.mxu0 %v272
    %v1176 = vpop.f32.mrf.mxu0
    %v1177 = vadd.f32 0.0, %v1176
    %v1178 = vpop.f32.mrf.mxu0
    %v1179 = vadd.f32 0.0, %v1178
    %1180 = vmatprep.mubr.f32.mxu0 %v281
    %1181 = vmatmul.mubr.f32.gmra.mxu0 %v280
    %v1182 = vpop.f32.mrf.mxu0
    %v1183 = vadd.f32 0.0, %v1182
    %v1184 = vpop.f32.mrf.mxu0
    %v1185 = vadd.f32 0.0, %v1184
    %1186 = vmatprep.mubr.f32.mxu0 %v289
    %1187 = vmatmul.mubr.f32.gmra.mxu0 %v288
    %v1188 = vpop.f32.mrf.mxu0
    %v1189 = vadd.f32 0.0, %v1188
    %v1190 = vpop.f32.mrf.mxu0
    %v1191 = vadd.f32 0.0, %v1190
    %1192 = vmatprep.mubr.f32.mxu0 %v297
    %1193 = vmatmul.mubr.f32.gmra.mxu0 %v296
    %v1194 = vpop.f32.mrf.mxu0
    %v1195 = vadd.f32 0.0, %v1194
    %v1196 = vpop.f32.mrf.mxu0
    %v1197 = vadd.f32 0.0, %v1196
    %1198 = vmatprep.mubr.f32.mxu0 %v305
    %1199 = vmatmul.mubr.f32.gmra.mxu0 %v304
    %v1200 = vpop.f32.mrf.mxu0
    %v1201 = vadd.f32 0.0, %v1200
    %v1202 = vpop.f32.mrf.mxu0
    %v1203 = vadd.f32 0.0, %v1202
    %1204 = vmatprep.mubr.f32.mxu0 %v313
    %1205 = vmatmul.mubr.f32.gmra.mxu0 %v312
    %v1206 = vpop.f32.mrf.mxu0
    %v1207 = vadd.f32 0.0, %v1206
    %v1208 = vpop.f32.mrf.mxu0
    %v1209 = vadd.f32 0.0, %v1208
    %1210 = vmatprep.mubr.f32.mxu0 %v321
    %1211 = vmatmul.mubr.f32.gmra.mxu0 %v320
    %v1212 = vpop.f32.mrf.mxu0
    %v1213 = vadd.f32 0.0, %v1212
    %v1214 = vpop.f32.mrf.mxu0
    %v1215 = vadd.f32 0.0, %v1214
    %1216 = vmatprep.mubr.f32.mxu0 %v329
    %1217 = vmatmul.mubr.f32.gmra.mxu0 %v328
    %v1218 = vpop.f32.mrf.mxu0
    %v1219 = vadd.f32 0.0, %v1218
    %v1220 = vpop.f32.mrf.mxu0
    %v1221 = vadd.f32 0.0, %v1220
    %1222 = vmatprep.mubr.f32.mxu0 %v337
    %1223 = vmatmul.mubr.f32.gmra.mxu0 %v336
    %v1224 = vpop.f32.mrf.mxu0
    %v1225 = vadd.f32 0.0, %v1224
    %v1226 = vpop.f32.mrf.mxu0
    %v1227 = vadd.f32 0.0, %v1226
    %1228 = vmatprep.mubr.f32.mxu0 %v345
    %1229 = vmatmul.mubr.f32.gmra.mxu0 %v344
    %v1230 = vpop.f32.mrf.mxu0
    %v1231 = vadd.f32 0.0, %v1230
    %v1232 = vpop.f32.mrf.mxu0
    %v1233 = vadd.f32 0.0, %v1232
    %1234 = vmatprep.mubr.f32.mxu0 %v353
    %1235 = vmatmul.mubr.f32.gmra.mxu0 %v352
    %v1236 = vpop.f32.mrf.mxu0
    %v1237 = vadd.f32 0.0, %v1236
    %v1238 = vpop.f32.mrf.mxu0
    %v1239 = vadd.f32 0.0, %v1238
    %1240 = vmatprep.mubr.f32.mxu0 %v361
    %1241 = vmatmul.mubr.f32.gmra.mxu0 %v360
    %v1242 = vpop.f32.mrf.mxu0
    %v1243 = vadd.f32 0.0, %v1242
    %v1244 = vpop.f32.mrf.mxu0
    %v1245 = vadd.f32 0.0, %v1244
    %1246 = vmatprep.mubr.f32.mxu0 %v369
    %1247 = vmatmul.mubr.f32.gmra.mxu0 %v368
    %v1248 = vpop.f32.mrf.mxu0
    %v1249 = vadd.f32 0.0, %v1248
    %v1250 = vpop.f32.mrf.mxu0
    %v1251 = vadd.f32 0.0, %v1250
    %1252 = vmatprep.mubr.f32.mxu0 %v377
    %1253 = vmatmul.mubr.f32.gmra.mxu0 %v376
    %v1254 = vpop.f32.mrf.mxu0
    %v1255 = vadd.f32 0.0, %v1254
    %v1256 = vpop.f32.mrf.mxu0
    %v1257 = vadd.f32 0.0, %v1256
    %1258 = vmatprep.mubr.f32.mxu0 %v385
    %1259 = vmatmul.mubr.f32.gmra.mxu0 %v384
    %v1260 = vpop.f32.mrf.mxu0
    %v1261 = vadd.f32 0.0, %v1260
    %v1262 = vpop.f32.mrf.mxu0
    %v1263 = vadd.f32 0.0, %v1262
    %1264 = vmatprep.mubr.f32.mxu0 %v393
    %1265 = vmatmul.mubr.f32.gmra.mxu0 %v392
    %v1266 = vpop.f32.mrf.mxu0
    %v1267 = vadd.f32 0.0, %v1266
    %v1268 = vpop.f32.mrf.mxu0
    %v1269 = vadd.f32 0.0, %v1268
    %1270 = vmatprep.mubr.f32.mxu0 %v401
    %1271 = vmatmul.mubr.f32.gmra.mxu0 %v400
    %v1272 = vpop.f32.mrf.mxu0
    %v1273 = vadd.f32 0.0, %v1272
    %v1274 = vpop.f32.mrf.mxu0
    %v1275 = vadd.f32 0.0, %v1274
    %1276 = vmatprep.mubr.f32.mxu0 %v409
    %1277 = vmatmul.mubr.f32.gmra.mxu0 %v408
    %v1278 = vpop.f32.mrf.mxu0
    %v1279 = vadd.f32 0.0, %v1278
    %v1280 = vpop.f32.mrf.mxu0
    %v1281 = vadd.f32 0.0, %v1280
    %1282 = vmatprep.mubr.f32.mxu0 %v417
    %1283 = vmatmul.mubr.f32.gmra.mxu0 %v416
    %v1284 = vpop.f32.mrf.mxu0
    %v1285 = vadd.f32 0.0, %v1284
    %v1286 = vpop.f32.mrf.mxu0
    %v1287 = vadd.f32 0.0, %v1286
    %1288 = vmatprep.mubr.f32.mxu0 %v425
    %1289 = vmatmul.mubr.f32.gmra.mxu0 %v424
    %v1290 = vpop.f32.mrf.mxu0
    %v1291 = vadd.f32 0.0, %v1290
    %v1292 = vpop.f32.mrf.mxu0
    %v1293 = vadd.f32 0.0, %v1292
    %1294 = vmatprep.mubr.f32.mxu0 %v433
    %1295 = vmatmul.mubr.f32.gmra.mxu0 %v432
    %v1296 = vpop.f32.mrf.mxu0
    %v1297 = vadd.f32 0.0, %v1296
    %v1298 = vpop.f32.mrf.mxu0
    %v1299 = vadd.f32 0.0, %v1298
    %1300 = vmatprep.mubr.f32.mxu0 %v441
    %1301 = vmatmul.mubr.f32.gmra.mxu0 %v440
    %v1302 = vpop.f32.mrf.mxu0
    %v1303 = vadd.f32 0.0, %v1302
    %v1304 = vpop.f32.mrf.mxu0
    %v1305 = vadd.f32 0.0, %v1304
    %1306 = vmatprep.mubr.f32.mxu0 %v449
    %1307 = vmatmul.mubr.f32.gmra.mxu0 %v448
    %v1308 = vpop.f32.mrf.mxu0
    %v1309 = vadd.f32 0.0, %v1308
    %v1310 = vpop.f32.mrf.mxu0
    %v1311 = vadd.f32 0.0, %v1310
    %1312 = vmatprep.mubr.f32.mxu0 %v457
    %1313 = vmatmul.mubr.f32.gmra.mxu0 %v456
    %v1314 = vpop.f32.mrf.mxu0
    %v1315 = vadd.f32 0.0, %v1314
    %v1316 = vpop.f32.mrf.mxu0
    %v1317 = vadd.f32 0.0, %v1316
    %1318 = vmatprep.mubr.f32.mxu0 %v465
    %1319 = vmatmul.mubr.f32.gmra.mxu0 %v464
    %v1320 = vpop.f32.mrf.mxu0
    %v1321 = vadd.f32 0.0, %v1320
    %v1322 = vpop.f32.mrf.mxu0
    %v1323 = vadd.f32 0.0, %v1322
    %1324 = vmatprep.mubr.f32.mxu0 %v473
    %1325 = vmatmul.mubr.f32.gmra.mxu0 %v472
    %v1326 = vpop.f32.mrf.mxu0
    %v1327 = vadd.f32 0.0, %v1326
    %v1328 = vpop.f32.mrf.mxu0
    %v1329 = vadd.f32 0.0, %v1328
    %1330 = vmatprep.mubr.f32.mxu0 %v481
    %1331 = vmatmul.mubr.f32.gmra.mxu0 %v480
    %v1332 = vpop.f32.mrf.mxu0
    %v1333 = vadd.f32 0.0, %v1332
    %v1334 = vpop.f32.mrf.mxu0
    %v1335 = vadd.f32 0.0, %v1334
    %1336 = vmatprep.mubr.f32.mxu0 %v489
    %1337 = vmatmul.mubr.f32.gmra.mxu0 %v488
    %v1338 = vpop.f32.mrf.mxu0
    %v1339 = vadd.f32 0.0, %v1338
    %v1340 = vpop.f32.mrf.mxu0
    %v1341 = vadd.f32 0.0, %v1340
    %1342 = vmatprep.mubr.f32.mxu0 %v497
    %1343 = vmatmul.mubr.f32.gmra.mxu0 %v496
    %v1344 = vpop.f32.mrf.mxu0
    %v1345 = vadd.f32 0.0, %v1344
    %v1346 = vpop.f32.mrf.mxu0
    %v1347 = vadd.f32 0.0, %v1346
    %1348 = vmatprep.mubr.f32.mxu0 %v505
    %1349 = vmatmul.mubr.f32.gmra.mxu0 %v504
    %v1350 = vpop.f32.mrf.mxu0
    %v1351 = vadd.f32 0.0, %v1350
    %v1352 = vpop.f32.mrf.mxu0
    %v1353 = vadd.f32 0.0, %v1352
    %1354 = vmatprep.mubr.f32.mxu0 %v513
    %1355 = vmatmul.mubr.f32.gmra.mxu0 %v512
    %v1356 = vpop.f32.mrf.mxu0
    %v1357 = vadd.f32 0.0, %v1356
    %v1358 = vpop.f32.mrf.mxu0
    %v1359 = vadd.f32 0.0, %v1358
    %1360 = vmatprep.mubr.f32.mxu0 %v521
    %1361 = vmatmul.mubr.f32.gmra.mxu0 %v520
    %v1362 = vpop.f32.mrf.mxu0
    %v1363 = vadd.f32 0.0, %v1362
    %v1364 = vpop.f32.mrf.mxu0
    %v1365 = vadd.f32 0.0, %v1364
    %1366 = vmatprep.mubr.f32.mxu0 %v529
    %1367 = vmatmul.mubr.f32.gmra.mxu0 %v528
    %v1368 = vpop.f32.mrf.mxu0
    %v1369 = vadd.f32 0.0, %v1368
    %v1370 = vpop.f32.mrf.mxu0
    %v1371 = vadd.f32 0.0, %v1370
    %1372 = vmatprep.mubr.f32.mxu0 %v537
    %1373 = vmatmul.mubr.f32.gmra.mxu0 %v536
    %v1374 = vpop.f32.mrf.mxu0
    %v1375 = vadd.f32 0.0, %v1374
    %v1376 = vpop.f32.mrf.mxu0
    %v1377 = vadd.f32 0.0, %v1376
    %1378 = vmatprep.mubr.f32.mxu0 %v545
    %1379 = vmatmul.mubr.f32.gmra.mxu0 %v544
    %v1380 = vpop.f32.mrf.mxu0
    %v1381 = vadd.f32 0.0, %v1380
    %v1382 = vpop.f32.mrf.mxu0
    %v1383 = vadd.f32 0.0, %v1382
    %1384 = vdwg.mxu0
    %1385 = vmatprep.subr.mxu0 %v694
    %1386 = vmatpush1.msra.mxu0 %v693
    %1387 = vmatprep.subr.mxu0 %v691
    %1388 = vmatpush1.msra.mxu0 %v690
    %1389 = vmatprep.subr.mxu0 %v688
    %1390 = vmatpush1.msra.mxu0 %v687
    %1391 = vmatprep.subr.mxu0 %v685
    %1392 = vmatpush1.msra.mxu0 %v684
    %1393 = vmatprep.subr.mxu0 %v682
    %1394 = vmatpush1.msra.mxu0 %v681
    %1395 = vmatprep.subr.mxu0 %v679
    %1396 = vmatpush1.msra.mxu0 %v678
    %1397 = vmatprep.subr.mxu0 %v676
    %1398 = vmatpush1.msra.mxu0 %v675
    %1399 = vmatprep.subr.mxu0 %v673
    %1400 = vmatpush1.msra.mxu0 %v672
    %1401 = vmatprep.subr.mxu0 %v670
    %1402 = vmatpush1.msra.mxu0 %v669
    %1403 = vmatprep.subr.mxu0 %v667
    %1404 = vmatpush1.msra.mxu0 %v666
    %1405 = vmatprep.subr.mxu0 %v664
    %1406 = vmatpush1.msra.mxu0 %v663
    %1407 = vmatprep.subr.mxu0 %v661
    %1408 = vmatpush1.msra.mxu0 %v660
    %1409 = vmatprep.subr.mxu0 %v658
    %1410 = vmatpush1.msra.mxu0 %v657
    %1411 = vmatprep.subr.mxu0 %v655
    %1412 = vmatpush1.msra.mxu0 %v654
    %1413 = vmatprep.subr.mxu0 %v652
    %1414 = vmatpush1.msra.mxu0 %v651
    %1415 = vmatprep.subr.mxu0 %v649
    %1416 = vmatpush1.msra.mxu0 %v648
    %1417 = vmatprep.subr.mxu0 %v742
    %1418 = vmatpush2.msra.mxu0 %v741
    %1419 = vmatprep.subr.mxu0 %v739
    %1420 = vmatpush2.msra.mxu0 %v738
    %1421 = vmatprep.subr.mxu0 %v736
    %1422 = vmatpush2.msra.mxu0 %v735
    %1423 = vmatprep.subr.mxu0 %v733
    %1424 = vmatpush2.msra.mxu0 %v732
    %1425 = vmatprep.subr.mxu0 %v730
    %1426 = vmatpush2.msra.mxu0 %v729
    %1427 = vmatprep.subr.mxu0 %v727
    %1428 = vmatpush2.msra.mxu0 %v726
    %1429 = vmatprep.subr.mxu0 %v724
    %1430 = vmatpush2.msra.mxu0 %v723
    %1431 = vmatprep.subr.mxu0 %v721
    %1432 = vmatpush2.msra.mxu0 %v720
    %1433 = vmatprep.subr.mxu0 %v718
    %1434 = vmatpush2.msra.mxu0 %v717
    %1435 = vmatprep.subr.mxu0 %v715
    %1436 = vmatpush2.msra.mxu0 %v714
    %1437 = vmatprep.subr.mxu0 %v712
    %1438 = vmatpush2.msra.mxu0 %v711
    %1439 = vmatprep.subr.mxu0 %v709
    %1440 = vmatpush2.msra.mxu0 %v708
    %1441 = vmatprep.subr.mxu0 %v706
    %1442 = vmatpush2.msra.mxu0 %v705
    %1443 = vmatprep.subr.mxu0 %v703
    %1444 = vmatpush2.msra.mxu0 %v702
    %1445 = vmatprep.subr.mxu0 %v700
    %1446 = vmatpush2.msra.mxu0 %v699
    %1447 = vmatprep.subr.mxu0 %v697
    %1448 = vmatpush2.msra.mxu0 %v696
    %1449 = vmatprep.mubr.f32.mxu0 %v43
    %1450 = vmatmul.mubr.f32.gmra.mxu0 %v42
    %v1451 = vpop.f32.mrf.mxu0
    %v1452 = vadd.f32 %v1003, %v1451
    %v1453 = vpop.f32.mrf.mxu0
    %v1454 = vadd.f32 %v1005, %v1453
    %1455 = vmatprep.mubr.f32.mxu0 %v51
    %1456 = vmatmul.mubr.f32.gmra.mxu0 %v50
    %v1457 = vpop.f32.mrf.mxu0
    %v1458 = vadd.f32 %v1009, %v1457
    %v1459 = vpop.f32.mrf.mxu0
    %v1460 = vadd.f32 %v1011, %v1459
    %1461 = vmatprep.mubr.f32.mxu0 %v59
    %1462 = vmatmul.mubr.f32.gmra.mxu0 %v58
    %v1463 = vpop.f32.mrf.mxu0
    %v1464 = vadd.f32 %v1015, %v1463
    %v1465 = vpop.f32.mrf.mxu0
    %v1466 = vadd.f32 %v1017, %v1465
    %1467 = vmatprep.mubr.f32.mxu0 %v67
    %1468 = vmatmul.mubr.f32.gmra.mxu0 %v66
    %v1469 = vpop.f32.mrf.mxu0
    %v1470 = vadd.f32 %v1021, %v1469
    %v1471 = vpop.f32.mrf.mxu0
    %v1472 = vadd.f32 %v1023, %v1471
    %1473 = vmatprep.mubr.f32.mxu0 %v75
    %1474 = vmatmul.mubr.f32.gmra.mxu0 %v74
    %v1475 = vpop.f32.mrf.mxu0
    %v1476 = vadd.f32 %v1027, %v1475
    %v1477 = vpop.f32.mrf.mxu0
    %v1478 = vadd.f32 %v1029, %v1477
    %1479 = vmatprep.mubr.f32.mxu0 %v83
    %1480 = vmatmul.mubr.f32.gmra.mxu0 %v82
    %v1481 = vpop.f32.mrf.mxu0
    %v1482 = vadd.f32 %v1033, %v1481
    %v1483 = vpop.f32.mrf.mxu0
    %v1484 = vadd.f32 %v1035, %v1483
    %1485 = vmatprep.mubr.f32.mxu0 %v91
    %1486 = vmatmul.mubr.f32.gmra.mxu0 %v90
    %v1487 = vpop.f32.mrf.mxu0
    %v1488 = vadd.f32 %v1039, %v1487
    %v1489 = vpop.f32.mrf.mxu0
    %v1490 = vadd.f32 %v1041, %v1489
    %1491 = vmatprep.mubr.f32.mxu0 %v99
    %1492 = vmatmul.mubr.f32.gmra.mxu0 %v98
    %v1493 = vpop.f32.mrf.mxu0
    %v1494 = vadd.f32 %v1045, %v1493
    %v1495 = vpop.f32.mrf.mxu0
    %v1496 = vadd.f32 %v1047, %v1495
    %1497 = vmatprep.mubr.f32.mxu0 %v107
    %1498 = vmatmul.mubr.f32.gmra.mxu0 %v106
    %v1499 = vpop.f32.mrf.mxu0
    %v1500 = vadd.f32 %v1051, %v1499
    %v1501 = vpop.f32.mrf.mxu0
    %v1502 = vadd.f32 %v1053, %v1501
    %1503 = vmatprep.mubr.f32.mxu0 %v115
    %1504 = vmatmul.mubr.f32.gmra.mxu0 %v114
    %v1505 = vpop.f32.mrf.mxu0
    %v1506 = vadd.f32 %v1057, %v1505
    %v1507 = vpop.f32.mrf.mxu0
    %v1508 = vadd.f32 %v1059, %v1507
    %1509 = vmatprep.mubr.f32.mxu0 %v123
    %1510 = vmatmul.mubr.f32.gmra.mxu0 %v122
    %v1511 = vpop.f32.mrf.mxu0
    %v1512 = vadd.f32 %v1063, %v1511
    %v1513 = vpop.f32.mrf.mxu0
    %v1514 = vadd.f32 %v1065, %v1513
    %1515 = vmatprep.mubr.f32.mxu0 %v131
    %1516 = vmatmul.mubr.f32.gmra.mxu0 %v130
    %v1517 = vpop.f32.mrf.mxu0
    %v1518 = vadd.f32 %v1069, %v1517
    %v1519 = vpop.f32.mrf.mxu0
    %v1520 = vadd.f32 %v1071, %v1519
    %1521 = vmatprep.mubr.f32.mxu0 %v139
    %1522 = vmatmul.mubr.f32.gmra.mxu0 %v138
    %v1523 = vpop.f32.mrf.mxu0
    %v1524 = vadd.f32 %v1075, %v1523
    %v1525 = vpop.f32.mrf.mxu0
    %v1526 = vadd.f32 %v1077, %v1525
    %1527 = vmatprep.mubr.f32.mxu0 %v147
    %1528 = vmatmul.mubr.f32.gmra.mxu0 %v146
    %v1529 = vpop.f32.mrf.mxu0
    %v1530 = vadd.f32 %v1081, %v1529
    %v1531 = vpop.f32.mrf.mxu0
    %v1532 = vadd.f32 %v1083, %v1531
    %1533 = vmatprep.mubr.f32.mxu0 %v155
    %1534 = vmatmul.mubr.f32.gmra.mxu0 %v154
    %v1535 = vpop.f32.mrf.mxu0
    %v1536 = vadd.f32 %v1087, %v1535
    %v1537 = vpop.f32.mrf.mxu0
    %v1538 = vadd.f32 %v1089, %v1537
    %1539 = vmatprep.mubr.f32.mxu0 %v163
    %1540 = vmatmul.mubr.f32.gmra.mxu0 %v162
    %v1541 = vpop.f32.mrf.mxu0
    %v1542 = vadd.f32 %v1093, %v1541
    %v1543 = vpop.f32.mrf.mxu0
    %v1544 = vadd.f32 %v1095, %v1543
    %1545 = vmatprep.mubr.f32.mxu0 %v171
    %1546 = vmatmul.mubr.f32.gmra.mxu0 %v170
    %v1547 = vpop.f32.mrf.mxu0
    %v1548 = vadd.f32 %v1099, %v1547
    %v1549 = vpop.f32.mrf.mxu0
    %v1550 = vadd.f32 %v1101, %v1549
    %1551 = vmatprep.mubr.f32.mxu0 %v179
    %1552 = vmatmul.mubr.f32.gmra.mxu0 %v178
    %v1553 = vpop.f32.mrf.mxu0
    %v1554 = vadd.f32 %v1105, %v1553
    %v1555 = vpop.f32.mrf.mxu0
    %v1556 = vadd.f32 %v1107, %v1555
    %1557 = vmatprep.mubr.f32.mxu0 %v187
    %1558 = vmatmul.mubr.f32.gmra.mxu0 %v186
    %v1559 = vpop.f32.mrf.mxu0
    %v1560 = vadd.f32 %v1111, %v1559
    %v1561 = vpop.f32.mrf.mxu0
    %v1562 = vadd.f32 %v1113, %v1561
    %1563 = vmatprep.mubr.f32.mxu0 %v195
    %1564 = vmatmul.mubr.f32.gmra.mxu0 %v194
    %v1565 = vpop.f32.mrf.mxu0
    %v1566 = vadd.f32 %v1117, %v1565
    %v1567 = vpop.f32.mrf.mxu0
    %v1568 = vadd.f32 %v1119, %v1567
    %1569 = vmatprep.mubr.f32.mxu0 %v203
    %1570 = vmatmul.mubr.f32.gmra.mxu0 %v202
    %v1571 = vpop.f32.mrf.mxu0
    %v1572 = vadd.f32 %v1123, %v1571
    %v1573 = vpop.f32.mrf.mxu0
    %v1574 = vadd.f32 %v1125, %v1573
    %1575 = vmatprep.mubr.f32.mxu0 %v211
    %1576 = vmatmul.mubr.f32.gmra.mxu0 %v210
    %v1577 = vpop.f32.mrf.mxu0
    %v1578 = vadd.f32 %v1129, %v1577
    %v1579 = vpop.f32.mrf.mxu0
    %v1580 = vadd.f32 %v1131, %v1579
    %1581 = vmatprep.mubr.f32.mxu0 %v219
    %1582 = vmatmul.mubr.f32.gmra.mxu0 %v218
    %v1583 = vpop.f32.mrf.mxu0
    %v1584 = vadd.f32 %v1135, %v1583
    %v1585 = vpop.f32.mrf.mxu0
    %v1586 = vadd.f32 %v1137, %v1585
    %1587 = vmatprep.mubr.f32.mxu0 %v227
    %1588 = vmatmul.mubr.f32.gmra.mxu0 %v226
    %v1589 = vpop.f32.mrf.mxu0
    %v1590 = vadd.f32 %v1141, %v1589
    %v1591 = vpop.f32.mrf.mxu0
    %v1592 = vadd.f32 %v1143, %v1591
    %1593 = vmatprep.mubr.f32.mxu0 %v235
    %1594 = vmatmul.mubr.f32.gmra.mxu0 %v234
    %v1595 = vpop.f32.mrf.mxu0
    %v1596 = vadd.f32 %v1147, %v1595
    %v1597 = vpop.f32.mrf.mxu0
    %v1598 = vadd.f32 %v1149, %v1597
    %1599 = vmatprep.mubr.f32.mxu0 %v243
    %1600 = vmatmul.mubr.f32.gmra.mxu0 %v242
    %v1601 = vpop.f32.mrf.mxu0
    %v1602 = vadd.f32 %v1153, %v1601
    %v1603 = vpop.f32.mrf.mxu0
    %v1604 = vadd.f32 %v1155, %v1603
    %1605 = vmatprep.mubr.f32.mxu0 %v251
    %1606 = vmatmul.mubr.f32.gmra.mxu0 %v250
    %v1607 = vpop.f32.mrf.mxu0
    %v1608 = vadd.f32 %v1159, %v1607
    %v1609 = vpop.f32.mrf.mxu0
    %v1610 = vadd.f32 %v1161, %v1609
    %1611 = vmatprep.mubr.f32.mxu0 %v259
    %1612 = vmatmul.mubr.f32.gmra.mxu0 %v258
    %v1613 = vpop.f32.mrf.mxu0
    %v1614 = vadd.f32 %v1165, %v1613
    %v1615 = vpop.f32.mrf.mxu0
    %v1616 = vadd.f32 %v1167, %v1615
    %1617 = vmatprep.mubr.f32.mxu0 %v267
    %1618 = vmatmul.mubr.f32.gmra.mxu0 %v266
    %v1619 = vpop.f32.mrf.mxu0
    %v1620 = vadd.f32 %v1171, %v1619
    %v1621 = vpop.f32.mrf.mxu0
    %v1622 = vadd.f32 %v1173, %v1621
    %1623 = vmatprep.mubr.f32.mxu0 %v275
    %1624 = vmatmul.mubr.f32.gmra.mxu0 %v274
    %v1625 = vpop.f32.mrf.mxu0
    %v1626 = vadd.f32 %v1177, %v1625
    %v1627 = vpop.f32.mrf.mxu0
    %v1628 = vadd.f32 %v1179, %v1627
    %1629 = vmatprep.mubr.f32.mxu0 %v283
    %1630 = vmatmul.mubr.f32.gmra.mxu0 %v282
    %v1631 = vpop.f32.mrf.mxu0
    %v1632 = vadd.f32 %v1183, %v1631
    %v1633 = vpop.f32.mrf.mxu0
    %v1634 = vadd.f32 %v1185, %v1633
    %1635 = vmatprep.mubr.f32.mxu0 %v291
    %1636 = vmatmul.mubr.f32.gmra.mxu0 %v290
    %v1637 = vpop.f32.mrf.mxu0
    %v1638 = vadd.f32 %v1189, %v1637
    %v1639 = vpop.f32.mrf.mxu0
    %v1640 = vadd.f32 %v1191, %v1639
    %1641 = vmatprep.mubr.f32.mxu0 %v299
    %1642 = vmatmul.mubr.f32.gmra.mxu0 %v298
    %v1643 = vpop.f32.mrf.mxu0
    %v1644 = vadd.f32 %v1195, %v1643
    %v1645 = vpop.f32.mrf.mxu0
    %v1646 = vadd.f32 %v1197, %v1645
    %1647 = vmatprep.mubr.f32.mxu0 %v307
    %1648 = vmatmul.mubr.f32.gmra.mxu0 %v306
    %v1649 = vpop.f32.mrf.mxu0
    %v1650 = vadd.f32 %v1201, %v1649
    %v1651 = vpop.f32.mrf.mxu0
    %v1652 = vadd.f32 %v1203, %v1651
    %1653 = vmatprep.mubr.f32.mxu0 %v315
    %1654 = vmatmul.mubr.f32.gmra.mxu0 %v314
    %v1655 = vpop.f32.mrf.mxu0
    %v1656 = vadd.f32 %v1207, %v1655
    %v1657 = vpop.f32.mrf.mxu0
    %v1658 = vadd.f32 %v1209, %v1657
    %1659 = vmatprep.mubr.f32.mxu0 %v323
    %1660 = vmatmul.mubr.f32.gmra.mxu0 %v322
    %v1661 = vpop.f32.mrf.mxu0
    %v1662 = vadd.f32 %v1213, %v1661
    %v1663 = vpop.f32.mrf.mxu0
    %v1664 = vadd.f32 %v1215, %v1663
    %1665 = vmatprep.mubr.f32.mxu0 %v331
    %1666 = vmatmul.mubr.f32.gmra.mxu0 %v330
    %v1667 = vpop.f32.mrf.mxu0
    %v1668 = vadd.f32 %v1219, %v1667
    %v1669 = vpop.f32.mrf.mxu0
    %v1670 = vadd.f32 %v1221, %v1669
    %1671 = vmatprep.mubr.f32.mxu0 %v339
    %1672 = vmatmul.mubr.f32.gmra.mxu0 %v338
    %v1673 = vpop.f32.mrf.mxu0
    %v1674 = vadd.f32 %v1225, %v1673
    %v1675 = vpop.f32.mrf.mxu0
    %v1676 = vadd.f32 %v1227, %v1675
    %1677 = vmatprep.mubr.f32.mxu0 %v347
    %1678 = vmatmul.mubr.f32.gmra.mxu0 %v346
    %v1679 = vpop.f32.mrf.mxu0
    %v1680 = vadd.f32 %v1231, %v1679
    %v1681 = vpop.f32.mrf.mxu0
    %v1682 = vadd.f32 %v1233, %v1681
    %1683 = vmatprep.mubr.f32.mxu0 %v355
    %1684 = vmatmul.mubr.f32.gmra.mxu0 %v354
    %v1685 = vpop.f32.mrf.mxu0
    %v1686 = vadd.f32 %v1237, %v1685
    %v1687 = vpop.f32.mrf.mxu0
    %v1688 = vadd.f32 %v1239, %v1687
    %1689 = vmatprep.mubr.f32.mxu0 %v363
    %1690 = vmatmul.mubr.f32.gmra.mxu0 %v362
    %v1691 = vpop.f32.mrf.mxu0
    %v1692 = vadd.f32 %v1243, %v1691
    %v1693 = vpop.f32.mrf.mxu0
    %v1694 = vadd.f32 %v1245, %v1693
    %1695 = vmatprep.mubr.f32.mxu0 %v371
    %1696 = vmatmul.mubr.f32.gmra.mxu0 %v370
    %v1697 = vpop.f32.mrf.mxu0
    %v1698 = vadd.f32 %v1249, %v1697
    %v1699 = vpop.f32.mrf.mxu0
    %v1700 = vadd.f32 %v1251, %v1699
    %1701 = vmatprep.mubr.f32.mxu0 %v379
    %1702 = vmatmul.mubr.f32.gmra.mxu0 %v378
    %v1703 = vpop.f32.mrf.mxu0
    %v1704 = vadd.f32 %v1255, %v1703
    %v1705 = vpop.f32.mrf.mxu0
    %v1706 = vadd.f32 %v1257, %v1705
    %1707 = vmatprep.mubr.f32.mxu0 %v387
    %1708 = vmatmul.mubr.f32.gmra.mxu0 %v386
    %v1709 = vpop.f32.mrf.mxu0
    %v1710 = vadd.f32 %v1261, %v1709
    %v1711 = vpop.f32.mrf.mxu0
    %v1712 = vadd.f32 %v1263, %v1711
    %1713 = vmatprep.mubr.f32.mxu0 %v395
    %1714 = vmatmul.mubr.f32.gmra.mxu0 %v394
    %v1715 = vpop.f32.mrf.mxu0
    %v1716 = vadd.f32 %v1267, %v1715
    %v1717 = vpop.f32.mrf.mxu0
    %v1718 = vadd.f32 %v1269, %v1717
    %1719 = vmatprep.mubr.f32.mxu0 %v403
    %1720 = vmatmul.mubr.f32.gmra.mxu0 %v402
    %v1721 = vpop.f32.mrf.mxu0
    %v1722 = vadd.f32 %v1273, %v1721
    %v1723 = vpop.f32.mrf.mxu0
    %v1724 = vadd.f32 %v1275, %v1723
    %1725 = vmatprep.mubr.f32.mxu0 %v411
    %1726 = vmatmul.mubr.f32.gmra.mxu0 %v410
    %v1727 = vpop.f32.mrf.mxu0
    %v1728 = vadd.f32 %v1279, %v1727
    %v1729 = vpop.f32.mrf.mxu0
    %v1730 = vadd.f32 %v1281, %v1729
    %1731 = vmatprep.mubr.f32.mxu0 %v419
    %1732 = vmatmul.mubr.f32.gmra.mxu0 %v418
    %v1733 = vpop.f32.mrf.mxu0
    %v1734 = vadd.f32 %v1285, %v1733
    %v1735 = vpop.f32.mrf.mxu0
    %v1736 = vadd.f32 %v1287, %v1735
    %1737 = vmatprep.mubr.f32.mxu0 %v427
    %1738 = vmatmul.mubr.f32.gmra.mxu0 %v426
    %v1739 = vpop.f32.mrf.mxu0
    %v1740 = vadd.f32 %v1291, %v1739
    %v1741 = vpop.f32.mrf.mxu0
    %v1742 = vadd.f32 %v1293, %v1741
    %1743 = vmatprep.mubr.f32.mxu0 %v435
    %1744 = vmatmul.mubr.f32.gmra.mxu0 %v434
    %v1745 = vpop.f32.mrf.mxu0
    %v1746 = vadd.f32 %v1297, %v1745
    %v1747 = vpop.f32.mrf.mxu0
    %v1748 = vadd.f32 %v1299, %v1747
    %1749 = vmatprep.mubr.f32.mxu0 %v443
    %1750 = vmatmul.mubr.f32.gmra.mxu0 %v442
    %v1751 = vpop.f32.mrf.mxu0
    %v1752 = vadd.f32 %v1303, %v1751
    %v1753 = vpop.f32.mrf.mxu0
    %v1754 = vadd.f32 %v1305, %v1753
    %1755 = vmatprep.mubr.f32.mxu0 %v451
    %1756 = vmatmul.mubr.f32.gmra.mxu0 %v450
    %v1757 = vpop.f32.mrf.mxu0
    %v1758 = vadd.f32 %v1309, %v1757
    %v1759 = vpop.f32.mrf.mxu0
    %v1760 = vadd.f32 %v1311, %v1759
    %1761 = vmatprep.mubr.f32.mxu0 %v459
    %1762 = vmatmul.mubr.f32.gmra.mxu0 %v458
    %v1763 = vpop.f32.mrf.mxu0
    %v1764 = vadd.f32 %v1315, %v1763
    %v1765 = vpop.f32.mrf.mxu0
    %v1766 = vadd.f32 %v1317, %v1765
    %1767 = vmatprep.mubr.f32.mxu0 %v467
    %1768 = vmatmul.mubr.f32.gmra.mxu0 %v466
    %v1769 = vpop.f32.mrf.mxu0
    %v1770 = vadd.f32 %v1321, %v1769
    %v1771 = vpop.f32.mrf.mxu0
    %v1772 = vadd.f32 %v1323, %v1771
    %1773 = vmatprep.mubr.f32.mxu0 %v475
    %1774 = vmatmul.mubr.f32.gmra.mxu0 %v474
    %v1775 = vpop.f32.mrf.mxu0
    %v1776 = vadd.f32 %v1327, %v1775
    %v1777 = vpop.f32.mrf.mxu0
    %v1778 = vadd.f32 %v1329, %v1777
    %1779 = vmatprep.mubr.f32.mxu0 %v483
    %1780 = vmatmul.mubr.f32.gmra.mxu0 %v482
    %v1781 = vpop.f32.mrf.mxu0
    %v1782 = vadd.f32 %v1333, %v1781
    %v1783 = vpop.f32.mrf.mxu0
    %v1784 = vadd.f32 %v1335, %v1783
    %1785 = vmatprep.mubr.f32.mxu0 %v491
    %1786 = vmatmul.mubr.f32.gmra.mxu0 %v490
    %v1787 = vpop.f32.mrf.mxu0
    %v1788 = vadd.f32 %v1339, %v1787
    %v1789 = vpop.f32.mrf.mxu0
    %v1790 = vadd.f32 %v1341, %v1789
    %1791 = vmatprep.mubr.f32.mxu0 %v499
    %1792 = vmatmul.mubr.f32.gmra.mxu0 %v498
    %v1793 = vpop.f32.mrf.mxu0
    %v1794 = vadd.f32 %v1345, %v1793
    %v1795 = vpop.f32.mrf.mxu0
    %v1796 = vadd.f32 %v1347, %v1795
    %1797 = vmatprep.mubr.f32.mxu0 %v507
    %1798 = vmatmul.mubr.f32.gmra.mxu0 %v506
    %v1799 = vpop.f32.mrf.mxu0
    %v1800 = vadd.f32 %v1351, %v1799
    %v1801 = vpop.f32.mrf.mxu0
    %v1802 = vadd.f32 %v1353, %v1801
    %1803 = vmatprep.mubr.f32.mxu0 %v515
    %1804 = vmatmul.mubr.f32.gmra.mxu0 %v514
    %v1805 = vpop.f32.mrf.mxu0
    %v1806 = vadd.f32 %v1357, %v1805
    %v1807 = vpop.f32.mrf.mxu0
    %v1808 = vadd.f32 %v1359, %v1807
    %1809 = vmatprep.mubr.f32.mxu0 %v523
    %1810 = vmatmul.mubr.f32.gmra.mxu0 %v522
    %v1811 = vpop.f32.mrf.mxu0
    %v1812 = vadd.f32 %v1363, %v1811
    %v1813 = vpop.f32.mrf.mxu0
    %v1814 = vadd.f32 %v1365, %v1813
    %1815 = vmatprep.mubr.f32.mxu0 %v531
    %1816 = vmatmul.mubr.f32.gmra.mxu0 %v530
    %v1817 = vpop.f32.mrf.mxu0
    %v1818 = vadd.f32 %v1369, %v1817
    %v1819 = vpop.f32.mrf.mxu0
    %v1820 = vadd.f32 %v1371, %v1819
    %1821 = vmatprep.mubr.f32.mxu0 %v539
    %1822 = vmatmul.mubr.f32.gmra.mxu0 %v538
    %v1823 = vpop.f32.mrf.mxu0
    %v1824 = vadd.f32 %v1375, %v1823
    %v1825 = vpop.f32.mrf.mxu0
    %v1826 = vadd.f32 %v1377, %v1825
    %1827 = vmatprep.mubr.f32.mxu0 %v547
    %1828 = vmatmul.mubr.f32.gmra.mxu0 %v546
    %v1829 = vpop.f32.mrf.mxu0
    %v1830 = vadd.f32 %v1381, %v1829
    %v1831 = vpop.f32.mrf.mxu0
    %v1832 = vadd.f32 %v1383, %v1831
    %1833 = vdwg.mxu0
    %1834 = vmatprep.subr.mxu0 %v790
    %1835 = vmatpush1.msra.mxu0 %v789
    %1836 = vmatprep.subr.mxu0 %v787
    %1837 = vmatpush1.msra.mxu0 %v786
    %1838 = vmatprep.subr.mxu0 %v784
    %1839 = vmatpush1.msra.mxu0 %v783
    %1840 = vmatprep.subr.mxu0 %v781
    %1841 = vmatpush1.msra.mxu0 %v780
    %1842 = vmatprep.subr.mxu0 %v778
    %1843 = vmatpush1.msra.mxu0 %v777
    %1844 = vmatprep.subr.mxu0 %v775
    %1845 = vmatpush1.msra.mxu0 %v774
    %1846 = vmatprep.subr.mxu0 %v772
    %1847 = vmatpush1.msra.mxu0 %v771
    %1848 = vmatprep.subr.mxu0 %v769
    %1849 = vmatpush1.msra.mxu0 %v768
    %1850 = vmatprep.subr.mxu0 %v766
    %1851 = vmatpush1.msra.mxu0 %v765
    %1852 = vmatprep.subr.mxu0 %v763
    %1853 = vmatpush1.msra.mxu0 %v762
    %1854 = vmatprep.subr.mxu0 %v760
    %1855 = vmatpush1.msra.mxu0 %v759
    %1856 = vmatprep.subr.mxu0 %v757
    %1857 = vmatpush1.msra.mxu0 %v756
    %1858 = vmatprep.subr.mxu0 %v754
    %1859 = vmatpush1.msra.mxu0 %v753
    %1860 = vmatprep.subr.mxu0 %v751
    %1861 = vmatpush1.msra.mxu0 %v750
    %1862 = vmatprep.subr.mxu0 %v748
    %1863 = vmatpush1.msra.mxu0 %v747
    %1864 = vmatprep.subr.mxu0 %v745
    %1865 = vmatpush1.msra.mxu0 %v744
    %1866 = vmatprep.subr.mxu0 %v838
    %1867 = vmatpush2.msra.mxu0 %v837
    %1868 = vmatprep.subr.mxu0 %v835
    %1869 = vmatpush2.msra.mxu0 %v834
    %1870 = vmatprep.subr.mxu0 %v832
    %1871 = vmatpush2.msra.mxu0 %v831
    %1872 = vmatprep.subr.mxu0 %v829
    %1873 = vmatpush2.msra.mxu0 %v828
    %1874 = vmatprep.subr.mxu0 %v826
    %1875 = vmatpush2.msra.mxu0 %v825
    %1876 = vmatprep.subr.mxu0 %v823
    %1877 = vmatpush2.msra.mxu0 %v822
    %1878 = vmatprep.subr.mxu0 %v820
    %1879 = vmatpush2.msra.mxu0 %v819
    %1880 = vmatprep.subr.mxu0 %v817
    %1881 = vmatpush2.msra.mxu0 %v816
    %1882 = vmatprep.subr.mxu0 %v814
    %1883 = vmatpush2.msra.mxu0 %v813
    %1884 = vmatprep.subr.mxu0 %v811
    %1885 = vmatpush2.msra.mxu0 %v810
    %1886 = vmatprep.subr.mxu0 %v808
    %1887 = vmatpush2.msra.mxu0 %v807
    %1888 = vmatprep.subr.mxu0 %v805
    %1889 = vmatpush2.msra.mxu0 %v804
    %1890 = vmatprep.subr.mxu0 %v802
    %1891 = vmatpush2.msra.mxu0 %v801
    %1892 = vmatprep.subr.mxu0 %v799
    %1893 = vmatpush2.msra.mxu0 %v798
    %1894 = vmatprep.subr.mxu0 %v796
    %1895 = vmatpush2.msra.mxu0 %v795
    %1896 = vmatprep.subr.mxu0 %v793
    %1897 = vmatpush2.msra.mxu0 %v792
    %1898 = vmatprep.mubr.f32.mxu0 %v45
    %1899 = vmatmul.mubr.f32.gmra.mxu0 %v44
    %v1900 = vpop.f32.mrf.mxu0
    %v1901 = vadd.f32 %v1452, %v1900
    %v1902 = vpop.f32.mrf.mxu0
    %v1903 = vadd.f32 %v1454, %v1902
    %1904 = vmatprep.mubr.f32.mxu0 %v53
    %1905 = vmatmul.mubr.f32.gmra.mxu0 %v52
    %v1906 = vpop.f32.mrf.mxu0
    %v1907 = vadd.f32 %v1458, %v1906
    %v1908 = vpop.f32.mrf.mxu0
    %v1909 = vadd.f32 %v1460, %v1908
    %1910 = vmatprep.mubr.f32.mxu0 %v61
    %1911 = vmatmul.mubr.f32.gmra.mxu0 %v60
    %v1912 = vpop.f32.mrf.mxu0
    %v1913 = vadd.f32 %v1464, %v1912
    %v1914 = vpop.f32.mrf.mxu0
    %v1915 = vadd.f32 %v1466, %v1914
    %1916 = vmatprep.mubr.f32.mxu0 %v69
    %1917 = vmatmul.mubr.f32.gmra.mxu0 %v68
    %v1918 = vpop.f32.mrf.mxu0
    %v1919 = vadd.f32 %v1470, %v1918
    %v1920 = vpop.f32.mrf.mxu0
    %v1921 = vadd.f32 %v1472, %v1920
    %1922 = vmatprep.mubr.f32.mxu0 %v77
    %1923 = vmatmul.mubr.f32.gmra.mxu0 %v76
    %v1924 = vpop.f32.mrf.mxu0
    %v1925 = vadd.f32 %v1476, %v1924
    %v1926 = vpop.f32.mrf.mxu0
    %v1927 = vadd.f32 %v1478, %v1926
    %1928 = vmatprep.mubr.f32.mxu0 %v85
    %1929 = vmatmul.mubr.f32.gmra.mxu0 %v84
    %v1930 = vpop.f32.mrf.mxu0
    %v1931 = vadd.f32 %v1482, %v1930
    %v1932 = vpop.f32.mrf.mxu0
    %v1933 = vadd.f32 %v1484, %v1932
    %1934 = vmatprep.mubr.f32.mxu0 %v93
    %1935 = vmatmul.mubr.f32.gmra.mxu0 %v92
    %v1936 = vpop.f32.mrf.mxu0
    %v1937 = vadd.f32 %v1488, %v1936
    %v1938 = vpop.f32.mrf.mxu0
    %v1939 = vadd.f32 %v1490, %v1938
    %1940 = vmatprep.mubr.f32.mxu0 %v101
    %1941 = vmatmul.mubr.f32.gmra.mxu0 %v100
    %v1942 = vpop.f32.mrf.mxu0
    %v1943 = vadd.f32 %v1494, %v1942
    %v1944 = vpop.f32.mrf.mxu0
    %v1945 = vadd.f32 %v1496, %v1944
    %1946 = vmatprep.mubr.f32.mxu0 %v109
    %1947 = vmatmul.mubr.f32.gmra.mxu0 %v108
    %v1948 = vpop.f32.mrf.mxu0
    %v1949 = vadd.f32 %v1500, %v1948
    %v1950 = vpop.f32.mrf.mxu0
    %v1951 = vadd.f32 %v1502, %v1950
    %1952 = vmatprep.mubr.f32.mxu0 %v117
    %1953 = vmatmul.mubr.f32.gmra.mxu0 %v116
    %v1954 = vpop.f32.mrf.mxu0
    %v1955 = vadd.f32 %v1506, %v1954
    %v1956 = vpop.f32.mrf.mxu0
    %v1957 = vadd.f32 %v1508, %v1956
    %1958 = vmatprep.mubr.f32.mxu0 %v125
    %1959 = vmatmul.mubr.f32.gmra.mxu0 %v124
    %v1960 = vpop.f32.mrf.mxu0
    %v1961 = vadd.f32 %v1512, %v1960
    %v1962 = vpop.f32.mrf.mxu0
    %v1963 = vadd.f32 %v1514, %v1962
    %1964 = vmatprep.mubr.f32.mxu0 %v133
    %1965 = vmatmul.mubr.f32.gmra.mxu0 %v132
    %v1966 = vpop.f32.mrf.mxu0
    %v1967 = vadd.f32 %v1518, %v1966
    %v1968 = vpop.f32.mrf.mxu0
    %v1969 = vadd.f32 %v1520, %v1968
    %1970 = vmatprep.mubr.f32.mxu0 %v141
    %1971 = vmatmul.mubr.f32.gmra.mxu0 %v140
    %v1972 = vpop.f32.mrf.mxu0
    %v1973 = vadd.f32 %v1524, %v1972
    %v1974 = vpop.f32.mrf.mxu0
    %v1975 = vadd.f32 %v1526, %v1974
    %1976 = vmatprep.mubr.f32.mxu0 %v149
    %1977 = vmatmul.mubr.f32.gmra.mxu0 %v148
    %v1978 = vpop.f32.mrf.mxu0
    %v1979 = vadd.f32 %v1530, %v1978
    %v1980 = vpop.f32.mrf.mxu0
    %v1981 = vadd.f32 %v1532, %v1980
    %1982 = vmatprep.mubr.f32.mxu0 %v157
    %1983 = vmatmul.mubr.f32.gmra.mxu0 %v156
    %v1984 = vpop.f32.mrf.mxu0
    %v1985 = vadd.f32 %v1536, %v1984
    %v1986 = vpop.f32.mrf.mxu0
    %v1987 = vadd.f32 %v1538, %v1986
    %1988 = vmatprep.mubr.f32.mxu0 %v165
    %1989 = vmatmul.mubr.f32.gmra.mxu0 %v164
    %v1990 = vpop.f32.mrf.mxu0
    %v1991 = vadd.f32 %v1542, %v1990
    %v1992 = vpop.f32.mrf.mxu0
    %v1993 = vadd.f32 %v1544, %v1992
    %1994 = vmatprep.mubr.f32.mxu0 %v173
    %1995 = vmatmul.mubr.f32.gmra.mxu0 %v172
    %v1996 = vpop.f32.mrf.mxu0
    %v1997 = vadd.f32 %v1548, %v1996
    %v1998 = vpop.f32.mrf.mxu0
    %v1999 = vadd.f32 %v1550, %v1998
    %2000 = vmatprep.mubr.f32.mxu0 %v181
    %2001 = vmatmul.mubr.f32.gmra.mxu0 %v180
    %v2002 = vpop.f32.mrf.mxu0
    %v2003 = vadd.f32 %v1554, %v2002
    %v2004 = vpop.f32.mrf.mxu0
    %v2005 = vadd.f32 %v1556, %v2004
    %2006 = vmatprep.mubr.f32.mxu0 %v189
    %2007 = vmatmul.mubr.f32.gmra.mxu0 %v188
    %v2008 = vpop.f32.mrf.mxu0
    %v2009 = vadd.f32 %v1560, %v2008
    %v2010 = vpop.f32.mrf.mxu0
    %v2011 = vadd.f32 %v1562, %v2010
    %2012 = vmatprep.mubr.f32.mxu0 %v197
    %2013 = vmatmul.mubr.f32.gmra.mxu0 %v196
    %v2014 = vpop.f32.mrf.mxu0
    %v2015 = vadd.f32 %v1566, %v2014
    %v2016 = vpop.f32.mrf.mxu0
    %v2017 = vadd.f32 %v1568, %v2016
    %2018 = vmatprep.mubr.f32.mxu0 %v205
    %2019 = vmatmul.mubr.f32.gmra.mxu0 %v204
    %v2020 = vpop.f32.mrf.mxu0
    %v2021 = vadd.f32 %v1572, %v2020
    %v2022 = vpop.f32.mrf.mxu0
    %v2023 = vadd.f32 %v1574, %v2022
    %2024 = vmatprep.mubr.f32.mxu0 %v213
    %2025 = vmatmul.mubr.f32.gmra.mxu0 %v212
    %v2026 = vpop.f32.mrf.mxu0
    %v2027 = vadd.f32 %v1578, %v2026
    %v2028 = vpop.f32.mrf.mxu0
    %v2029 = vadd.f32 %v1580, %v2028
    %2030 = vmatprep.mubr.f32.mxu0 %v221
    %2031 = vmatmul.mubr.f32.gmra.mxu0 %v220
    %v2032 = vpop.f32.mrf.mxu0
    %v2033 = vadd.f32 %v1584, %v2032
    %v2034 = vpop.f32.mrf.mxu0
    %v2035 = vadd.f32 %v1586, %v2034
    %2036 = vmatprep.mubr.f32.mxu0 %v229
    %2037 = vmatmul.mubr.f32.gmra.mxu0 %v228
    %v2038 = vpop.f32.mrf.mxu0
    %v2039 = vadd.f32 %v1590, %v2038
    %v2040 = vpop.f32.mrf.mxu0
    %v2041 = vadd.f32 %v1592, %v2040
    %2042 = vmatprep.mubr.f32.mxu0 %v237
    %2043 = vmatmul.mubr.f32.gmra.mxu0 %v236
    %v2044 = vpop.f32.mrf.mxu0
    %v2045 = vadd.f32 %v1596, %v2044
    %v2046 = vpop.f32.mrf.mxu0
    %v2047 = vadd.f32 %v1598, %v2046
    %2048 = vmatprep.mubr.f32.mxu0 %v245
    %2049 = vmatmul.mubr.f32.gmra.mxu0 %v244
    %v2050 = vpop.f32.mrf.mxu0
    %v2051 = vadd.f32 %v1602, %v2050
    %v2052 = vpop.f32.mrf.mxu0
    %v2053 = vadd.f32 %v1604, %v2052
    %2054 = vmatprep.mubr.f32.mxu0 %v253
    %2055 = vmatmul.mubr.f32.gmra.mxu0 %v252
    %v2056 = vpop.f32.mrf.mxu0
    %v2057 = vadd.f32 %v1608, %v2056
    %v2058 = vpop.f32.mrf.mxu0
    %v2059 = vadd.f32 %v1610, %v2058
    %2060 = vmatprep.mubr.f32.mxu0 %v261
    %2061 = vmatmul.mubr.f32.gmra.mxu0 %v260
    %v2062 = vpop.f32.mrf.mxu0
    %v2063 = vadd.f32 %v1614, %v2062
    %v2064 = vpop.f32.mrf.mxu0
    %v2065 = vadd.f32 %v1616, %v2064
    %2066 = vmatprep.mubr.f32.mxu0 %v269
    %2067 = vmatmul.mubr.f32.gmra.mxu0 %v268
    %v2068 = vpop.f32.mrf.mxu0
    %v2069 = vadd.f32 %v1620, %v2068
    %v2070 = vpop.f32.mrf.mxu0
    %v2071 = vadd.f32 %v1622, %v2070
    %2072 = vmatprep.mubr.f32.mxu0 %v277
    %2073 = vmatmul.mubr.f32.gmra.mxu0 %v276
    %v2074 = vpop.f32.mrf.mxu0
    %v2075 = vadd.f32 %v1626, %v2074
    %v2076 = vpop.f32.mrf.mxu0
    %v2077 = vadd.f32 %v1628, %v2076
    %2078 = vmatprep.mubr.f32.mxu0 %v285
    %2079 = vmatmul.mubr.f32.gmra.mxu0 %v284
    %v2080 = vpop.f32.mrf.mxu0
    %v2081 = vadd.f32 %v1632, %v2080
    %v2082 = vpop.f32.mrf.mxu0
    %v2083 = vadd.f32 %v1634, %v2082
    %2084 = vmatprep.mubr.f32.mxu0 %v293
    %2085 = vmatmul.mubr.f32.gmra.mxu0 %v292
    %v2086 = vpop.f32.mrf.mxu0
    %v2087 = vadd.f32 %v1638, %v2086
    %v2088 = vpop.f32.mrf.mxu0
    %v2089 = vadd.f32 %v1640, %v2088
    %2090 = vmatprep.mubr.f32.mxu0 %v301
    %2091 = vmatmul.mubr.f32.gmra.mxu0 %v300
    %v2092 = vpop.f32.mrf.mxu0
    %v2093 = vadd.f32 %v1644, %v2092
    %v2094 = vpop.f32.mrf.mxu0
    %v2095 = vadd.f32 %v1646, %v2094
    %2096 = vmatprep.mubr.f32.mxu0 %v309
    %2097 = vmatmul.mubr.f32.gmra.mxu0 %v308
    %v2098 = vpop.f32.mrf.mxu0
    %v2099 = vadd.f32 %v1650, %v2098
    %v2100 = vpop.f32.mrf.mxu0
    %v2101 = vadd.f32 %v1652, %v2100
    %2102 = vmatprep.mubr.f32.mxu0 %v317
    %2103 = vmatmul.mubr.f32.gmra.mxu0 %v316
    %v2104 = vpop.f32.mrf.mxu0
    %v2105 = vadd.f32 %v1656, %v2104
    %v2106 = vpop.f32.mrf.mxu0
    %v2107 = vadd.f32 %v1658, %v2106
    %2108 = vmatprep.mubr.f32.mxu0 %v325
    %2109 = vmatmul.mubr.f32.gmra.mxu0 %v324
    %v2110 = vpop.f32.mrf.mxu0
    %v2111 = vadd.f32 %v1662, %v2110
    %v2112 = vpop.f32.mrf.mxu0
    %v2113 = vadd.f32 %v1664, %v2112
    %2114 = vmatprep.mubr.f32.mxu0 %v333
    %2115 = vmatmul.mubr.f32.gmra.mxu0 %v332
    %v2116 = vpop.f32.mrf.mxu0
    %v2117 = vadd.f32 %v1668, %v2116
    %v2118 = vpop.f32.mrf.mxu0
    %v2119 = vadd.f32 %v1670, %v2118
    %2120 = vmatprep.mubr.f32.mxu0 %v341
    %2121 = vmatmul.mubr.f32.gmra.mxu0 %v340
    %v2122 = vpop.f32.mrf.mxu0
    %v2123 = vadd.f32 %v1674, %v2122
    %v2124 = vpop.f32.mrf.mxu0
    %v2125 = vadd.f32 %v1676, %v2124
    %2126 = vmatprep.mubr.f32.mxu0 %v349
    %2127 = vmatmul.mubr.f32.gmra.mxu0 %v348
    %v2128 = vpop.f32.mrf.mxu0
    %v2129 = vadd.f32 %v1680, %v2128
    %v2130 = vpop.f32.mrf.mxu0
    %v2131 = vadd.f32 %v1682, %v2130
    %2132 = vmatprep.mubr.f32.mxu0 %v357
    %2133 = vmatmul.mubr.f32.gmra.mxu0 %v356
    %v2134 = vpop.f32.mrf.mxu0
    %v2135 = vadd.f32 %v1686, %v2134
    %v2136 = vpop.f32.mrf.mxu0
    %v2137 = vadd.f32 %v1688, %v2136
    %2138 = vmatprep.mubr.f32.mxu0 %v365
    %2139 = vmatmul.mubr.f32.gmra.mxu0 %v364
    %v2140 = vpop.f32.mrf.mxu0
    %v2141 = vadd.f32 %v1692, %v2140
    %v2142 = vpop.f32.mrf.mxu0
    %v2143 = vadd.f32 %v1694, %v2142
    %2144 = vmatprep.mubr.f32.mxu0 %v373
    %2145 = vmatmul.mubr.f32.gmra.mxu0 %v372
    %v2146 = vpop.f32.mrf.mxu0
    %v2147 = vadd.f32 %v1698, %v2146
    %v2148 = vpop.f32.mrf.mxu0
    %v2149 = vadd.f32 %v1700, %v2148
    %2150 = vmatprep.mubr.f32.mxu0 %v381
    %2151 = vmatmul.mubr.f32.gmra.mxu0 %v380
    %v2152 = vpop.f32.mrf.mxu0
    %v2153 = vadd.f32 %v1704, %v2152
    %v2154 = vpop.f32.mrf.mxu0
    %v2155 = vadd.f32 %v1706, %v2154
    %2156 = vmatprep.mubr.f32.mxu0 %v389
    %2157 = vmatmul.mubr.f32.gmra.mxu0 %v388
    %v2158 = vpop.f32.mrf.mxu0
    %v2159 = vadd.f32 %v1710, %v2158
    %v2160 = vpop.f32.mrf.mxu0
    %v2161 = vadd.f32 %v1712, %v2160
    %2162 = vmatprep.mubr.f32.mxu0 %v397
    %2163 = vmatmul.mubr.f32.gmra.mxu0 %v396
    %v2164 = vpop.f32.mrf.mxu0
    %v2165 = vadd.f32 %v1716, %v2164
    %v2166 = vpop.f32.mrf.mxu0
    %v2167 = vadd.f32 %v1718, %v2166
    %2168 = vmatprep.mubr.f32.mxu0 %v405
    %2169 = vmatmul.mubr.f32.gmra.mxu0 %v404
    %v2170 = vpop.f32.mrf.mxu0
    %v2171 = vadd.f32 %v1722, %v2170
    %v2172 = vpop.f32.mrf.mxu0
    %v2173 = vadd.f32 %v1724, %v2172
    %2174 = vmatprep.mubr.f32.mxu0 %v413
    %2175 = vmatmul.mubr.f32.gmra.mxu0 %v412
    %v2176 = vpop.f32.mrf.mxu0
    %v2177 = vadd.f32 %v1728, %v2176
    %v2178 = vpop.f32.mrf.mxu0
    %v2179 = vadd.f32 %v1730, %v2178
    %2180 = vmatprep.mubr.f32.mxu0 %v421
    %2181 = vmatmul.mubr.f32.gmra.mxu0 %v420
    %v2182 = vpop.f32.mrf.mxu0
    %v2183 = vadd.f32 %v1734, %v2182
    %v2184 = vpop.f32.mrf.mxu0
    %v2185 = vadd.f32 %v1736, %v2184
    %2186 = vmatprep.mubr.f32.mxu0 %v429
    %2187 = vmatmul.mubr.f32.gmra.mxu0 %v428
    %v2188 = vpop.f32.mrf.mxu0
    %v2189 = vadd.f32 %v1740, %v2188
    %v2190 = vpop.f32.mrf.mxu0
    %v2191 = vadd.f32 %v1742, %v2190
    %2192 = vmatprep.mubr.f32.mxu0 %v437
    %2193 = vmatmul.mubr.f32.gmra.mxu0 %v436
    %v2194 = vpop.f32.mrf.mxu0
    %v2195 = vadd.f32 %v1746, %v2194
    %v2196 = vpop.f32.mrf.mxu0
    %v2197 = vadd.f32 %v1748, %v2196
    %2198 = vmatprep.mubr.f32.mxu0 %v445
    %2199 = vmatmul.mubr.f32.gmra.mxu0 %v444
    %v2200 = vpop.f32.mrf.mxu0
    %v2201 = vadd.f32 %v1752, %v2200
    %v2202 = vpop.f32.mrf.mxu0
    %v2203 = vadd.f32 %v1754, %v2202
    %2204 = vmatprep.mubr.f32.mxu0 %v453
    %2205 = vmatmul.mubr.f32.gmra.mxu0 %v452
    %v2206 = vpop.f32.mrf.mxu0
    %v2207 = vadd.f32 %v1758, %v2206
    %v2208 = vpop.f32.mrf.mxu0
    %v2209 = vadd.f32 %v1760, %v2208
    %2210 = vmatprep.mubr.f32.mxu0 %v461
    %2211 = vmatmul.mubr.f32.gmra.mxu0 %v460
    %v2212 = vpop.f32.mrf.mxu0
    %v2213 = vadd.f32 %v1764, %v2212
    %v2214 = vpop.f32.mrf.mxu0
    %v2215 = vadd.f32 %v1766, %v2214
    %2216 = vmatprep.mubr.f32.mxu0 %v469
    %2217 = vmatmul.mubr.f32.gmra.mxu0 %v468
    %v2218 = vpop.f32.mrf.mxu0
    %v2219 = vadd.f32 %v1770, %v2218
    %v2220 = vpop.f32.mrf.mxu0
    %v2221 = vadd.f32 %v1772, %v2220
    %2222 = vmatprep.mubr.f32.mxu0 %v477
    %2223 = vmatmul.mubr.f32.gmra.mxu0 %v476
    %v2224 = vpop.f32.mrf.mxu0
    %v2225 = vadd.f32 %v1776, %v2224
    %v2226 = vpop.f32.mrf.mxu0
    %v2227 = vadd.f32 %v1778, %v2226
    %2228 = vmatprep.mubr.f32.mxu0 %v485
    %2229 = vmatmul.mubr.f32.gmra.mxu0 %v484
    %v2230 = vpop.f32.mrf.mxu0
    %v2231 = vadd.f32 %v1782, %v2230
    %v2232 = vpop.f32.mrf.mxu0
    %v2233 = vadd.f32 %v1784, %v2232
    %2234 = vmatprep.mubr.f32.mxu0 %v493
    %2235 = vmatmul.mubr.f32.gmra.mxu0 %v492
    %v2236 = vpop.f32.mrf.mxu0
    %v2237 = vadd.f32 %v1788, %v2236
    %v2238 = vpop.f32.mrf.mxu0
    %v2239 = vadd.f32 %v1790, %v2238
    %2240 = vmatprep.mubr.f32.mxu0 %v501
    %2241 = vmatmul.mubr.f32.gmra.mxu0 %v500
    %v2242 = vpop.f32.mrf.mxu0
    %v2243 = vadd.f32 %v1794, %v2242
    %v2244 = vpop.f32.mrf.mxu0
    %v2245 = vadd.f32 %v1796, %v2244
    %2246 = vmatprep.mubr.f32.mxu0 %v509
    %2247 = vmatmul.mubr.f32.gmra.mxu0 %v508
    %v2248 = vpop.f32.mrf.mxu0
    %v2249 = vadd.f32 %v1800, %v2248
    %v2250 = vpop.f32.mrf.mxu0
    %v2251 = vadd.f32 %v1802, %v2250
    %2252 = vmatprep.mubr.f32.mxu0 %v517
    %2253 = vmatmul.mubr.f32.gmra.mxu0 %v516
    %v2254 = vpop.f32.mrf.mxu0
    %v2255 = vadd.f32 %v1806, %v2254
    %v2256 = vpop.f32.mrf.mxu0
    %v2257 = vadd.f32 %v1808, %v2256
    %2258 = vmatprep.mubr.f32.mxu0 %v525
    %2259 = vmatmul.mubr.f32.gmra.mxu0 %v524
    %v2260 = vpop.f32.mrf.mxu0
    %v2261 = vadd.f32 %v1812, %v2260
    %v2262 = vpop.f32.mrf.mxu0
    %v2263 = vadd.f32 %v1814, %v2262
    %2264 = vmatprep.mubr.f32.mxu0 %v533
    %2265 = vmatmul.mubr.f32.gmra.mxu0 %v532
    %v2266 = vpop.f32.mrf.mxu0
    %v2267 = vadd.f32 %v1818, %v2266
    %v2268 = vpop.f32.mrf.mxu0
    %v2269 = vadd.f32 %v1820, %v2268
    %2270 = vmatprep.mubr.f32.mxu0 %v541
    %2271 = vmatmul.mubr.f32.gmra.mxu0 %v540
    %v2272 = vpop.f32.mrf.mxu0
    %v2273 = vadd.f32 %v1824, %v2272
    %v2274 = vpop.f32.mrf.mxu0
    %v2275 = vadd.f32 %v1826, %v2274
    %2276 = vmatprep.mubr.f32.mxu0 %v549
    %2277 = vmatmul.mubr.f32.gmra.mxu0 %v548
    %v2278 = vpop.f32.mrf.mxu0
    %v2279 = vadd.f32 %v1830, %v2278
    %v2280 = vpop.f32.mrf.mxu0
    %v2281 = vadd.f32 %v1832, %v2280
    %2282 = vdwg.mxu0
    %2283 = vmatprep.subr.mxu0 %v886
    %2284 = vmatpush1.msra.mxu0 %v885
    %2285 = vmatprep.subr.mxu0 %v883
    %2286 = vmatpush1.msra.mxu0 %v882
    %2287 = vmatprep.subr.mxu0 %v880
    %2288 = vmatpush1.msra.mxu0 %v879
    %2289 = vmatprep.subr.mxu0 %v877
    %2290 = vmatpush1.msra.mxu0 %v876
    %2291 = vmatprep.subr.mxu0 %v874
    %2292 = vmatpush1.msra.mxu0 %v873
    %2293 = vmatprep.subr.mxu0 %v871
    %2294 = vmatpush1.msra.mxu0 %v870
    %2295 = vmatprep.subr.mxu0 %v868
    %2296 = vmatpush1.msra.mxu0 %v867
    %2297 = vmatprep.subr.mxu0 %v865
    %2298 = vmatpush1.msra.mxu0 %v864
    %2299 = vmatprep.subr.mxu0 %v862
    %2300 = vmatpush1.msra.mxu0 %v861
    %2301 = vmatprep.subr.mxu0 %v859
    %2302 = vmatpush1.msra.mxu0 %v858
    %2303 = vmatprep.subr.mxu0 %v856
    %2304 = vmatpush1.msra.mxu0 %v855
    %2305 = vmatprep.subr.mxu0 %v853
    %2306 = vmatpush1.msra.mxu0 %v852
    %2307 = vmatprep.subr.mxu0 %v850
    %2308 = vmatpush1.msra.mxu0 %v849
    %2309 = vmatprep.subr.mxu0 %v847
    %2310 = vmatpush1.msra.mxu0 %v846
    %2311 = vmatprep.subr.mxu0 %v844
    %2312 = vmatpush1.msra.mxu0 %v843
    %2313 = vmatprep.subr.mxu0 %v841
    %2314 = vmatpush1.msra.mxu0 %v840
    %2315 = vmatprep.subr.mxu0 %v934
    %2316 = vmatpush2.msra.mxu0 %v933
    %2317 = vmatprep.subr.mxu0 %v931
    %2318 = vmatpush2.msra.mxu0 %v930
    %2319 = vmatprep.subr.mxu0 %v928
    %2320 = vmatpush2.msra.mxu0 %v927
    %2321 = vmatprep.subr.mxu0 %v925
    %2322 = vmatpush2.msra.mxu0 %v924
    %2323 = vmatprep.subr.mxu0 %v922
    %2324 = vmatpush2.msra.mxu0 %v921
    %2325 = vmatprep.subr.mxu0 %v919
    %2326 = vmatpush2.msra.mxu0 %v918
    %2327 = vmatprep.subr.mxu0 %v916
    %2328 = vmatpush2.msra.mxu0 %v915
    %2329 = vmatprep.subr.mxu0 %v913
    %2330 = vmatpush2.msra.mxu0 %v912
    %2331 = vmatprep.subr.mxu0 %v910
    %2332 = vmatpush2.msra.mxu0 %v909
    %2333 = vmatprep.subr.mxu0 %v907
    %2334 = vmatpush2.msra.mxu0 %v906
    %2335 = vmatprep.subr.mxu0 %v904
    %2336 = vmatpush2.msra.mxu0 %v903
    %2337 = vmatprep.subr.mxu0 %v901
    %2338 = vmatpush2.msra.mxu0 %v900
    %2339 = vmatprep.subr.mxu0 %v898
    %2340 = vmatpush2.msra.mxu0 %v897
    %2341 = vmatprep.subr.mxu0 %v895
    %2342 = vmatpush2.msra.mxu0 %v894
    %2343 = vmatprep.subr.mxu0 %v892
    %2344 = vmatpush2.msra.mxu0 %v891
    %2345 = vmatprep.subr.mxu0 %v889
    %2346 = vmatpush2.msra.mxu0 %v888
    %2347 = vmatprep.mubr.f32.mxu0 %v47
    %2348 = vmatmul.mubr.f32.gmra.mxu0 %v46
    %v2349 = vpop.f32.mrf.mxu0
    %v2350 = vadd.f32 %v1901, %v2349
    %v2351 = vpop.f32.mrf.mxu0
    %v2352 = vadd.f32 %v1903, %v2351
    %2353 = vmatprep.mubr.f32.mxu0 %v55
    %2354 = vmatmul.mubr.f32.gmra.mxu0 %v54
    %v2355 = vpop.f32.mrf.mxu0
    %v2356 = vadd.f32 %v1907, %v2355
    %v2357 = vpop.f32.mrf.mxu0
    %v2358 = vadd.f32 %v1909, %v2357
    %2359 = vmatprep.mubr.f32.mxu0 %v63
    %2360 = vmatmul.mubr.f32.gmra.mxu0 %v62
    %v2361 = vpop.f32.mrf.mxu0
    %v2362 = vadd.f32 %v1913, %v2361
    %v2363 = vpop.f32.mrf.mxu0
    %v2364 = vadd.f32 %v1915, %v2363
    %2365 = vmatprep.mubr.f32.mxu0 %v71
    %2366 = vmatmul.mubr.f32.gmra.mxu0 %v70
    %v2367 = vpop.f32.mrf.mxu0
    %v2368 = vadd.f32 %v1919, %v2367
    %v2369 = vpop.f32.mrf.mxu0
    %v2370 = vadd.f32 %v1921, %v2369
    %2371 = vmatprep.mubr.f32.mxu0 %v79
    %2372 = vmatmul.mubr.f32.gmra.mxu0 %v78
    %v2373 = vpop.f32.mrf.mxu0
    %v2374 = vadd.f32 %v1925, %v2373
    %v2375 = vpop.f32.mrf.mxu0
    %v2376 = vadd.f32 %v1927, %v2375
    %2377 = vmatprep.mubr.f32.mxu0 %v87
    %2378 = vmatmul.mubr.f32.gmra.mxu0 %v86
    %v2379 = vpop.f32.mrf.mxu0
    %v2380 = vadd.f32 %v1931, %v2379
    %v2381 = vpop.f32.mrf.mxu0
    %v2382 = vadd.f32 %v1933, %v2381
    %2383 = vmatprep.mubr.f32.mxu0 %v95
    %2384 = vmatmul.mubr.f32.gmra.mxu0 %v94
    %v2385 = vpop.f32.mrf.mxu0
    %v2386 = vadd.f32 %v1937, %v2385
    %v2387 = vpop.f32.mrf.mxu0
    %v2388 = vadd.f32 %v1939, %v2387
    %2389 = vmatprep.mubr.f32.mxu0 %v103
    %2390 = vmatmul.mubr.f32.gmra.mxu0 %v102
    %v2391 = vpop.f32.mrf.mxu0
    %v2392 = vadd.f32 %v1943, %v2391
    %v2393 = vpop.f32.mrf.mxu0
    %v2394 = vadd.f32 %v1945, %v2393
    %2395 = vmatprep.mubr.f32.mxu0 %v111
    %2396 = vmatmul.mubr.f32.gmra.mxu0 %v110
    %v2397 = vpop.f32.mrf.mxu0
    %v2398 = vadd.f32 %v1949, %v2397
    %v2399 = vpop.f32.mrf.mxu0
    %v2400 = vadd.f32 %v1951, %v2399
    %2401 = vmatprep.mubr.f32.mxu0 %v119
    %2402 = vmatmul.mubr.f32.gmra.mxu0 %v118
    %v2403 = vpop.f32.mrf.mxu0
    %v2404 = vadd.f32 %v1955, %v2403
    %v2405 = vpop.f32.mrf.mxu0
    %v2406 = vadd.f32 %v1957, %v2405
    %2407 = vmatprep.mubr.f32.mxu0 %v127
    %2408 = vmatmul.mubr.f32.gmra.mxu0 %v126
    %v2409 = vpop.f32.mrf.mxu0
    %v2410 = vadd.f32 %v1961, %v2409
    %v2411 = vpop.f32.mrf.mxu0
    %v2412 = vadd.f32 %v1963, %v2411
    %2413 = vmatprep.mubr.f32.mxu0 %v135
    %2414 = vmatmul.mubr.f32.gmra.mxu0 %v134
    %v2415 = vpop.f32.mrf.mxu0
    %v2416 = vadd.f32 %v1967, %v2415
    %v2417 = vpop.f32.mrf.mxu0
    %v2418 = vadd.f32 %v1969, %v2417
    %2419 = vmatprep.mubr.f32.mxu0 %v143
    %2420 = vmatmul.mubr.f32.gmra.mxu0 %v142
    %v2421 = vpop.f32.mrf.mxu0
    %v2422 = vadd.f32 %v1973, %v2421
    %v2423 = vpop.f32.mrf.mxu0
    %v2424 = vadd.f32 %v1975, %v2423
    %2425 = vmatprep.mubr.f32.mxu0 %v151
    %2426 = vmatmul.mubr.f32.gmra.mxu0 %v150
    %v2427 = vpop.f32.mrf.mxu0
    %v2428 = vadd.f32 %v1979, %v2427
    %v2429 = vpop.f32.mrf.mxu0
    %v2430 = vadd.f32 %v1981, %v2429
    %2431 = vmatprep.mubr.f32.mxu0 %v159
    %2432 = vmatmul.mubr.f32.gmra.mxu0 %v158
    %v2433 = vpop.f32.mrf.mxu0
    %v2434 = vadd.f32 %v1985, %v2433
    %v2435 = vpop.f32.mrf.mxu0
    %v2436 = vadd.f32 %v1987, %v2435
    %2437 = vmatprep.mubr.f32.mxu0 %v167
    %2438 = vmatmul.mubr.f32.gmra.mxu0 %v166
    %v2439 = vpop.f32.mrf.mxu0
    %v2440 = vadd.f32 %v1991, %v2439
    %v2441 = vpop.f32.mrf.mxu0
    %v2442 = vadd.f32 %v1993, %v2441
    %2443 = vmatprep.mubr.f32.mxu0 %v175
    %2444 = vmatmul.mubr.f32.gmra.mxu0 %v174
    %v2445 = vpop.f32.mrf.mxu0
    %v2446 = vadd.f32 %v1997, %v2445
    %v2447 = vpop.f32.mrf.mxu0
    %v2448 = vadd.f32 %v1999, %v2447
    %2449 = vmatprep.mubr.f32.mxu0 %v183
    %2450 = vmatmul.mubr.f32.gmra.mxu0 %v182
    %v2451 = vpop.f32.mrf.mxu0
    %v2452 = vadd.f32 %v2003, %v2451
    %v2453 = vpop.f32.mrf.mxu0
    %v2454 = vadd.f32 %v2005, %v2453
    %2455 = vmatprep.mubr.f32.mxu0 %v191
    %2456 = vmatmul.mubr.f32.gmra.mxu0 %v190
    %v2457 = vpop.f32.mrf.mxu0
    %v2458 = vadd.f32 %v2009, %v2457
    %v2459 = vpop.f32.mrf.mxu0
    %v2460 = vadd.f32 %v2011, %v2459
    %2461 = vmatprep.mubr.f32.mxu0 %v199
    %2462 = vmatmul.mubr.f32.gmra.mxu0 %v198
    %v2463 = vpop.f32.mrf.mxu0
    %v2464 = vadd.f32 %v2015, %v2463
    %v2465 = vpop.f32.mrf.mxu0
    %v2466 = vadd.f32 %v2017, %v2465
    %2467 = vmatprep.mubr.f32.mxu0 %v207
    %2468 = vmatmul.mubr.f32.gmra.mxu0 %v206
    %v2469 = vpop.f32.mrf.mxu0
    %v2470 = vadd.f32 %v2021, %v2469
    %v2471 = vpop.f32.mrf.mxu0
    %v2472 = vadd.f32 %v2023, %v2471
    %2473 = vmatprep.mubr.f32.mxu0 %v215
    %2474 = vmatmul.mubr.f32.gmra.mxu0 %v214
    %v2475 = vpop.f32.mrf.mxu0
    %v2476 = vadd.f32 %v2027, %v2475
    %v2477 = vpop.f32.mrf.mxu0
    %v2478 = vadd.f32 %v2029, %v2477
    %2479 = vmatprep.mubr.f32.mxu0 %v223
    %2480 = vmatmul.mubr.f32.gmra.mxu0 %v222
    %v2481 = vpop.f32.mrf.mxu0
    %v2482 = vadd.f32 %v2033, %v2481
    %v2483 = vpop.f32.mrf.mxu0
    %v2484 = vadd.f32 %v2035, %v2483
    %2485 = vmatprep.mubr.f32.mxu0 %v231
    %2486 = vmatmul.mubr.f32.gmra.mxu0 %v230
    %v2487 = vpop.f32.mrf.mxu0
    %v2488 = vadd.f32 %v2039, %v2487
    %v2489 = vpop.f32.mrf.mxu0
    %v2490 = vadd.f32 %v2041, %v2489
    %2491 = vmatprep.mubr.f32.mxu0 %v239
    %2492 = vmatmul.mubr.f32.gmra.mxu0 %v238
    %v2493 = vpop.f32.mrf.mxu0
    %v2494 = vadd.f32 %v2045, %v2493
    %v2495 = vpop.f32.mrf.mxu0
    %v2496 = vadd.f32 %v2047, %v2495
    %2497 = vmatprep.mubr.f32.mxu0 %v247
    %2498 = vmatmul.mubr.f32.gmra.mxu0 %v246
    %v2499 = vpop.f32.mrf.mxu0
    %v2500 = vadd.f32 %v2051, %v2499
    %v2501 = vpop.f32.mrf.mxu0
    %v2502 = vadd.f32 %v2053, %v2501
    %2503 = vmatprep.mubr.f32.mxu0 %v255
    %2504 = vmatmul.mubr.f32.gmra.mxu0 %v254
    %v2505 = vpop.f32.mrf.mxu0
    %v2506 = vadd.f32 %v2057, %v2505
    %v2507 = vpop.f32.mrf.mxu0
    %v2508 = vadd.f32 %v2059, %v2507
    %2509 = vmatprep.mubr.f32.mxu0 %v263
    %2510 = vmatmul.mubr.f32.gmra.mxu0 %v262
    %v2511 = vpop.f32.mrf.mxu0
    %v2512 = vadd.f32 %v2063, %v2511
    %v2513 = vpop.f32.mrf.mxu0
    %v2514 = vadd.f32 %v2065, %v2513
    %2515 = vmatprep.mubr.f32.mxu0 %v271
    %2516 = vmatmul.mubr.f32.gmra.mxu0 %v270
    %v2517 = vpop.f32.mrf.mxu0
    %v2518 = vadd.f32 %v2069, %v2517
    %v2519 = vpop.f32.mrf.mxu0
    %v2520 = vadd.f32 %v2071, %v2519
    %2521 = vmatprep.mubr.f32.mxu0 %v279
    %2522 = vmatmul.mubr.f32.gmra.mxu0 %v278
    %v2523 = vpop.f32.mrf.mxu0
    %v2524 = vadd.f32 %v2075, %v2523
    %v2525 = vpop.f32.mrf.mxu0
    %v2526 = vadd.f32 %v2077, %v2525
    %2527 = vmatprep.mubr.f32.mxu0 %v287
    %2528 = vmatmul.mubr.f32.gmra.mxu0 %v286
    %v2529 = vpop.f32.mrf.mxu0
    %v2530 = vadd.f32 %v2081, %v2529
    %v2531 = vpop.f32.mrf.mxu0
    %v2532 = vadd.f32 %v2083, %v2531
    %2533 = vmatprep.mubr.f32.mxu0 %v295
    %2534 = vmatmul.mubr.f32.gmra.mxu0 %v294
    %v2535 = vpop.f32.mrf.mxu0
    %v2536 = vadd.f32 %v2087, %v2535
    %v2537 = vpop.f32.mrf.mxu0
    %v2538 = vadd.f32 %v2089, %v2537
    %2539 = vmatprep.mubr.f32.mxu0 %v303
    %2540 = vmatmul.mubr.f32.gmra.mxu0 %v302
    %v2541 = vpop.f32.mrf.mxu0
    %v2542 = vadd.f32 %v2093, %v2541
    %v2543 = vpop.f32.mrf.mxu0
    %v2544 = vadd.f32 %v2095, %v2543
    %2545 = vmatprep.mubr.f32.mxu0 %v311
    %2546 = vmatmul.mubr.f32.gmra.mxu0 %v310
    %v2547 = vpop.f32.mrf.mxu0
    %v2548 = vadd.f32 %v2099, %v2547
    %v2549 = vpop.f32.mrf.mxu0
    %v2550 = vadd.f32 %v2101, %v2549
    %2551 = vmatprep.mubr.f32.mxu0 %v319
    %2552 = vmatmul.mubr.f32.gmra.mxu0 %v318
    %v2553 = vpop.f32.mrf.mxu0
    %v2554 = vadd.f32 %v2105, %v2553
    %v2555 = vpop.f32.mrf.mxu0
    %v2556 = vadd.f32 %v2107, %v2555
    %2557 = vmatprep.mubr.f32.mxu0 %v327
    %2558 = vmatmul.mubr.f32.gmra.mxu0 %v326
    %v2559 = vpop.f32.mrf.mxu0
    %v2560 = vadd.f32 %v2111, %v2559
    %v2561 = vpop.f32.mrf.mxu0
    %v2562 = vadd.f32 %v2113, %v2561
    %2563 = vmatprep.mubr.f32.mxu0 %v335
    %2564 = vmatmul.mubr.f32.gmra.mxu0 %v334
    %v2565 = vpop.f32.mrf.mxu0
    %v2566 = vadd.f32 %v2117, %v2565
    %v2567 = vpop.f32.mrf.mxu0
    %v2568 = vadd.f32 %v2119, %v2567
    %2569 = vmatprep.mubr.f32.mxu0 %v343
    %2570 = vmatmul.mubr.f32.gmra.mxu0 %v342
    %v2571 = vpop.f32.mrf.mxu0
    %v2572 = vadd.f32 %v2123, %v2571
    %v2573 = vpop.f32.mrf.mxu0
    %v2574 = vadd.f32 %v2125, %v2573
    %2575 = vmatprep.mubr.f32.mxu0 %v351
    %2576 = vmatmul.mubr.f32.gmra.mxu0 %v350
    %v2577 = vpop.f32.mrf.mxu0
    %v2578 = vadd.f32 %v2129, %v2577
    %v2579 = vpop.f32.mrf.mxu0
    %v2580 = vadd.f32 %v2131, %v2579
    %2581 = vmatprep.mubr.f32.mxu0 %v359
    %2582 = vmatmul.mubr.f32.gmra.mxu0 %v358
    %v2583 = vpop.f32.mrf.mxu0
    %v2584 = vadd.f32 %v2135, %v2583
    %v2585 = vpop.f32.mrf.mxu0
    %v2586 = vadd.f32 %v2137, %v2585
    %2587 = vmatprep.mubr.f32.mxu0 %v367
    %2588 = vmatmul.mubr.f32.gmra.mxu0 %v366
    %v2589 = vpop.f32.mrf.mxu0
    %v2590 = vadd.f32 %v2141, %v2589
    %v2591 = vpop.f32.mrf.mxu0
    %v2592 = vadd.f32 %v2143, %v2591
    %2593 = vmatprep.mubr.f32.mxu0 %v375
    %2594 = vmatmul.mubr.f32.gmra.mxu0 %v374
    %v2595 = vpop.f32.mrf.mxu0
    %v2596 = vadd.f32 %v2147, %v2595
    %v2597 = vpop.f32.mrf.mxu0
    %v2598 = vadd.f32 %v2149, %v2597
    %2599 = vmatprep.mubr.f32.mxu0 %v383
    %2600 = vmatmul.mubr.f32.gmra.mxu0 %v382
    %v2601 = vpop.f32.mrf.mxu0
    %v2602 = vadd.f32 %v2153, %v2601
    %v2603 = vpop.f32.mrf.mxu0
    %v2604 = vadd.f32 %v2155, %v2603
    %2605 = vmatprep.mubr.f32.mxu0 %v391
    %2606 = vmatmul.mubr.f32.gmra.mxu0 %v390
    %v2607 = vpop.f32.mrf.mxu0
    %v2608 = vadd.f32 %v2159, %v2607
    %v2609 = vpop.f32.mrf.mxu0
    %v2610 = vadd.f32 %v2161, %v2609
    %2611 = vmatprep.mubr.f32.mxu0 %v399
    %2612 = vmatmul.mubr.f32.gmra.mxu0 %v398
    %v2613 = vpop.f32.mrf.mxu0
    %v2614 = vadd.f32 %v2165, %v2613
    %v2615 = vpop.f32.mrf.mxu0
    %v2616 = vadd.f32 %v2167, %v2615
    %2617 = vmatprep.mubr.f32.mxu0 %v407
    %2618 = vmatmul.mubr.f32.gmra.mxu0 %v406
    %v2619 = vpop.f32.mrf.mxu0
    %v2620 = vadd.f32 %v2171, %v2619
    %v2621 = vpop.f32.mrf.mxu0
    %v2622 = vadd.f32 %v2173, %v2621
    %2623 = vmatprep.mubr.f32.mxu0 %v415
    %2624 = vmatmul.mubr.f32.gmra.mxu0 %v414
    %v2625 = vpop.f32.mrf.mxu0
    %v2626 = vadd.f32 %v2177, %v2625
    %v2627 = vpop.f32.mrf.mxu0
    %v2628 = vadd.f32 %v2179, %v2627
    %2629 = vmatprep.mubr.f32.mxu0 %v423
    %2630 = vmatmul.mubr.f32.gmra.mxu0 %v422
    %v2631 = vpop.f32.mrf.mxu0
    %v2632 = vadd.f32 %v2183, %v2631
    %v2633 = vpop.f32.mrf.mxu0
    %v2634 = vadd.f32 %v2185, %v2633
    %2635 = vmatprep.mubr.f32.mxu0 %v431
    %2636 = vmatmul.mubr.f32.gmra.mxu0 %v430
    %v2637 = vpop.f32.mrf.mxu0
    %v2638 = vadd.f32 %v2189, %v2637
    %v2639 = vpop.f32.mrf.mxu0
    %v2640 = vadd.f32 %v2191, %v2639
    %2641 = vmatprep.mubr.f32.mxu0 %v439
    %2642 = vmatmul.mubr.f32.gmra.mxu0 %v438
    %v2643 = vpop.f32.mrf.mxu0
    %v2644 = vadd.f32 %v2195, %v2643
    %v2645 = vpop.f32.mrf.mxu0
    %v2646 = vadd.f32 %v2197, %v2645
    %2647 = vmatprep.mubr.f32.mxu0 %v447
    %2648 = vmatmul.mubr.f32.gmra.mxu0 %v446
    %v2649 = vpop.f32.mrf.mxu0
    %v2650 = vadd.f32 %v2201, %v2649
    %v2651 = vpop.f32.mrf.mxu0
    %v2652 = vadd.f32 %v2203, %v2651
    %2653 = vmatprep.mubr.f32.mxu0 %v455
    %2654 = vmatmul.mubr.f32.gmra.mxu0 %v454
    %v2655 = vpop.f32.mrf.mxu0
    %v2656 = vadd.f32 %v2207, %v2655
    %v2657 = vpop.f32.mrf.mxu0
    %v2658 = vadd.f32 %v2209, %v2657
    %2659 = vmatprep.mubr.f32.mxu0 %v463
    %2660 = vmatmul.mubr.f32.gmra.mxu0 %v462
    %v2661 = vpop.f32.mrf.mxu0
    %v2662 = vadd.f32 %v2213, %v2661
    %v2663 = vpop.f32.mrf.mxu0
    %v2664 = vadd.f32 %v2215, %v2663
    %2665 = vmatprep.mubr.f32.mxu0 %v471
    %2666 = vmatmul.mubr.f32.gmra.mxu0 %v470
    %v2667 = vpop.f32.mrf.mxu0
    %v2668 = vadd.f32 %v2219, %v2667
    %v2669 = vpop.f32.mrf.mxu0
    %v2670 = vadd.f32 %v2221, %v2669
    %2671 = vmatprep.mubr.f32.mxu0 %v479
    %2672 = vmatmul.mubr.f32.gmra.mxu0 %v478
    %v2673 = vpop.f32.mrf.mxu0
    %v2674 = vadd.f32 %v2225, %v2673
    %v2675 = vpop.f32.mrf.mxu0
    %v2676 = vadd.f32 %v2227, %v2675
    %2677 = vmatprep.mubr.f32.mxu0 %v487
    %2678 = vmatmul.mubr.f32.gmra.mxu0 %v486
    %v2679 = vpop.f32.mrf.mxu0
    %v2680 = vadd.f32 %v2231, %v2679
    %v2681 = vpop.f32.mrf.mxu0
    %v2682 = vadd.f32 %v2233, %v2681
    %2683 = vmatprep.mubr.f32.mxu0 %v495
    %2684 = vmatmul.mubr.f32.gmra.mxu0 %v494
    %v2685 = vpop.f32.mrf.mxu0
    %v2686 = vadd.f32 %v2237, %v2685
    %v2687 = vpop.f32.mrf.mxu0
    %v2688 = vadd.f32 %v2239, %v2687
    %2689 = vmatprep.mubr.f32.mxu0 %v503
    %2690 = vmatmul.mubr.f32.gmra.mxu0 %v502
    %v2691 = vpop.f32.mrf.mxu0
    %v2692 = vadd.f32 %v2243, %v2691
    %v2693 = vpop.f32.mrf.mxu0
    %v2694 = vadd.f32 %v2245, %v2693
    %2695 = vmatprep.mubr.f32.mxu0 %v511
    %2696 = vmatmul.mubr.f32.gmra.mxu0 %v510
    %v2697 = vpop.f32.mrf.mxu0
    %v2698 = vadd.f32 %v2249, %v2697
    %v2699 = vpop.f32.mrf.mxu0
    %v2700 = vadd.f32 %v2251, %v2699
    %2701 = vmatprep.mubr.f32.mxu0 %v519
    %2702 = vmatmul.mubr.f32.gmra.mxu0 %v518
    %v2703 = vpop.f32.mrf.mxu0
    %v2704 = vadd.f32 %v2255, %v2703
    %v2705 = vpop.f32.mrf.mxu0
    %v2706 = vadd.f32 %v2257, %v2705
    %2707 = vmatprep.mubr.f32.mxu0 %v527
    %2708 = vmatmul.mubr.f32.gmra.mxu0 %v526
    %v2709 = vpop.f32.mrf.mxu0
    %v2710 = vadd.f32 %v2261, %v2709
    %v2711 = vpop.f32.mrf.mxu0
    %v2712 = vadd.f32 %v2263, %v2711
    %2713 = vmatprep.mubr.f32.mxu0 %v535
    %2714 = vmatmul.mubr.f32.gmra.mxu0 %v534
    %v2715 = vpop.f32.mrf.mxu0
    %v2716 = vadd.f32 %v2267, %v2715
    %v2717 = vpop.f32.mrf.mxu0
    %v2718 = vadd.f32 %v2269, %v2717
    %2719 = vmatprep.mubr.f32.mxu0 %v543
    %2720 = vmatmul.mubr.f32.gmra.mxu0 %v542
    %v2721 = vpop.f32.mrf.mxu0
    %v2722 = vadd.f32 %v2273, %v2721
    %v2723 = vpop.f32.mrf.mxu0
    %v2724 = vadd.f32 %v2275, %v2723
    %2725 = vmatprep.mubr.f32.mxu0 %v551
    %2726 = vmatmul.mubr.f32.gmra.mxu0 %v550
    %v2727 = vpop.f32.mrf.mxu0
    %v2728 = vadd.f32 %v2279, %v2727
    %v2729 = vpop.f32.mrf.mxu0
    %v2730 = vadd.f32 %v2281, %v2729
    %2731 = vdwg.mxu0
    %2732 = vmatprep.subr.mxu0 0.0
    %2733 = vmatpush1.msra.mxu0 %v599
    %2734 = vmatprep.subr.mxu0 0.0
    %2735 = vmatpush1.msra.mxu0 %v596
    %2736 = vmatprep.subr.mxu0 0.0
    %2737 = vmatpush1.msra.mxu0 %v593
    %2738 = vmatprep.subr.mxu0 0.0
    %2739 = vmatpush1.msra.mxu0 %v590
    %2740 = vmatprep.subr.mxu0 0.0
    %2741 = vmatpush1.msra.mxu0 %v587
    %2742 = vmatprep.subr.mxu0 0.0
    %2743 = vmatpush1.msra.mxu0 %v584
    %2744 = vmatprep.subr.mxu0 0.0
    %2745 = vmatpush1.msra.mxu0 %v581
    %2746 = vmatprep.subr.mxu0 0.0
    %2747 = vmatpush1.msra.mxu0 %v578
    %2748 = vmatprep.subr.mxu0 0.0
    %2749 = vmatpush1.msra.mxu0 %v575
    %2750 = vmatprep.subr.mxu0 0.0
    %2751 = vmatpush1.msra.mxu0 %v572
    %2752 = vmatprep.subr.mxu0 0.0
    %2753 = vmatpush1.msra.mxu0 %v569
    %2754 = vmatprep.subr.mxu0 0.0
    %2755 = vmatpush1.msra.mxu0 %v566
    %2756 = vmatprep.subr.mxu0 0.0
    %2757 = vmatpush1.msra.mxu0 %v563
    %2758 = vmatprep.subr.mxu0 0.0
    %2759 = vmatpush1.msra.mxu0 %v560
    %2760 = vmatprep.subr.mxu0 0.0
    %2761 = vmatpush1.msra.mxu0 %v557
    %2762 = vmatprep.subr.mxu0 0.0
    %2763 = vmatpush1.msra.mxu0 %v554
    %2764 = vmatprep.subr.mxu0 0.0
    %2765 = vmatpush2.msra.mxu0 %v647
    %2766 = vmatprep.subr.mxu0 0.0
    %2767 = vmatpush2.msra.mxu0 %v644
    %2768 = vmatprep.subr.mxu0 0.0
    %2769 = vmatpush2.msra.mxu0 %v641
    %2770 = vmatprep.subr.mxu0 0.0
    %2771 = vmatpush2.msra.mxu0 %v638
    %2772 = vmatprep.subr.mxu0 0.0
    %2773 = vmatpush2.msra.mxu0 %v635
    %2774 = vmatprep.subr.mxu0 0.0
    %2775 = vmatpush2.msra.mxu0 %v632
    %2776 = vmatprep.subr.mxu0 0.0
    %2777 = vmatpush2.msra.mxu0 %v629
    %2778 = vmatprep.subr.mxu0 0.0
    %2779 = vmatpush2.msra.mxu0 %v626
    %2780 = vmatprep.subr.mxu0 0.0
    %2781 = vmatpush2.msra.mxu0 %v623
    %2782 = vmatprep.subr.mxu0 0.0
    %2783 = vmatpush2.msra.mxu0 %v620
    %2784 = vmatprep.subr.mxu0 0.0
    %2785 = vmatpush2.msra.mxu0 %v617
    %2786 = vmatprep.subr.mxu0 0.0
    %2787 = vmatpush2.msra.mxu0 %v614
    %2788 = vmatprep.subr.mxu0 0.0
    %2789 = vmatpush2.msra.mxu0 %v611
    %2790 = vmatprep.subr.mxu0 0.0
    %2791 = vmatpush2.msra.mxu0 %v608
    %2792 = vmatprep.subr.mxu0 0.0
    %2793 = vmatpush2.msra.mxu0 %v605
    %2794 = vmatprep.subr.mxu0 0.0
    %2795 = vmatpush2.msra.mxu0 %v602
    %2796 = vmatprep.mubr.f32.mxu0 %v41
    %2797 = vmatmul.mubr.f32.gmra.mxu0 %v40
    %v2798 = vpop.f32.mrf.mxu0
    %v2799 = vadd.f32 0.0, %v2798
    %v2800 = vpop.f32.mrf.mxu0
    %2801 = vmatprep.mubr.f32.mxu0 %v49
    %2802 = vmatmul.mubr.f32.gmra.mxu0 %v48
    %v2803 = vpop.f32.mrf.mxu0
    %v2804 = vadd.f32 0.0, %v2803
    %v2805 = vpop.f32.mrf.mxu0
    %2806 = vmatprep.mubr.f32.mxu0 %v57
    %2807 = vmatmul.mubr.f32.gmra.mxu0 %v56
    %v2808 = vpop.f32.mrf.mxu0
    %v2809 = vadd.f32 0.0, %v2808
    %v2810 = vpop.f32.mrf.mxu0
    %2811 = vmatprep.mubr.f32.mxu0 %v65
    %2812 = vmatmul.mubr.f32.gmra.mxu0 %v64
    %v2813 = vpop.f32.mrf.mxu0
    %v2814 = vadd.f32 0.0, %v2813
    %v2815 = vpop.f32.mrf.mxu0
    %2816 = vmatprep.mubr.f32.mxu0 %v73
    %2817 = vmatmul.mubr.f32.gmra.mxu0 %v72
    %v2818 = vpop.f32.mrf.mxu0
    %v2819 = vadd.f32 0.0, %v2818
    %v2820 = vpop.f32.mrf.mxu0
    %2821 = vmatprep.mubr.f32.mxu0 %v81
    %2822 = vmatmul.mubr.f32.gmra.mxu0 %v80
    %v2823 = vpop.f32.mrf.mxu0
    %v2824 = vadd.f32 0.0, %v2823
    %v2825 = vpop.f32.mrf.mxu0
    %2826 = vmatprep.mubr.f32.mxu0 %v89
    %2827 = vmatmul.mubr.f32.gmra.mxu0 %v88
    %v2828 = vpop.f32.mrf.mxu0
    %v2829 = vadd.f32 0.0, %v2828
    %v2830 = vpop.f32.mrf.mxu0
    %2831 = vmatprep.mubr.f32.mxu0 %v97
    %2832 = vmatmul.mubr.f32.gmra.mxu0 %v96
    %v2833 = vpop.f32.mrf.mxu0
    %v2834 = vadd.f32 0.0, %v2833
    %v2835 = vpop.f32.mrf.mxu0
    %2836 = vmatprep.mubr.f32.mxu0 %v105
    %2837 = vmatmul.mubr.f32.gmra.mxu0 %v104
    %v2838 = vpop.f32.mrf.mxu0
    %v2839 = vadd.f32 0.0, %v2838
    %v2840 = vpop.f32.mrf.mxu0
    %2841 = vmatprep.mubr.f32.mxu0 %v113
    %2842 = vmatmul.mubr.f32.gmra.mxu0 %v112
    %v2843 = vpop.f32.mrf.mxu0
    %v2844 = vadd.f32 0.0, %v2843
    %v2845 = vpop.f32.mrf.mxu0
    %2846 = vmatprep.mubr.f32.mxu0 %v121
    %2847 = vmatmul.mubr.f32.gmra.mxu0 %v120
    %v2848 = vpop.f32.mrf.mxu0
    %v2849 = vadd.f32 0.0, %v2848
    %v2850 = vpop.f32.mrf.mxu0
    %2851 = vmatprep.mubr.f32.mxu0 %v129
    %2852 = vmatmul.mubr.f32.gmra.mxu0 %v128
    %v2853 = vpop.f32.mrf.mxu0
    %v2854 = vadd.f32 0.0, %v2853
    %v2855 = vpop.f32.mrf.mxu0
    %2856 = vmatprep.mubr.f32.mxu0 %v137
    %2857 = vmatmul.mubr.f32.gmra.mxu0 %v136
    %v2858 = vpop.f32.mrf.mxu0
    %v2859 = vadd.f32 0.0, %v2858
    %v2860 = vpop.f32.mrf.mxu0
    %2861 = vmatprep.mubr.f32.mxu0 %v145
    %2862 = vmatmul.mubr.f32.gmra.mxu0 %v144
    %v2863 = vpop.f32.mrf.mxu0
    %v2864 = vadd.f32 0.0, %v2863
    %v2865 = vpop.f32.mrf.mxu0
    %2866 = vmatprep.mubr.f32.mxu0 %v153
    %2867 = vmatmul.mubr.f32.gmra.mxu0 %v152
    %v2868 = vpop.f32.mrf.mxu0
    %v2869 = vadd.f32 0.0, %v2868
    %v2870 = vpop.f32.mrf.mxu0
    %2871 = vmatprep.mubr.f32.mxu0 %v161
    %2872 = vmatmul.mubr.f32.gmra.mxu0 %v160
    %v2873 = vpop.f32.mrf.mxu0
    %v2874 = vadd.f32 0.0, %v2873
    %v2875 = vpop.f32.mrf.mxu0
    %2876 = vmatprep.mubr.f32.mxu0 %v169
    %2877 = vmatmul.mubr.f32.gmra.mxu0 %v168
    %v2878 = vpop.f32.mrf.mxu0
    %v2879 = vadd.f32 0.0, %v2878
    %v2880 = vpop.f32.mrf.mxu0
    %2881 = vmatprep.mubr.f32.mxu0 %v177
    %2882 = vmatmul.mubr.f32.gmra.mxu0 %v176
    %v2883 = vpop.f32.mrf.mxu0
    %v2884 = vadd.f32 0.0, %v2883
    %v2885 = vpop.f32.mrf.mxu0
    %2886 = vmatprep.mubr.f32.mxu0 %v185
    %2887 = vmatmul.mubr.f32.gmra.mxu0 %v184
    %v2888 = vpop.f32.mrf.mxu0
    %v2889 = vadd.f32 0.0, %v2888
    %v2890 = vpop.f32.mrf.mxu0
    %2891 = vmatprep.mubr.f32.mxu0 %v193
    %2892 = vmatmul.mubr.f32.gmra.mxu0 %v192
    %v2893 = vpop.f32.mrf.mxu0
    %v2894 = vadd.f32 0.0, %v2893
    %v2895 = vpop.f32.mrf.mxu0
    %2896 = vmatprep.mubr.f32.mxu0 %v201
    %2897 = vmatmul.mubr.f32.gmra.mxu0 %v200
    %v2898 = vpop.f32.mrf.mxu0
    %v2899 = vadd.f32 0.0, %v2898
    %v2900 = vpop.f32.mrf.mxu0
    %2901 = vmatprep.mubr.f32.mxu0 %v209
    %2902 = vmatmul.mubr.f32.gmra.mxu0 %v208
    %v2903 = vpop.f32.mrf.mxu0
    %v2904 = vadd.f32 0.0, %v2903
    %v2905 = vpop.f32.mrf.mxu0
    %2906 = vmatprep.mubr.f32.mxu0 %v217
    %2907 = vmatmul.mubr.f32.gmra.mxu0 %v216
    %v2908 = vpop.f32.mrf.mxu0
    %v2909 = vadd.f32 0.0, %v2908
    %v2910 = vpop.f32.mrf.mxu0
    %2911 = vmatprep.mubr.f32.mxu0 %v225
    %2912 = vmatmul.mubr.f32.gmra.mxu0 %v224
    %v2913 = vpop.f32.mrf.mxu0
    %v2914 = vadd.f32 0.0, %v2913
    %v2915 = vpop.f32.mrf.mxu0
    %2916 = vmatprep.mubr.f32.mxu0 %v233
    %2917 = vmatmul.mubr.f32.gmra.mxu0 %v232
    %v2918 = vpop.f32.mrf.mxu0
    %v2919 = vadd.f32 0.0, %v2918
    %v2920 = vpop.f32.mrf.mxu0
    %2921 = vmatprep.mubr.f32.mxu0 %v241
    %2922 = vmatmul.mubr.f32.gmra.mxu0 %v240
    %v2923 = vpop.f32.mrf.mxu0
    %v2924 = vadd.f32 0.0, %v2923
    %v2925 = vpop.f32.mrf.mxu0
    %2926 = vmatprep.mubr.f32.mxu0 %v249
    %2927 = vmatmul.mubr.f32.gmra.mxu0 %v248
    %v2928 = vpop.f32.mrf.mxu0
    %v2929 = vadd.f32 0.0, %v2928
    %v2930 = vpop.f32.mrf.mxu0
    %2931 = vmatprep.mubr.f32.mxu0 %v257
    %2932 = vmatmul.mubr.f32.gmra.mxu0 %v256
    %v2933 = vpop.f32.mrf.mxu0
    %v2934 = vadd.f32 0.0, %v2933
    %v2935 = vpop.f32.mrf.mxu0
    %2936 = vmatprep.mubr.f32.mxu0 %v265
    %2937 = vmatmul.mubr.f32.gmra.mxu0 %v264
    %v2938 = vpop.f32.mrf.mxu0
    %v2939 = vadd.f32 0.0, %v2938
    %v2940 = vpop.f32.mrf.mxu0
    %2941 = vmatprep.mubr.f32.mxu0 %v273
    %2942 = vmatmul.mubr.f32.gmra.mxu0 %v272
    %v2943 = vpop.f32.mrf.mxu0
    %v2944 = vadd.f32 0.0, %v2943
    %v2945 = vpop.f32.mrf.mxu0
    %2946 = vmatprep.mubr.f32.mxu0 %v281
    %2947 = vmatmul.mubr.f32.gmra.mxu0 %v280
    %v2948 = vpop.f32.mrf.mxu0
    %v2949 = vadd.f32 0.0, %v2948
    %v2950 = vpop.f32.mrf.mxu0
    %2951 = vmatprep.mubr.f32.mxu0 %v289
    %2952 = vmatmul.mubr.f32.gmra.mxu0 %v288
    %v2953 = vpop.f32.mrf.mxu0
    %v2954 = vadd.f32 0.0, %v2953
    %v2955 = vpop.f32.mrf.mxu0
    %2956 = vmatprep.mubr.f32.mxu0 %v297
    %2957 = vmatmul.mubr.f32.gmra.mxu0 %v296
    %v2958 = vpop.f32.mrf.mxu0
    %v2959 = vadd.f32 0.0, %v2958
    %v2960 = vpop.f32.mrf.mxu0
    %2961 = vmatprep.mubr.f32.mxu0 %v305
    %2962 = vmatmul.mubr.f32.gmra.mxu0 %v304
    %v2963 = vpop.f32.mrf.mxu0
    %v2964 = vadd.f32 0.0, %v2963
    %v2965 = vpop.f32.mrf.mxu0
    %2966 = vmatprep.mubr.f32.mxu0 %v313
    %2967 = vmatmul.mubr.f32.gmra.mxu0 %v312
    %v2968 = vpop.f32.mrf.mxu0
    %v2969 = vadd.f32 0.0, %v2968
    %v2970 = vpop.f32.mrf.mxu0
    %2971 = vmatprep.mubr.f32.mxu0 %v321
    %2972 = vmatmul.mubr.f32.gmra.mxu0 %v320
    %v2973 = vpop.f32.mrf.mxu0
    %v2974 = vadd.f32 0.0, %v2973
    %v2975 = vpop.f32.mrf.mxu0
    %2976 = vmatprep.mubr.f32.mxu0 %v329
    %2977 = vmatmul.mubr.f32.gmra.mxu0 %v328
    %v2978 = vpop.f32.mrf.mxu0
    %v2979 = vadd.f32 0.0, %v2978
    %v2980 = vpop.f32.mrf.mxu0
    %2981 = vmatprep.mubr.f32.mxu0 %v337
    %2982 = vmatmul.mubr.f32.gmra.mxu0 %v336
    %v2983 = vpop.f32.mrf.mxu0
    %v2984 = vadd.f32 0.0, %v2983
    %v2985 = vpop.f32.mrf.mxu0
    %2986 = vmatprep.mubr.f32.mxu0 %v345
    %2987 = vmatmul.mubr.f32.gmra.mxu0 %v344
    %v2988 = vpop.f32.mrf.mxu0
    %v2989 = vadd.f32 0.0, %v2988
    %v2990 = vpop.f32.mrf.mxu0
    %2991 = vmatprep.mubr.f32.mxu0 %v353
    %2992 = vmatmul.mubr.f32.gmra.mxu0 %v352
    %v2993 = vpop.f32.mrf.mxu0
    %v2994 = vadd.f32 0.0, %v2993
    %v2995 = vpop.f32.mrf.mxu0
    %2996 = vmatprep.mubr.f32.mxu0 %v361
    %2997 = vmatmul.mubr.f32.gmra.mxu0 %v360
    %v2998 = vpop.f32.mrf.mxu0
    %v2999 = vadd.f32 0.0, %v2998
    %v3000 = vpop.f32.mrf.mxu0
    %3001 = vmatprep.mubr.f32.mxu0 %v369
    %3002 = vmatmul.mubr.f32.gmra.mxu0 %v368
    %v3003 = vpop.f32.mrf.mxu0
    %v3004 = vadd.f32 0.0, %v3003
    %v3005 = vpop.f32.mrf.mxu0
    %3006 = vmatprep.mubr.f32.mxu0 %v377
    %3007 = vmatmul.mubr.f32.gmra.mxu0 %v376
    %v3008 = vpop.f32.mrf.mxu0
    %v3009 = vadd.f32 0.0, %v3008
    %v3010 = vpop.f32.mrf.mxu0
    %3011 = vmatprep.mubr.f32.mxu0 %v385
    %3012 = vmatmul.mubr.f32.gmra.mxu0 %v384
    %v3013 = vpop.f32.mrf.mxu0
    %v3014 = vadd.f32 0.0, %v3013
    %v3015 = vpop.f32.mrf.mxu0
    %3016 = vmatprep.mubr.f32.mxu0 %v393
    %3017 = vmatmul.mubr.f32.gmra.mxu0 %v392
    %v3018 = vpop.f32.mrf.mxu0
    %v3019 = vadd.f32 0.0, %v3018
    %v3020 = vpop.f32.mrf.mxu0
    %3021 = vmatprep.mubr.f32.mxu0 %v401
    %3022 = vmatmul.mubr.f32.gmra.mxu0 %v400
    %v3023 = vpop.f32.mrf.mxu0
    %v3024 = vadd.f32 0.0, %v3023
    %v3025 = vpop.f32.mrf.mxu0
    %3026 = vmatprep.mubr.f32.mxu0 %v409
    %3027 = vmatmul.mubr.f32.gmra.mxu0 %v408
    %v3028 = vpop.f32.mrf.mxu0
    %v3029 = vadd.f32 0.0, %v3028
    %v3030 = vpop.f32.mrf.mxu0
    %3031 = vmatprep.mubr.f32.mxu0 %v417
    %3032 = vmatmul.mubr.f32.gmra.mxu0 %v416
    %v3033 = vpop.f32.mrf.mxu0
    %v3034 = vadd.f32 0.0, %v3033
    %v3035 = vpop.f32.mrf.mxu0
    %3036 = vmatprep.mubr.f32.mxu0 %v425
    %3037 = vmatmul.mubr.f32.gmra.mxu0 %v424
    %v3038 = vpop.f32.mrf.mxu0
    %v3039 = vadd.f32 0.0, %v3038
    %v3040 = vpop.f32.mrf.mxu0
    %3041 = vmatprep.mubr.f32.mxu0 %v433
    %3042 = vmatmul.mubr.f32.gmra.mxu0 %v432
    %v3043 = vpop.f32.mrf.mxu0
    %v3044 = vadd.f32 0.0, %v3043
    %v3045 = vpop.f32.mrf.mxu0
    %3046 = vmatprep.mubr.f32.mxu0 %v441
    %3047 = vmatmul.mubr.f32.gmra.mxu0 %v440
    %v3048 = vpop.f32.mrf.mxu0
    %v3049 = vadd.f32 0.0, %v3048
    %v3050 = vpop.f32.mrf.mxu0
    %3051 = vmatprep.mubr.f32.mxu0 %v449
    %3052 = vmatmul.mubr.f32.gmra.mxu0 %v448
    %v3053 = vpop.f32.mrf.mxu0
    %v3054 = vadd.f32 0.0, %v3053
    %v3055 = vpop.f32.mrf.mxu0
    %3056 = vmatprep.mubr.f32.mxu0 %v457
    %3057 = vmatmul.mubr.f32.gmra.mxu0 %v456
    %v3058 = vpop.f32.mrf.mxu0
    %v3059 = vadd.f32 0.0, %v3058
    %v3060 = vpop.f32.mrf.mxu0
    %3061 = vmatprep.mubr.f32.mxu0 %v465
    %3062 = vmatmul.mubr.f32.gmra.mxu0 %v464
    %v3063 = vpop.f32.mrf.mxu0
    %v3064 = vadd.f32 0.0, %v3063
    %v3065 = vpop.f32.mrf.mxu0
    %3066 = vmatprep.mubr.f32.mxu0 %v473
    %3067 = vmatmul.mubr.f32.gmra.mxu0 %v472
    %v3068 = vpop.f32.mrf.mxu0
    %v3069 = vadd.f32 0.0, %v3068
    %v3070 = vpop.f32.mrf.mxu0
    %3071 = vmatprep.mubr.f32.mxu0 %v481
    %3072 = vmatmul.mubr.f32.gmra.mxu0 %v480
    %v3073 = vpop.f32.mrf.mxu0
    %v3074 = vadd.f32 0.0, %v3073
    %v3075 = vpop.f32.mrf.mxu0
    %3076 = vmatprep.mubr.f32.mxu0 %v489
    %3077 = vmatmul.mubr.f32.gmra.mxu0 %v488
    %v3078 = vpop.f32.mrf.mxu0
    %v3079 = vadd.f32 0.0, %v3078
    %v3080 = vpop.f32.mrf.mxu0
    %3081 = vmatprep.mubr.f32.mxu0 %v497
    %3082 = vmatmul.mubr.f32.gmra.mxu0 %v496
    %v3083 = vpop.f32.mrf.mxu0
    %v3084 = vadd.f32 0.0, %v3083
    %v3085 = vpop.f32.mrf.mxu0
    %3086 = vmatprep.mubr.f32.mxu0 %v505
    %3087 = vmatmul.mubr.f32.gmra.mxu0 %v504
    %v3088 = vpop.f32.mrf.mxu0
    %v3089 = vadd.f32 0.0, %v3088
    %v3090 = vpop.f32.mrf.mxu0
    %3091 = vmatprep.mubr.f32.mxu0 %v513
    %3092 = vmatmul.mubr.f32.gmra.mxu0 %v512
    %v3093 = vpop.f32.mrf.mxu0
    %v3094 = vadd.f32 0.0, %v3093
    %v3095 = vpop.f32.mrf.mxu0
    %3096 = vmatprep.mubr.f32.mxu0 %v521
    %3097 = vmatmul.mubr.f32.gmra.mxu0 %v520
    %v3098 = vpop.f32.mrf.mxu0
    %v3099 = vadd.f32 0.0, %v3098
    %v3100 = vpop.f32.mrf.mxu0
    %3101 = vmatprep.mubr.f32.mxu0 %v529
    %3102 = vmatmul.mubr.f32.gmra.mxu0 %v528
    %v3103 = vpop.f32.mrf.mxu0
    %v3104 = vadd.f32 0.0, %v3103
    %v3105 = vpop.f32.mrf.mxu0
    %3106 = vmatprep.mubr.f32.mxu0 %v537
    %3107 = vmatmul.mubr.f32.gmra.mxu0 %v536
    %v3108 = vpop.f32.mrf.mxu0
    %v3109 = vadd.f32 0.0, %v3108
    %v3110 = vpop.f32.mrf.mxu0
    %3111 = vmatprep.mubr.f32.mxu0 %v545
    %3112 = vmatmul.mubr.f32.gmra.mxu0 %v544
    %v3113 = vpop.f32.mrf.mxu0
    %v3114 = vadd.f32 0.0, %v3113
    %v3115 = vpop.f32.mrf.mxu0
    %3116 = vdwg.mxu0
    %3117 = vmatprep.subr.mxu0 0.0
    %3118 = vmatpush1.msra.mxu0 %v695
    %3119 = vmatprep.subr.mxu0 0.0
    %3120 = vmatpush1.msra.mxu0 %v692
    %3121 = vmatprep.subr.mxu0 0.0
    %3122 = vmatpush1.msra.mxu0 %v689
    %3123 = vmatprep.subr.mxu0 0.0
    %3124 = vmatpush1.msra.mxu0 %v686
    %3125 = vmatprep.subr.mxu0 0.0
    %3126 = vmatpush1.msra.mxu0 %v683
    %3127 = vmatprep.subr.mxu0 0.0
    %3128 = vmatpush1.msra.mxu0 %v680
    %3129 = vmatprep.subr.mxu0 0.0
    %3130 = vmatpush1.msra.mxu0 %v677
    %3131 = vmatprep.subr.mxu0 0.0
    %3132 = vmatpush1.msra.mxu0 %v674
    %3133 = vmatprep.subr.mxu0 0.0
    %3134 = vmatpush1.msra.mxu0 %v671
    %3135 = vmatprep.subr.mxu0 0.0
    %3136 = vmatpush1.msra.mxu0 %v668
    %3137 = vmatprep.subr.mxu0 0.0
    %3138 = vmatpush1.msra.mxu0 %v665
    %3139 = vmatprep.subr.mxu0 0.0
    %3140 = vmatpush1.msra.mxu0 %v662
    %3141 = vmatprep.subr.mxu0 0.0
    %3142 = vmatpush1.msra.mxu0 %v659
    %3143 = vmatprep.subr.mxu0 0.0
    %3144 = vmatpush1.msra.mxu0 %v656
    %3145 = vmatprep.subr.mxu0 0.0
    %3146 = vmatpush1.msra.mxu0 %v653
    %3147 = vmatprep.subr.mxu0 0.0
    %3148 = vmatpush1.msra.mxu0 %v650
    %3149 = vmatprep.subr.mxu0 0.0
    %3150 = vmatpush2.msra.mxu0 %v743
    %3151 = vmatprep.subr.mxu0 0.0
    %3152 = vmatpush2.msra.mxu0 %v740
    %3153 = vmatprep.subr.mxu0 0.0
    %3154 = vmatpush2.msra.mxu0 %v737
    %3155 = vmatprep.subr.mxu0 0.0
    %3156 = vmatpush2.msra.mxu0 %v734
    %3157 = vmatprep.subr.mxu0 0.0
    %3158 = vmatpush2.msra.mxu0 %v731
    %3159 = vmatprep.subr.mxu0 0.0
    %3160 = vmatpush2.msra.mxu0 %v728
    %3161 = vmatprep.subr.mxu0 0.0
    %3162 = vmatpush2.msra.mxu0 %v725
    %3163 = vmatprep.subr.mxu0 0.0
    %3164 = vmatpush2.msra.mxu0 %v722
    %3165 = vmatprep.subr.mxu0 0.0
    %3166 = vmatpush2.msra.mxu0 %v719
    %3167 = vmatprep.subr.mxu0 0.0
    %3168 = vmatpush2.msra.mxu0 %v716
    %3169 = vmatprep.subr.mxu0 0.0
    %3170 = vmatpush2.msra.mxu0 %v713
    %3171 = vmatprep.subr.mxu0 0.0
    %3172 = vmatpush2.msra.mxu0 %v710
    %3173 = vmatprep.subr.mxu0 0.0
    %3174 = vmatpush2.msra.mxu0 %v707
    %3175 = vmatprep.subr.mxu0 0.0
    %3176 = vmatpush2.msra.mxu0 %v704
    %3177 = vmatprep.subr.mxu0 0.0
    %3178 = vmatpush2.msra.mxu0 %v701
    %3179 = vmatprep.subr.mxu0 0.0
    %3180 = vmatpush2.msra.mxu0 %v698
    %3181 = vmatprep.mubr.f32.mxu0 %v43
    %3182 = vmatmul.mubr.f32.gmra.mxu0 %v42
    %v3183 = vpop.f32.mrf.mxu0
    %v3184 = vadd.f32 %v2799, %v3183
    %v3185 = vpop.f32.mrf.mxu0
    %3186 = vmatprep.mubr.f32.mxu0 %v51
    %3187 = vmatmul.mubr.f32.gmra.mxu0 %v50
    %v3188 = vpop.f32.mrf.mxu0
    %v3189 = vadd.f32 %v2804, %v3188
    %v3190 = vpop.f32.mrf.mxu0
    %3191 = vmatprep.mubr.f32.mxu0 %v59
    %3192 = vmatmul.mubr.f32.gmra.mxu0 %v58
    %v3193 = vpop.f32.mrf.mxu0
    %v3194 = vadd.f32 %v2809, %v3193
    %v3195 = vpop.f32.mrf.mxu0
    %3196 = vmatprep.mubr.f32.mxu0 %v67
    %3197 = vmatmul.mubr.f32.gmra.mxu0 %v66
    %v3198 = vpop.f32.mrf.mxu0
    %v3199 = vadd.f32 %v2814, %v3198
    %v3200 = vpop.f32.mrf.mxu0
    %3201 = vmatprep.mubr.f32.mxu0 %v75
    %3202 = vmatmul.mubr.f32.gmra.mxu0 %v74
    %v3203 = vpop.f32.mrf.mxu0
    %v3204 = vadd.f32 %v2819, %v3203
    %v3205 = vpop.f32.mrf.mxu0
    %3206 = vmatprep.mubr.f32.mxu0 %v83
    %3207 = vmatmul.mubr.f32.gmra.mxu0 %v82
    %v3208 = vpop.f32.mrf.mxu0
    %v3209 = vadd.f32 %v2824, %v3208
    %v3210 = vpop.f32.mrf.mxu0
    %3211 = vmatprep.mubr.f32.mxu0 %v91
    %3212 = vmatmul.mubr.f32.gmra.mxu0 %v90
    %v3213 = vpop.f32.mrf.mxu0
    %v3214 = vadd.f32 %v2829, %v3213
    %v3215 = vpop.f32.mrf.mxu0
    %3216 = vmatprep.mubr.f32.mxu0 %v99
    %3217 = vmatmul.mubr.f32.gmra.mxu0 %v98
    %v3218 = vpop.f32.mrf.mxu0
    %v3219 = vadd.f32 %v2834, %v3218
    %v3220 = vpop.f32.mrf.mxu0
    %3221 = vmatprep.mubr.f32.mxu0 %v107
    %3222 = vmatmul.mubr.f32.gmra.mxu0 %v106
    %v3223 = vpop.f32.mrf.mxu0
    %v3224 = vadd.f32 %v2839, %v3223
    %v3225 = vpop.f32.mrf.mxu0
    %3226 = vmatprep.mubr.f32.mxu0 %v115
    %3227 = vmatmul.mubr.f32.gmra.mxu0 %v114
    %v3228 = vpop.f32.mrf.mxu0
    %v3229 = vadd.f32 %v2844, %v3228
    %v3230 = vpop.f32.mrf.mxu0
    %3231 = vmatprep.mubr.f32.mxu0 %v123
    %3232 = vmatmul.mubr.f32.gmra.mxu0 %v122
    %v3233 = vpop.f32.mrf.mxu0
    %v3234 = vadd.f32 %v2849, %v3233
    %v3235 = vpop.f32.mrf.mxu0
    %3236 = vmatprep.mubr.f32.mxu0 %v131
    %3237 = vmatmul.mubr.f32.gmra.mxu0 %v130
    %v3238 = vpop.f32.mrf.mxu0
    %v3239 = vadd.f32 %v2854, %v3238
    %v3240 = vpop.f32.mrf.mxu0
    %3241 = vmatprep.mubr.f32.mxu0 %v139
    %3242 = vmatmul.mubr.f32.gmra.mxu0 %v138
    %v3243 = vpop.f32.mrf.mxu0
    %v3244 = vadd.f32 %v2859, %v3243
    %v3245 = vpop.f32.mrf.mxu0
    %3246 = vmatprep.mubr.f32.mxu0 %v147
    %3247 = vmatmul.mubr.f32.gmra.mxu0 %v146
    %v3248 = vpop.f32.mrf.mxu0
    %v3249 = vadd.f32 %v2864, %v3248
    %v3250 = vpop.f32.mrf.mxu0
    %3251 = vmatprep.mubr.f32.mxu0 %v155
    %3252 = vmatmul.mubr.f32.gmra.mxu0 %v154
    %v3253 = vpop.f32.mrf.mxu0
    %v3254 = vadd.f32 %v2869, %v3253
    %v3255 = vpop.f32.mrf.mxu0
    %3256 = vmatprep.mubr.f32.mxu0 %v163
    %3257 = vmatmul.mubr.f32.gmra.mxu0 %v162
    %v3258 = vpop.f32.mrf.mxu0
    %v3259 = vadd.f32 %v2874, %v3258
    %v3260 = vpop.f32.mrf.mxu0
    %3261 = vmatprep.mubr.f32.mxu0 %v171
    %3262 = vmatmul.mubr.f32.gmra.mxu0 %v170
    %v3263 = vpop.f32.mrf.mxu0
    %v3264 = vadd.f32 %v2879, %v3263
    %v3265 = vpop.f32.mrf.mxu0
    %3266 = vmatprep.mubr.f32.mxu0 %v179
    %3267 = vmatmul.mubr.f32.gmra.mxu0 %v178
    %v3268 = vpop.f32.mrf.mxu0
    %v3269 = vadd.f32 %v2884, %v3268
    %v3270 = vpop.f32.mrf.mxu0
    %3271 = vmatprep.mubr.f32.mxu0 %v187
    %3272 = vmatmul.mubr.f32.gmra.mxu0 %v186
    %v3273 = vpop.f32.mrf.mxu0
    %v3274 = vadd.f32 %v2889, %v3273
    %v3275 = vpop.f32.mrf.mxu0
    %3276 = vmatprep.mubr.f32.mxu0 %v195
    %3277 = vmatmul.mubr.f32.gmra.mxu0 %v194
    %v3278 = vpop.f32.mrf.mxu0
    %v3279 = vadd.f32 %v2894, %v3278
    %v3280 = vpop.f32.mrf.mxu0
    %3281 = vmatprep.mubr.f32.mxu0 %v203
    %3282 = vmatmul.mubr.f32.gmra.mxu0 %v202
    %v3283 = vpop.f32.mrf.mxu0
    %v3284 = vadd.f32 %v2899, %v3283
    %v3285 = vpop.f32.mrf.mxu0
    %3286 = vmatprep.mubr.f32.mxu0 %v211
    %3287 = vmatmul.mubr.f32.gmra.mxu0 %v210
    %v3288 = vpop.f32.mrf.mxu0
    %v3289 = vadd.f32 %v2904, %v3288
    %v3290 = vpop.f32.mrf.mxu0
    %3291 = vmatprep.mubr.f32.mxu0 %v219
    %3292 = vmatmul.mubr.f32.gmra.mxu0 %v218
    %v3293 = vpop.f32.mrf.mxu0
    %v3294 = vadd.f32 %v2909, %v3293
    %v3295 = vpop.f32.mrf.mxu0
    %3296 = vmatprep.mubr.f32.mxu0 %v227
    %3297 = vmatmul.mubr.f32.gmra.mxu0 %v226
    %v3298 = vpop.f32.mrf.mxu0
    %v3299 = vadd.f32 %v2914, %v3298
    %v3300 = vpop.f32.mrf.mxu0
    %3301 = vmatprep.mubr.f32.mxu0 %v235
    %3302 = vmatmul.mubr.f32.gmra.mxu0 %v234
    %v3303 = vpop.f32.mrf.mxu0
    %v3304 = vadd.f32 %v2919, %v3303
    %v3305 = vpop.f32.mrf.mxu0
    %3306 = vmatprep.mubr.f32.mxu0 %v243
    %3307 = vmatmul.mubr.f32.gmra.mxu0 %v242
    %v3308 = vpop.f32.mrf.mxu0
    %v3309 = vadd.f32 %v2924, %v3308
    %v3310 = vpop.f32.mrf.mxu0
    %3311 = vmatprep.mubr.f32.mxu0 %v251
    %3312 = vmatmul.mubr.f32.gmra.mxu0 %v250
    %v3313 = vpop.f32.mrf.mxu0
    %v3314 = vadd.f32 %v2929, %v3313
    %v3315 = vpop.f32.mrf.mxu0
    %3316 = vmatprep.mubr.f32.mxu0 %v259
    %3317 = vmatmul.mubr.f32.gmra.mxu0 %v258
    %v3318 = vpop.f32.mrf.mxu0
    %v3319 = vadd.f32 %v2934, %v3318
    %v3320 = vpop.f32.mrf.mxu0
    %3321 = vmatprep.mubr.f32.mxu0 %v267
    %3322 = vmatmul.mubr.f32.gmra.mxu0 %v266
    %v3323 = vpop.f32.mrf.mxu0
    %v3324 = vadd.f32 %v2939, %v3323
    %v3325 = vpop.f32.mrf.mxu0
    %3326 = vmatprep.mubr.f32.mxu0 %v275
    %3327 = vmatmul.mubr.f32.gmra.mxu0 %v274
    %v3328 = vpop.f32.mrf.mxu0
    %v3329 = vadd.f32 %v2944, %v3328
    %v3330 = vpop.f32.mrf.mxu0
    %3331 = vmatprep.mubr.f32.mxu0 %v283
    %3332 = vmatmul.mubr.f32.gmra.mxu0 %v282
    %v3333 = vpop.f32.mrf.mxu0
    %v3334 = vadd.f32 %v2949, %v3333
    %v3335 = vpop.f32.mrf.mxu0
    %3336 = vmatprep.mubr.f32.mxu0 %v291
    %3337 = vmatmul.mubr.f32.gmra.mxu0 %v290
    %v3338 = vpop.f32.mrf.mxu0
    %v3339 = vadd.f32 %v2954, %v3338
    %v3340 = vpop.f32.mrf.mxu0
    %3341 = vmatprep.mubr.f32.mxu0 %v299
    %3342 = vmatmul.mubr.f32.gmra.mxu0 %v298
    %v3343 = vpop.f32.mrf.mxu0
    %v3344 = vadd.f32 %v2959, %v3343
    %v3345 = vpop.f32.mrf.mxu0
    %3346 = vmatprep.mubr.f32.mxu0 %v307
    %3347 = vmatmul.mubr.f32.gmra.mxu0 %v306
    %v3348 = vpop.f32.mrf.mxu0
    %v3349 = vadd.f32 %v2964, %v3348
    %v3350 = vpop.f32.mrf.mxu0
    %3351 = vmatprep.mubr.f32.mxu0 %v315
    %3352 = vmatmul.mubr.f32.gmra.mxu0 %v314
    %v3353 = vpop.f32.mrf.mxu0
    %v3354 = vadd.f32 %v2969, %v3353
    %v3355 = vpop.f32.mrf.mxu0
    %3356 = vmatprep.mubr.f32.mxu0 %v323
    %3357 = vmatmul.mubr.f32.gmra.mxu0 %v322
    %v3358 = vpop.f32.mrf.mxu0
    %v3359 = vadd.f32 %v2974, %v3358
    %v3360 = vpop.f32.mrf.mxu0
    %3361 = vmatprep.mubr.f32.mxu0 %v331
    %3362 = vmatmul.mubr.f32.gmra.mxu0 %v330
    %v3363 = vpop.f32.mrf.mxu0
    %v3364 = vadd.f32 %v2979, %v3363
    %v3365 = vpop.f32.mrf.mxu0
    %3366 = vmatprep.mubr.f32.mxu0 %v339
    %3367 = vmatmul.mubr.f32.gmra.mxu0 %v338
    %v3368 = vpop.f32.mrf.mxu0
    %v3369 = vadd.f32 %v2984, %v3368
    %v3370 = vpop.f32.mrf.mxu0
    %3371 = vmatprep.mubr.f32.mxu0 %v347
    %3372 = vmatmul.mubr.f32.gmra.mxu0 %v346
    %v3373 = vpop.f32.mrf.mxu0
    %v3374 = vadd.f32 %v2989, %v3373
    %v3375 = vpop.f32.mrf.mxu0
    %3376 = vmatprep.mubr.f32.mxu0 %v355
    %3377 = vmatmul.mubr.f32.gmra.mxu0 %v354
    %v3378 = vpop.f32.mrf.mxu0
    %v3379 = vadd.f32 %v2994, %v3378
    %v3380 = vpop.f32.mrf.mxu0
    %3381 = vmatprep.mubr.f32.mxu0 %v363
    %3382 = vmatmul.mubr.f32.gmra.mxu0 %v362
    %v3383 = vpop.f32.mrf.mxu0
    %v3384 = vadd.f32 %v2999, %v3383
    %v3385 = vpop.f32.mrf.mxu0
    %3386 = vmatprep.mubr.f32.mxu0 %v371
    %3387 = vmatmul.mubr.f32.gmra.mxu0 %v370
    %v3388 = vpop.f32.mrf.mxu0
    %v3389 = vadd.f32 %v3004, %v3388
    %v3390 = vpop.f32.mrf.mxu0
    %3391 = vmatprep.mubr.f32.mxu0 %v379
    %3392 = vmatmul.mubr.f32.gmra.mxu0 %v378
    %v3393 = vpop.f32.mrf.mxu0
    %v3394 = vadd.f32 %v3009, %v3393
    %v3395 = vpop.f32.mrf.mxu0
    %3396 = vmatprep.mubr.f32.mxu0 %v387
    %3397 = vmatmul.mubr.f32.gmra.mxu0 %v386
    %v3398 = vpop.f32.mrf.mxu0
    %v3399 = vadd.f32 %v3014, %v3398
    %v3400 = vpop.f32.mrf.mxu0
    %3401 = vmatprep.mubr.f32.mxu0 %v395
    %3402 = vmatmul.mubr.f32.gmra.mxu0 %v394
    %v3403 = vpop.f32.mrf.mxu0
    %v3404 = vadd.f32 %v3019, %v3403
    %v3405 = vpop.f32.mrf.mxu0
    %3406 = vmatprep.mubr.f32.mxu0 %v403
    %3407 = vmatmul.mubr.f32.gmra.mxu0 %v402
    %v3408 = vpop.f32.mrf.mxu0
    %v3409 = vadd.f32 %v3024, %v3408
    %v3410 = vpop.f32.mrf.mxu0
    %3411 = vmatprep.mubr.f32.mxu0 %v411
    %3412 = vmatmul.mubr.f32.gmra.mxu0 %v410
    %v3413 = vpop.f32.mrf.mxu0
    %v3414 = vadd.f32 %v3029, %v3413
    %v3415 = vpop.f32.mrf.mxu0
    %3416 = vmatprep.mubr.f32.mxu0 %v419
    %3417 = vmatmul.mubr.f32.gmra.mxu0 %v418
    %v3418 = vpop.f32.mrf.mxu0
    %v3419 = vadd.f32 %v3034, %v3418
    %v3420 = vpop.f32.mrf.mxu0
    %3421 = vmatprep.mubr.f32.mxu0 %v427
    %3422 = vmatmul.mubr.f32.gmra.mxu0 %v426
    %v3423 = vpop.f32.mrf.mxu0
    %v3424 = vadd.f32 %v3039, %v3423
    %v3425 = vpop.f32.mrf.mxu0
    %3426 = vmatprep.mubr.f32.mxu0 %v435
    %3427 = vmatmul.mubr.f32.gmra.mxu0 %v434
    %v3428 = vpop.f32.mrf.mxu0
    %v3429 = vadd.f32 %v3044, %v3428
    %v3430 = vpop.f32.mrf.mxu0
    %3431 = vmatprep.mubr.f32.mxu0 %v443
    %3432 = vmatmul.mubr.f32.gmra.mxu0 %v442
    %v3433 = vpop.f32.mrf.mxu0
    %v3434 = vadd.f32 %v3049, %v3433
    %v3435 = vpop.f32.mrf.mxu0
    %3436 = vmatprep.mubr.f32.mxu0 %v451
    %3437 = vmatmul.mubr.f32.gmra.mxu0 %v450
    %v3438 = vpop.f32.mrf.mxu0
    %v3439 = vadd.f32 %v3054, %v3438
    %v3440 = vpop.f32.mrf.mxu0
    %3441 = vmatprep.mubr.f32.mxu0 %v459
    %3442 = vmatmul.mubr.f32.gmra.mxu0 %v458
    %v3443 = vpop.f32.mrf.mxu0
    %v3444 = vadd.f32 %v3059, %v3443
    %v3445 = vpop.f32.mrf.mxu0
    %3446 = vmatprep.mubr.f32.mxu0 %v467
    %3447 = vmatmul.mubr.f32.gmra.mxu0 %v466
    %v3448 = vpop.f32.mrf.mxu0
    %v3449 = vadd.f32 %v3064, %v3448
    %v3450 = vpop.f32.mrf.mxu0
    %3451 = vmatprep.mubr.f32.mxu0 %v475
    %3452 = vmatmul.mubr.f32.gmra.mxu0 %v474
    %v3453 = vpop.f32.mrf.mxu0
    %v3454 = vadd.f32 %v3069, %v3453
    %v3455 = vpop.f32.mrf.mxu0
    %3456 = vmatprep.mubr.f32.mxu0 %v483
    %3457 = vmatmul.mubr.f32.gmra.mxu0 %v482
    %v3458 = vpop.f32.mrf.mxu0
    %v3459 = vadd.f32 %v3074, %v3458
    %v3460 = vpop.f32.mrf.mxu0
    %3461 = vmatprep.mubr.f32.mxu0 %v491
    %3462 = vmatmul.mubr.f32.gmra.mxu0 %v490
    %v3463 = vpop.f32.mrf.mxu0
    %v3464 = vadd.f32 %v3079, %v3463
    %v3465 = vpop.f32.mrf.mxu0
    %3466 = vmatprep.mubr.f32.mxu0 %v499
    %3467 = vmatmul.mubr.f32.gmra.mxu0 %v498
    %v3468 = vpop.f32.mrf.mxu0
    %v3469 = vadd.f32 %v3084, %v3468
    %v3470 = vpop.f32.mrf.mxu0
    %3471 = vmatprep.mubr.f32.mxu0 %v507
    %3472 = vmatmul.mubr.f32.gmra.mxu0 %v506
    %v3473 = vpop.f32.mrf.mxu0
    %v3474 = vadd.f32 %v3089, %v3473
    %v3475 = vpop.f32.mrf.mxu0
    %3476 = vmatprep.mubr.f32.mxu0 %v515
    %3477 = vmatmul.mubr.f32.gmra.mxu0 %v514
    %v3478 = vpop.f32.mrf.mxu0
    %v3479 = vadd.f32 %v3094, %v3478
    %v3480 = vpop.f32.mrf.mxu0
    %3481 = vmatprep.mubr.f32.mxu0 %v523
    %3482 = vmatmul.mubr.f32.gmra.mxu0 %v522
    %v3483 = vpop.f32.mrf.mxu0
    %v3484 = vadd.f32 %v3099, %v3483
    %v3485 = vpop.f32.mrf.mxu0
    %3486 = vmatprep.mubr.f32.mxu0 %v531
    %3487 = vmatmul.mubr.f32.gmra.mxu0 %v530
    %v3488 = vpop.f32.mrf.mxu0
    %v3489 = vadd.f32 %v3104, %v3488
    %v3490 = vpop.f32.mrf.mxu0
    %3491 = vmatprep.mubr.f32.mxu0 %v539
    %3492 = vmatmul.mubr.f32.gmra.mxu0 %v538
    %v3493 = vpop.f32.mrf.mxu0
    %v3494 = vadd.f32 %v3109, %v3493
    %v3495 = vpop.f32.mrf.mxu0
    %3496 = vmatprep.mubr.f32.mxu0 %v547
    %3497 = vmatmul.mubr.f32.gmra.mxu0 %v546
    %v3498 = vpop.f32.mrf.mxu0
    %v3499 = vadd.f32 %v3114, %v3498
    %v3500 = vpop.f32.mrf.mxu0
    %3501 = vdwg.mxu0
    %3502 = vmatprep.subr.mxu0 0.0
    %3503 = vmatpush1.msra.mxu0 %v791
    %3504 = vmatprep.subr.mxu0 0.0
    %3505 = vmatpush1.msra.mxu0 %v788
    %3506 = vmatprep.subr.mxu0 0.0
    %3507 = vmatpush1.msra.mxu0 %v785
    %3508 = vmatprep.subr.mxu0 0.0
    %3509 = vmatpush1.msra.mxu0 %v782
    %3510 = vmatprep.subr.mxu0 0.0
    %3511 = vmatpush1.msra.mxu0 %v779
    %3512 = vmatprep.subr.mxu0 0.0
    %3513 = vmatpush1.msra.mxu0 %v776
    %3514 = vmatprep.subr.mxu0 0.0
    %3515 = vmatpush1.msra.mxu0 %v773
    %3516 = vmatprep.subr.mxu0 0.0
    %3517 = vmatpush1.msra.mxu0 %v770
    %3518 = vmatprep.subr.mxu0 0.0
    %3519 = vmatpush1.msra.mxu0 %v767
    %3520 = vmatprep.subr.mxu0 0.0
    %3521 = vmatpush1.msra.mxu0 %v764
    %3522 = vmatprep.subr.mxu0 0.0
    %3523 = vmatpush1.msra.mxu0 %v761
    %3524 = vmatprep.subr.mxu0 0.0
    %3525 = vmatpush1.msra.mxu0 %v758
    %3526 = vmatprep.subr.mxu0 0.0
    %3527 = vmatpush1.msra.mxu0 %v755
    %3528 = vmatprep.subr.mxu0 0.0
    %3529 = vmatpush1.msra.mxu0 %v752
    %3530 = vmatprep.subr.mxu0 0.0
    %3531 = vmatpush1.msra.mxu0 %v749
    %3532 = vmatprep.subr.mxu0 0.0
    %3533 = vmatpush1.msra.mxu0 %v746
    %3534 = vmatprep.subr.mxu0 0.0
    %3535 = vmatpush2.msra.mxu0 %v839
    %3536 = vmatprep.subr.mxu0 0.0
    %3537 = vmatpush2.msra.mxu0 %v836
    %3538 = vmatprep.subr.mxu0 0.0
    %3539 = vmatpush2.msra.mxu0 %v833
    %3540 = vmatprep.subr.mxu0 0.0
    %3541 = vmatpush2.msra.mxu0 %v830
    %3542 = vmatprep.subr.mxu0 0.0
    %3543 = vmatpush2.msra.mxu0 %v827
    %3544 = vmatprep.subr.mxu0 0.0
    %3545 = vmatpush2.msra.mxu0 %v824
    %3546 = vmatprep.subr.mxu0 0.0
    %3547 = vmatpush2.msra.mxu0 %v821
    %3548 = vmatprep.subr.mxu0 0.0
    %3549 = vmatpush2.msra.mxu0 %v818
    %3550 = vmatprep.subr.mxu0 0.0
    %3551 = vmatpush2.msra.mxu0 %v815
    %3552 = vmatprep.subr.mxu0 0.0
    %3553 = vmatpush2.msra.mxu0 %v812
    %3554 = vmatprep.subr.mxu0 0.0
    %3555 = vmatpush2.msra.mxu0 %v809
    %3556 = vmatprep.subr.mxu0 0.0
    %3557 = vmatpush2.msra.mxu0 %v806
    %3558 = vmatprep.subr.mxu0 0.0
    %3559 = vmatpush2.msra.mxu0 %v803
    %3560 = vmatprep.subr.mxu0 0.0
    %3561 = vmatpush2.msra.mxu0 %v800
    %3562 = vmatprep.subr.mxu0 0.0
    %3563 = vmatpush2.msra.mxu0 %v797
    %3564 = vmatprep.subr.mxu0 0.0
    %3565 = vmatpush2.msra.mxu0 %v794
    %3566 = vmatprep.mubr.f32.mxu0 %v45
    %3567 = vmatmul.mubr.f32.gmra.mxu0 %v44
    %v3568 = vpop.f32.mrf.mxu0
    %v3569 = vadd.f32 %v3184, %v3568
    %v3570 = vpop.f32.mrf.mxu0
    %3571 = vmatprep.mubr.f32.mxu0 %v53
    %3572 = vmatmul.mubr.f32.gmra.mxu0 %v52
    %v3573 = vpop.f32.mrf.mxu0
    %v3574 = vadd.f32 %v3189, %v3573
    %v3575 = vpop.f32.mrf.mxu0
    %3576 = vmatprep.mubr.f32.mxu0 %v61
    %3577 = vmatmul.mubr.f32.gmra.mxu0 %v60
    %v3578 = vpop.f32.mrf.mxu0
    %v3579 = vadd.f32 %v3194, %v3578
    %v3580 = vpop.f32.mrf.mxu0
    %3581 = vmatprep.mubr.f32.mxu0 %v69
    %3582 = vmatmul.mubr.f32.gmra.mxu0 %v68
    %v3583 = vpop.f32.mrf.mxu0
    %v3584 = vadd.f32 %v3199, %v3583
    %v3585 = vpop.f32.mrf.mxu0
    %3586 = vmatprep.mubr.f32.mxu0 %v77
    %3587 = vmatmul.mubr.f32.gmra.mxu0 %v76
    %v3588 = vpop.f32.mrf.mxu0
    %v3589 = vadd.f32 %v3204, %v3588
    %v3590 = vpop.f32.mrf.mxu0
    %3591 = vmatprep.mubr.f32.mxu0 %v85
    %3592 = vmatmul.mubr.f32.gmra.mxu0 %v84
    %v3593 = vpop.f32.mrf.mxu0
    %v3594 = vadd.f32 %v3209, %v3593
    %v3595 = vpop.f32.mrf.mxu0
    %3596 = vmatprep.mubr.f32.mxu0 %v93
    %3597 = vmatmul.mubr.f32.gmra.mxu0 %v92
    %v3598 = vpop.f32.mrf.mxu0
    %v3599 = vadd.f32 %v3214, %v3598
    %v3600 = vpop.f32.mrf.mxu0
    %3601 = vmatprep.mubr.f32.mxu0 %v101
    %3602 = vmatmul.mubr.f32.gmra.mxu0 %v100
    %v3603 = vpop.f32.mrf.mxu0
    %v3604 = vadd.f32 %v3219, %v3603
    %v3605 = vpop.f32.mrf.mxu0
    %3606 = vmatprep.mubr.f32.mxu0 %v109
    %3607 = vmatmul.mubr.f32.gmra.mxu0 %v108
    %v3608 = vpop.f32.mrf.mxu0
    %v3609 = vadd.f32 %v3224, %v3608
    %v3610 = vpop.f32.mrf.mxu0
    %3611 = vmatprep.mubr.f32.mxu0 %v117
    %3612 = vmatmul.mubr.f32.gmra.mxu0 %v116
    %v3613 = vpop.f32.mrf.mxu0
    %v3614 = vadd.f32 %v3229, %v3613
    %v3615 = vpop.f32.mrf.mxu0
    %3616 = vmatprep.mubr.f32.mxu0 %v125
    %3617 = vmatmul.mubr.f32.gmra.mxu0 %v124
    %v3618 = vpop.f32.mrf.mxu0
    %v3619 = vadd.f32 %v3234, %v3618
    %v3620 = vpop.f32.mrf.mxu0
    %3621 = vmatprep.mubr.f32.mxu0 %v133
    %3622 = vmatmul.mubr.f32.gmra.mxu0 %v132
    %v3623 = vpop.f32.mrf.mxu0
    %v3624 = vadd.f32 %v3239, %v3623
    %v3625 = vpop.f32.mrf.mxu0
    %3626 = vmatprep.mubr.f32.mxu0 %v141
    %3627 = vmatmul.mubr.f32.gmra.mxu0 %v140
    %v3628 = vpop.f32.mrf.mxu0
    %v3629 = vadd.f32 %v3244, %v3628
    %v3630 = vpop.f32.mrf.mxu0
    %3631 = vmatprep.mubr.f32.mxu0 %v149
    %3632 = vmatmul.mubr.f32.gmra.mxu0 %v148
    %v3633 = vpop.f32.mrf.mxu0
    %v3634 = vadd.f32 %v3249, %v3633
    %v3635 = vpop.f32.mrf.mxu0
    %3636 = vmatprep.mubr.f32.mxu0 %v157
    %3637 = vmatmul.mubr.f32.gmra.mxu0 %v156
    %v3638 = vpop.f32.mrf.mxu0
    %v3639 = vadd.f32 %v3254, %v3638
    %v3640 = vpop.f32.mrf.mxu0
    %3641 = vmatprep.mubr.f32.mxu0 %v165
    %3642 = vmatmul.mubr.f32.gmra.mxu0 %v164
    %v3643 = vpop.f32.mrf.mxu0
    %v3644 = vadd.f32 %v3259, %v3643
    %v3645 = vpop.f32.mrf.mxu0
    %3646 = vmatprep.mubr.f32.mxu0 %v173
    %3647 = vmatmul.mubr.f32.gmra.mxu0 %v172
    %v3648 = vpop.f32.mrf.mxu0
    %v3649 = vadd.f32 %v3264, %v3648
    %v3650 = vpop.f32.mrf.mxu0
    %3651 = vmatprep.mubr.f32.mxu0 %v181
    %3652 = vmatmul.mubr.f32.gmra.mxu0 %v180
    %v3653 = vpop.f32.mrf.mxu0
    %v3654 = vadd.f32 %v3269, %v3653
    %v3655 = vpop.f32.mrf.mxu0
    %3656 = vmatprep.mubr.f32.mxu0 %v189
    %3657 = vmatmul.mubr.f32.gmra.mxu0 %v188
    %v3658 = vpop.f32.mrf.mxu0
    %v3659 = vadd.f32 %v3274, %v3658
    %v3660 = vpop.f32.mrf.mxu0
    %3661 = vmatprep.mubr.f32.mxu0 %v197
    %3662 = vmatmul.mubr.f32.gmra.mxu0 %v196
    %v3663 = vpop.f32.mrf.mxu0
    %v3664 = vadd.f32 %v3279, %v3663
    %v3665 = vpop.f32.mrf.mxu0
    %3666 = vmatprep.mubr.f32.mxu0 %v205
    %3667 = vmatmul.mubr.f32.gmra.mxu0 %v204
    %v3668 = vpop.f32.mrf.mxu0
    %v3669 = vadd.f32 %v3284, %v3668
    %v3670 = vpop.f32.mrf.mxu0
    %3671 = vmatprep.mubr.f32.mxu0 %v213
    %3672 = vmatmul.mubr.f32.gmra.mxu0 %v212
    %v3673 = vpop.f32.mrf.mxu0
    %v3674 = vadd.f32 %v3289, %v3673
    %v3675 = vpop.f32.mrf.mxu0
    %3676 = vmatprep.mubr.f32.mxu0 %v221
    %3677 = vmatmul.mubr.f32.gmra.mxu0 %v220
    %v3678 = vpop.f32.mrf.mxu0
    %v3679 = vadd.f32 %v3294, %v3678
    %v3680 = vpop.f32.mrf.mxu0
    %3681 = vmatprep.mubr.f32.mxu0 %v229
    %3682 = vmatmul.mubr.f32.gmra.mxu0 %v228
    %v3683 = vpop.f32.mrf.mxu0
    %v3684 = vadd.f32 %v3299, %v3683
    %v3685 = vpop.f32.mrf.mxu0
    %3686 = vmatprep.mubr.f32.mxu0 %v237
    %3687 = vmatmul.mubr.f32.gmra.mxu0 %v236
    %v3688 = vpop.f32.mrf.mxu0
    %v3689 = vadd.f32 %v3304, %v3688
    %v3690 = vpop.f32.mrf.mxu0
    %3691 = vmatprep.mubr.f32.mxu0 %v245
    %3692 = vmatmul.mubr.f32.gmra.mxu0 %v244
    %v3693 = vpop.f32.mrf.mxu0
    %v3694 = vadd.f32 %v3309, %v3693
    %v3695 = vpop.f32.mrf.mxu0
    %3696 = vmatprep.mubr.f32.mxu0 %v253
    %3697 = vmatmul.mubr.f32.gmra.mxu0 %v252
    %v3698 = vpop.f32.mrf.mxu0
    %v3699 = vadd.f32 %v3314, %v3698
    %v3700 = vpop.f32.mrf.mxu0
    %3701 = vmatprep.mubr.f32.mxu0 %v261
    %3702 = vmatmul.mubr.f32.gmra.mxu0 %v260
    %v3703 = vpop.f32.mrf.mxu0
    %v3704 = vadd.f32 %v3319, %v3703
    %v3705 = vpop.f32.mrf.mxu0
    %3706 = vmatprep.mubr.f32.mxu0 %v269
    %3707 = vmatmul.mubr.f32.gmra.mxu0 %v268
    %v3708 = vpop.f32.mrf.mxu0
    %v3709 = vadd.f32 %v3324, %v3708
    %v3710 = vpop.f32.mrf.mxu0
    %3711 = vmatprep.mubr.f32.mxu0 %v277
    %3712 = vmatmul.mubr.f32.gmra.mxu0 %v276
    %v3713 = vpop.f32.mrf.mxu0
    %v3714 = vadd.f32 %v3329, %v3713
    %v3715 = vpop.f32.mrf.mxu0
    %3716 = vmatprep.mubr.f32.mxu0 %v285
    %3717 = vmatmul.mubr.f32.gmra.mxu0 %v284
    %v3718 = vpop.f32.mrf.mxu0
    %v3719 = vadd.f32 %v3334, %v3718
    %v3720 = vpop.f32.mrf.mxu0
    %3721 = vmatprep.mubr.f32.mxu0 %v293
    %3722 = vmatmul.mubr.f32.gmra.mxu0 %v292
    %v3723 = vpop.f32.mrf.mxu0
    %v3724 = vadd.f32 %v3339, %v3723
    %v3725 = vpop.f32.mrf.mxu0
    %3726 = vmatprep.mubr.f32.mxu0 %v301
    %3727 = vmatmul.mubr.f32.gmra.mxu0 %v300
    %v3728 = vpop.f32.mrf.mxu0
    %v3729 = vadd.f32 %v3344, %v3728
    %v3730 = vpop.f32.mrf.mxu0
    %3731 = vmatprep.mubr.f32.mxu0 %v309
    %3732 = vmatmul.mubr.f32.gmra.mxu0 %v308
    %v3733 = vpop.f32.mrf.mxu0
    %v3734 = vadd.f32 %v3349, %v3733
    %v3735 = vpop.f32.mrf.mxu0
    %3736 = vmatprep.mubr.f32.mxu0 %v317
    %3737 = vmatmul.mubr.f32.gmra.mxu0 %v316
    %v3738 = vpop.f32.mrf.mxu0
    %v3739 = vadd.f32 %v3354, %v3738
    %v3740 = vpop.f32.mrf.mxu0
    %3741 = vmatprep.mubr.f32.mxu0 %v325
    %3742 = vmatmul.mubr.f32.gmra.mxu0 %v324
    %v3743 = vpop.f32.mrf.mxu0
    %v3744 = vadd.f32 %v3359, %v3743
    %v3745 = vpop.f32.mrf.mxu0
    %3746 = vmatprep.mubr.f32.mxu0 %v333
    %3747 = vmatmul.mubr.f32.gmra.mxu0 %v332
    %v3748 = vpop.f32.mrf.mxu0
    %v3749 = vadd.f32 %v3364, %v3748
    %v3750 = vpop.f32.mrf.mxu0
    %3751 = vmatprep.mubr.f32.mxu0 %v341
    %3752 = vmatmul.mubr.f32.gmra.mxu0 %v340
    %v3753 = vpop.f32.mrf.mxu0
    %v3754 = vadd.f32 %v3369, %v3753
    %v3755 = vpop.f32.mrf.mxu0
    %3756 = vmatprep.mubr.f32.mxu0 %v349
    %3757 = vmatmul.mubr.f32.gmra.mxu0 %v348
    %v3758 = vpop.f32.mrf.mxu0
    %v3759 = vadd.f32 %v3374, %v3758
    %v3760 = vpop.f32.mrf.mxu0
    %3761 = vmatprep.mubr.f32.mxu0 %v357
    %3762 = vmatmul.mubr.f32.gmra.mxu0 %v356
    %v3763 = vpop.f32.mrf.mxu0
    %v3764 = vadd.f32 %v3379, %v3763
    %v3765 = vpop.f32.mrf.mxu0
    %3766 = vmatprep.mubr.f32.mxu0 %v365
    %3767 = vmatmul.mubr.f32.gmra.mxu0 %v364
    %v3768 = vpop.f32.mrf.mxu0
    %v3769 = vadd.f32 %v3384, %v3768
    %v3770 = vpop.f32.mrf.mxu0
    %3771 = vmatprep.mubr.f32.mxu0 %v373
    %3772 = vmatmul.mubr.f32.gmra.mxu0 %v372
    %v3773 = vpop.f32.mrf.mxu0
    %v3774 = vadd.f32 %v3389, %v3773
    %v3775 = vpop.f32.mrf.mxu0
    %3776 = vmatprep.mubr.f32.mxu0 %v381
    %3777 = vmatmul.mubr.f32.gmra.mxu0 %v380
    %v3778 = vpop.f32.mrf.mxu0
    %v3779 = vadd.f32 %v3394, %v3778
    %v3780 = vpop.f32.mrf.mxu0
    %3781 = vmatprep.mubr.f32.mxu0 %v389
    %3782 = vmatmul.mubr.f32.gmra.mxu0 %v388
    %v3783 = vpop.f32.mrf.mxu0
    %v3784 = vadd.f32 %v3399, %v3783
    %v3785 = vpop.f32.mrf.mxu0
    %3786 = vmatprep.mubr.f32.mxu0 %v397
    %3787 = vmatmul.mubr.f32.gmra.mxu0 %v396
    %v3788 = vpop.f32.mrf.mxu0
    %v3789 = vadd.f32 %v3404, %v3788
    %v3790 = vpop.f32.mrf.mxu0
    %3791 = vmatprep.mubr.f32.mxu0 %v405
    %3792 = vmatmul.mubr.f32.gmra.mxu0 %v404
    %v3793 = vpop.f32.mrf.mxu0
    %v3794 = vadd.f32 %v3409, %v3793
    %v3795 = vpop.f32.mrf.mxu0
    %3796 = vmatprep.mubr.f32.mxu0 %v413
    %3797 = vmatmul.mubr.f32.gmra.mxu0 %v412
    %v3798 = vpop.f32.mrf.mxu0
    %v3799 = vadd.f32 %v3414, %v3798
    %v3800 = vpop.f32.mrf.mxu0
    %3801 = vmatprep.mubr.f32.mxu0 %v421
    %3802 = vmatmul.mubr.f32.gmra.mxu0 %v420
    %v3803 = vpop.f32.mrf.mxu0
    %v3804 = vadd.f32 %v3419, %v3803
    %v3805 = vpop.f32.mrf.mxu0
    %3806 = vmatprep.mubr.f32.mxu0 %v429
    %3807 = vmatmul.mubr.f32.gmra.mxu0 %v428
    %v3808 = vpop.f32.mrf.mxu0
    %v3809 = vadd.f32 %v3424, %v3808
    %v3810 = vpop.f32.mrf.mxu0
    %3811 = vmatprep.mubr.f32.mxu0 %v437
    %3812 = vmatmul.mubr.f32.gmra.mxu0 %v436
    %v3813 = vpop.f32.mrf.mxu0
    %v3814 = vadd.f32 %v3429, %v3813
    %v3815 = vpop.f32.mrf.mxu0
    %3816 = vmatprep.mubr.f32.mxu0 %v445
    %3817 = vmatmul.mubr.f32.gmra.mxu0 %v444
    %v3818 = vpop.f32.mrf.mxu0
    %v3819 = vadd.f32 %v3434, %v3818
    %v3820 = vpop.f32.mrf.mxu0
    %3821 = vmatprep.mubr.f32.mxu0 %v453
    %3822 = vmatmul.mubr.f32.gmra.mxu0 %v452
    %v3823 = vpop.f32.mrf.mxu0
    %v3824 = vadd.f32 %v3439, %v3823
    %v3825 = vpop.f32.mrf.mxu0
    %3826 = vmatprep.mubr.f32.mxu0 %v461
    %3827 = vmatmul.mubr.f32.gmra.mxu0 %v460
    %v3828 = vpop.f32.mrf.mxu0
    %v3829 = vadd.f32 %v3444, %v3828
    %v3830 = vpop.f32.mrf.mxu0
    %3831 = vmatprep.mubr.f32.mxu0 %v469
    %3832 = vmatmul.mubr.f32.gmra.mxu0 %v468
    %v3833 = vpop.f32.mrf.mxu0
    %v3834 = vadd.f32 %v3449, %v3833
    %v3835 = vpop.f32.mrf.mxu0
    %3836 = vmatprep.mubr.f32.mxu0 %v477
    %3837 = vmatmul.mubr.f32.gmra.mxu0 %v476
    %v3838 = vpop.f32.mrf.mxu0
    %v3839 = vadd.f32 %v3454, %v3838
    %v3840 = vpop.f32.mrf.mxu0
    %3841 = vmatprep.mubr.f32.mxu0 %v485
    %3842 = vmatmul.mubr.f32.gmra.mxu0 %v484
    %v3843 = vpop.f32.mrf.mxu0
    %v3844 = vadd.f32 %v3459, %v3843
    %v3845 = vpop.f32.mrf.mxu0
    %3846 = vmatprep.mubr.f32.mxu0 %v493
    %3847 = vmatmul.mubr.f32.gmra.mxu0 %v492
    %v3848 = vpop.f32.mrf.mxu0
    %v3849 = vadd.f32 %v3464, %v3848
    %v3850 = vpop.f32.mrf.mxu0
    %3851 = vmatprep.mubr.f32.mxu0 %v501
    %3852 = vmatmul.mubr.f32.gmra.mxu0 %v500
    %v3853 = vpop.f32.mrf.mxu0
    %v3854 = vadd.f32 %v3469, %v3853
    %v3855 = vpop.f32.mrf.mxu0
    %3856 = vmatprep.mubr.f32.mxu0 %v509
    %3857 = vmatmul.mubr.f32.gmra.mxu0 %v508
    %v3858 = vpop.f32.mrf.mxu0
    %v3859 = vadd.f32 %v3474, %v3858
    %v3860 = vpop.f32.mrf.mxu0
    %3861 = vmatprep.mubr.f32.mxu0 %v517
    %3862 = vmatmul.mubr.f32.gmra.mxu0 %v516
    %v3863 = vpop.f32.mrf.mxu0
    %v3864 = vadd.f32 %v3479, %v3863
    %v3865 = vpop.f32.mrf.mxu0
    %3866 = vmatprep.mubr.f32.mxu0 %v525
    %3867 = vmatmul.mubr.f32.gmra.mxu0 %v524
    %v3868 = vpop.f32.mrf.mxu0
    %v3869 = vadd.f32 %v3484, %v3868
    %v3870 = vpop.f32.mrf.mxu0
    %3871 = vmatprep.mubr.f32.mxu0 %v533
    %3872 = vmatmul.mubr.f32.gmra.mxu0 %v532
    %v3873 = vpop.f32.mrf.mxu0
    %v3874 = vadd.f32 %v3489, %v3873
    %v3875 = vpop.f32.mrf.mxu0
    %3876 = vmatprep.mubr.f32.mxu0 %v541
    %3877 = vmatmul.mubr.f32.gmra.mxu0 %v540
    %v3878 = vpop.f32.mrf.mxu0
    %v3879 = vadd.f32 %v3494, %v3878
    %v3880 = vpop.f32.mrf.mxu0
    %3881 = vmatprep.mubr.f32.mxu0 %v549
    %3882 = vmatmul.mubr.f32.gmra.mxu0 %v548
    %v3883 = vpop.f32.mrf.mxu0
    %v3884 = vadd.f32 %v3499, %v3883
    %v3885 = vpop.f32.mrf.mxu0
    %3886 = vdwg.mxu0
    %3887 = vmatprep.subr.mxu0 0.0
    %3888 = vmatpush1.msra.mxu0 %v887
    %3889 = vmatprep.subr.mxu0 0.0
    %3890 = vmatpush1.msra.mxu0 %v884
    %3891 = vmatprep.subr.mxu0 0.0
    %3892 = vmatpush1.msra.mxu0 %v881
    %3893 = vmatprep.subr.mxu0 0.0
    %3894 = vmatpush1.msra.mxu0 %v878
    %3895 = vmatprep.subr.mxu0 0.0
    %3896 = vmatpush1.msra.mxu0 %v875
    %3897 = vmatprep.subr.mxu0 0.0
    %3898 = vmatpush1.msra.mxu0 %v872
    %3899 = vmatprep.subr.mxu0 0.0
    %3900 = vmatpush1.msra.mxu0 %v869
    %3901 = vmatprep.subr.mxu0 0.0
    %3902 = vmatpush1.msra.mxu0 %v866
    %3903 = vmatprep.subr.mxu0 0.0
    %3904 = vmatpush1.msra.mxu0 %v863
    %3905 = vmatprep.subr.mxu0 0.0
    %3906 = vmatpush1.msra.mxu0 %v860
    %3907 = vmatprep.subr.mxu0 0.0
    %3908 = vmatpush1.msra.mxu0 %v857
    %3909 = vmatprep.subr.mxu0 0.0
    %3910 = vmatpush1.msra.mxu0 %v854
    %3911 = vmatprep.subr.mxu0 0.0
    %3912 = vmatpush1.msra.mxu0 %v851
    %3913 = vmatprep.subr.mxu0 0.0
    %3914 = vmatpush1.msra.mxu0 %v848
    %3915 = vmatprep.subr.mxu0 0.0
    %3916 = vmatpush1.msra.mxu0 %v845
    %3917 = vmatprep.subr.mxu0 0.0
    %3918 = vmatpush1.msra.mxu0 %v842
    %3919 = vmatprep.subr.mxu0 0.0
    %3920 = vmatpush2.msra.mxu0 %v935
    %3921 = vmatprep.subr.mxu0 0.0
    %3922 = vmatpush2.msra.mxu0 %v932
    %3923 = vmatprep.subr.mxu0 0.0
    %3924 = vmatpush2.msra.mxu0 %v929
    %3925 = vmatprep.subr.mxu0 0.0
    %3926 = vmatpush2.msra.mxu0 %v926
    %3927 = vmatprep.subr.mxu0 0.0
    %3928 = vmatpush2.msra.mxu0 %v923
    %3929 = vmatprep.subr.mxu0 0.0
    %3930 = vmatpush2.msra.mxu0 %v920
    %3931 = vmatprep.subr.mxu0 0.0
    %3932 = vmatpush2.msra.mxu0 %v917
    %3933 = vmatprep.subr.mxu0 0.0
    %3934 = vmatpush2.msra.mxu0 %v914
    %3935 = vmatprep.subr.mxu0 0.0
    %3936 = vmatpush2.msra.mxu0 %v911
    %3937 = vmatprep.subr.mxu0 0.0
    %3938 = vmatpush2.msra.mxu0 %v908
    %3939 = vmatprep.subr.mxu0 0.0
    %3940 = vmatpush2.msra.mxu0 %v905
    %3941 = vmatprep.subr.mxu0 0.0
    %3942 = vmatpush2.msra.mxu0 %v902
    %3943 = vmatprep.subr.mxu0 0.0
    %3944 = vmatpush2.msra.mxu0 %v899
    %3945 = vmatprep.subr.mxu0 0.0
    %3946 = vmatpush2.msra.mxu0 %v896
    %3947 = vmatprep.subr.mxu0 0.0
    %3948 = vmatpush2.msra.mxu0 %v893
    %3949 = vmatprep.subr.mxu0 0.0
    %3950 = vmatpush2.msra.mxu0 %v890
    %3951 = vmatprep.mubr.f32.mxu0 %v47
    %3952 = vmatmul.mubr.f32.gmra.mxu0 %v46
    %v3953 = vpop.f32.mrf.mxu0
    %v3954 = vadd.f32 %v3569, %v3953
    %v3955 = vpop.f32.mrf.mxu0
    %3956 = vmatprep.mubr.f32.mxu0 %v55
    %3957 = vmatmul.mubr.f32.gmra.mxu0 %v54
    %v3958 = vpop.f32.mrf.mxu0
    %v3959 = vadd.f32 %v3574, %v3958
    %v3960 = vpop.f32.mrf.mxu0
    %3961 = vmatprep.mubr.f32.mxu0 %v63
    %3962 = vmatmul.mubr.f32.gmra.mxu0 %v62
    %v3963 = vpop.f32.mrf.mxu0
    %v3964 = vadd.f32 %v3579, %v3963
    %v3965 = vpop.f32.mrf.mxu0
    %3966 = vmatprep.mubr.f32.mxu0 %v71
    %3967 = vmatmul.mubr.f32.gmra.mxu0 %v70
    %v3968 = vpop.f32.mrf.mxu0
    %v3969 = vadd.f32 %v3584, %v3968
    %v3970 = vpop.f32.mrf.mxu0
    %3971 = vmatprep.mubr.f32.mxu0 %v79
    %3972 = vmatmul.mubr.f32.gmra.mxu0 %v78
    %v3973 = vpop.f32.mrf.mxu0
    %v3974 = vadd.f32 %v3589, %v3973
    %v3975 = vpop.f32.mrf.mxu0
    %3976 = vmatprep.mubr.f32.mxu0 %v87
    %3977 = vmatmul.mubr.f32.gmra.mxu0 %v86
    %v3978 = vpop.f32.mrf.mxu0
    %v3979 = vadd.f32 %v3594, %v3978
    %v3980 = vpop.f32.mrf.mxu0
    %3981 = vmatprep.mubr.f32.mxu0 %v95
    %3982 = vmatmul.mubr.f32.gmra.mxu0 %v94
    %v3983 = vpop.f32.mrf.mxu0
    %v3984 = vadd.f32 %v3599, %v3983
    %v3985 = vpop.f32.mrf.mxu0
    %3986 = vmatprep.mubr.f32.mxu0 %v103
    %3987 = vmatmul.mubr.f32.gmra.mxu0 %v102
    %v3988 = vpop.f32.mrf.mxu0
    %v3989 = vadd.f32 %v3604, %v3988
    %v3990 = vpop.f32.mrf.mxu0
    %3991 = vmatprep.mubr.f32.mxu0 %v111
    %3992 = vmatmul.mubr.f32.gmra.mxu0 %v110
    %v3993 = vpop.f32.mrf.mxu0
    %v3994 = vadd.f32 %v3609, %v3993
    %v3995 = vpop.f32.mrf.mxu0
    %3996 = vmatprep.mubr.f32.mxu0 %v119
    %3997 = vmatmul.mubr.f32.gmra.mxu0 %v118
    %v3998 = vpop.f32.mrf.mxu0
    %v3999 = vadd.f32 %v3614, %v3998
    %v4000 = vpop.f32.mrf.mxu0
    %4001 = vmatprep.mubr.f32.mxu0 %v127
    %4002 = vmatmul.mubr.f32.gmra.mxu0 %v126
    %v4003 = vpop.f32.mrf.mxu0
    %v4004 = vadd.f32 %v3619, %v4003
    %v4005 = vpop.f32.mrf.mxu0
    %4006 = vmatprep.mubr.f32.mxu0 %v135
    %4007 = vmatmul.mubr.f32.gmra.mxu0 %v134
    %v4008 = vpop.f32.mrf.mxu0
    %v4009 = vadd.f32 %v3624, %v4008
    %v4010 = vpop.f32.mrf.mxu0
    %4011 = vmatprep.mubr.f32.mxu0 %v143
    %4012 = vmatmul.mubr.f32.gmra.mxu0 %v142
    %v4013 = vpop.f32.mrf.mxu0
    %v4014 = vadd.f32 %v3629, %v4013
    %v4015 = vpop.f32.mrf.mxu0
    %4016 = vmatprep.mubr.f32.mxu0 %v151
    %4017 = vmatmul.mubr.f32.gmra.mxu0 %v150
    %v4018 = vpop.f32.mrf.mxu0
    %v4019 = vadd.f32 %v3634, %v4018
    %v4020 = vpop.f32.mrf.mxu0
    %4021 = vmatprep.mubr.f32.mxu0 %v159
    %4022 = vmatmul.mubr.f32.gmra.mxu0 %v158
    %v4023 = vpop.f32.mrf.mxu0
    %v4024 = vadd.f32 %v3639, %v4023
    %v4025 = vpop.f32.mrf.mxu0
    %4026 = vmatprep.mubr.f32.mxu0 %v167
    %4027 = vmatmul.mubr.f32.gmra.mxu0 %v166
    %v4028 = vpop.f32.mrf.mxu0
    %v4029 = vadd.f32 %v3644, %v4028
    %v4030 = vpop.f32.mrf.mxu0
    %4031 = vmatprep.mubr.f32.mxu0 %v175
    %4032 = vmatmul.mubr.f32.gmra.mxu0 %v174
    %v4033 = vpop.f32.mrf.mxu0
    %v4034 = vadd.f32 %v3649, %v4033
    %v4035 = vpop.f32.mrf.mxu0
    %4036 = vmatprep.mubr.f32.mxu0 %v183
    %4037 = vmatmul.mubr.f32.gmra.mxu0 %v182
    %v4038 = vpop.f32.mrf.mxu0
    %v4039 = vadd.f32 %v3654, %v4038
    %v4040 = vpop.f32.mrf.mxu0
    %4041 = vmatprep.mubr.f32.mxu0 %v191
    %4042 = vmatmul.mubr.f32.gmra.mxu0 %v190
    %v4043 = vpop.f32.mrf.mxu0
    %v4044 = vadd.f32 %v3659, %v4043
    %v4045 = vpop.f32.mrf.mxu0
    %4046 = vmatprep.mubr.f32.mxu0 %v199
    %4047 = vmatmul.mubr.f32.gmra.mxu0 %v198
    %v4048 = vpop.f32.mrf.mxu0
    %v4049 = vadd.f32 %v3664, %v4048
    %v4050 = vpop.f32.mrf.mxu0
    %4051 = vmatprep.mubr.f32.mxu0 %v207
    %4052 = vmatmul.mubr.f32.gmra.mxu0 %v206
    %v4053 = vpop.f32.mrf.mxu0
    %v4054 = vadd.f32 %v3669, %v4053
    %v4055 = vpop.f32.mrf.mxu0
    %4056 = vmatprep.mubr.f32.mxu0 %v215
    %4057 = vmatmul.mubr.f32.gmra.mxu0 %v214
    %v4058 = vpop.f32.mrf.mxu0
    %v4059 = vadd.f32 %v3674, %v4058
    %v4060 = vpop.f32.mrf.mxu0
    %4061 = vmatprep.mubr.f32.mxu0 %v223
    %4062 = vmatmul.mubr.f32.gmra.mxu0 %v222
    %v4063 = vpop.f32.mrf.mxu0
    %v4064 = vadd.f32 %v3679, %v4063
    %v4065 = vpop.f32.mrf.mxu0
    %4066 = vmatprep.mubr.f32.mxu0 %v231
    %4067 = vmatmul.mubr.f32.gmra.mxu0 %v230
    %v4068 = vpop.f32.mrf.mxu0
    %v4069 = vadd.f32 %v3684, %v4068
    %v4070 = vpop.f32.mrf.mxu0
    %4071 = vmatprep.mubr.f32.mxu0 %v239
    %4072 = vmatmul.mubr.f32.gmra.mxu0 %v238
    %v4073 = vpop.f32.mrf.mxu0
    %v4074 = vadd.f32 %v3689, %v4073
    %v4075 = vpop.f32.mrf.mxu0
    %4076 = vmatprep.mubr.f32.mxu0 %v247
    %4077 = vmatmul.mubr.f32.gmra.mxu0 %v246
    %v4078 = vpop.f32.mrf.mxu0
    %v4079 = vadd.f32 %v3694, %v4078
    %v4080 = vpop.f32.mrf.mxu0
    %4081 = vmatprep.mubr.f32.mxu0 %v255
    %4082 = vmatmul.mubr.f32.gmra.mxu0 %v254
    %v4083 = vpop.f32.mrf.mxu0
    %v4084 = vadd.f32 %v3699, %v4083
    %v4085 = vpop.f32.mrf.mxu0
    %4086 = vmatprep.mubr.f32.mxu0 %v263
    %4087 = vmatmul.mubr.f32.gmra.mxu0 %v262
    %v4088 = vpop.f32.mrf.mxu0
    %v4089 = vadd.f32 %v3704, %v4088
    %v4090 = vpop.f32.mrf.mxu0
    %4091 = vmatprep.mubr.f32.mxu0 %v271
    %4092 = vmatmul.mubr.f32.gmra.mxu0 %v270
    %v4093 = vpop.f32.mrf.mxu0
    %v4094 = vadd.f32 %v3709, %v4093
    %v4095 = vpop.f32.mrf.mxu0
    %4096 = vmatprep.mubr.f32.mxu0 %v279
    %4097 = vmatmul.mubr.f32.gmra.mxu0 %v278
    %v4098 = vpop.f32.mrf.mxu0
    %v4099 = vadd.f32 %v3714, %v4098
    %v4100 = vpop.f32.mrf.mxu0
    %4101 = vmatprep.mubr.f32.mxu0 %v287
    %4102 = vmatmul.mubr.f32.gmra.mxu0 %v286
    %v4103 = vpop.f32.mrf.mxu0
    %v4104 = vadd.f32 %v3719, %v4103
    %v4105 = vpop.f32.mrf.mxu0
    %4106 = vmatprep.mubr.f32.mxu0 %v295
    %4107 = vmatmul.mubr.f32.gmra.mxu0 %v294
    %v4108 = vpop.f32.mrf.mxu0
    %v4109 = vadd.f32 %v3724, %v4108
    %v4110 = vpop.f32.mrf.mxu0
    %4111 = vmatprep.mubr.f32.mxu0 %v303
    %4112 = vmatmul.mubr.f32.gmra.mxu0 %v302
    %v4113 = vpop.f32.mrf.mxu0
    %v4114 = vadd.f32 %v3729, %v4113
    %v4115 = vpop.f32.mrf.mxu0
    %4116 = vmatprep.mubr.f32.mxu0 %v311
    %4117 = vmatmul.mubr.f32.gmra.mxu0 %v310
    %v4118 = vpop.f32.mrf.mxu0
    %v4119 = vadd.f32 %v3734, %v4118
    %v4120 = vpop.f32.mrf.mxu0
    %4121 = vmatprep.mubr.f32.mxu0 %v319
    %4122 = vmatmul.mubr.f32.gmra.mxu0 %v318
    %v4123 = vpop.f32.mrf.mxu0
    %v4124 = vadd.f32 %v3739, %v4123
    %v4125 = vpop.f32.mrf.mxu0
    %4126 = vmatprep.mubr.f32.mxu0 %v327
    %4127 = vmatmul.mubr.f32.gmra.mxu0 %v326
    %v4128 = vpop.f32.mrf.mxu0
    %v4129 = vadd.f32 %v3744, %v4128
    %v4130 = vpop.f32.mrf.mxu0
    %4131 = vmatprep.mubr.f32.mxu0 %v335
    %4132 = vmatmul.mubr.f32.gmra.mxu0 %v334
    %v4133 = vpop.f32.mrf.mxu0
    %v4134 = vadd.f32 %v3749, %v4133
    %v4135 = vpop.f32.mrf.mxu0
    %4136 = vmatprep.mubr.f32.mxu0 %v343
    %4137 = vmatmul.mubr.f32.gmra.mxu0 %v342
    %v4138 = vpop.f32.mrf.mxu0
    %v4139 = vadd.f32 %v3754, %v4138
    %v4140 = vpop.f32.mrf.mxu0
    %4141 = vmatprep.mubr.f32.mxu0 %v351
    %4142 = vmatmul.mubr.f32.gmra.mxu0 %v350
    %v4143 = vpop.f32.mrf.mxu0
    %v4144 = vadd.f32 %v3759, %v4143
    %v4145 = vpop.f32.mrf.mxu0
    %4146 = vmatprep.mubr.f32.mxu0 %v359
    %4147 = vmatmul.mubr.f32.gmra.mxu0 %v358
    %v4148 = vpop.f32.mrf.mxu0
    %v4149 = vadd.f32 %v3764, %v4148
    %v4150 = vpop.f32.mrf.mxu0
    %4151 = vmatprep.mubr.f32.mxu0 %v367
    %4152 = vmatmul.mubr.f32.gmra.mxu0 %v366
    %v4153 = vpop.f32.mrf.mxu0
    %v4154 = vadd.f32 %v3769, %v4153
    %v4155 = vpop.f32.mrf.mxu0
    %4156 = vmatprep.mubr.f32.mxu0 %v375
    %4157 = vmatmul.mubr.f32.gmra.mxu0 %v374
    %v4158 = vpop.f32.mrf.mxu0
    %v4159 = vadd.f32 %v3774, %v4158
    %v4160 = vpop.f32.mrf.mxu0
    %4161 = vmatprep.mubr.f32.mxu0 %v383
    %4162 = vmatmul.mubr.f32.gmra.mxu0 %v382
    %v4163 = vpop.f32.mrf.mxu0
    %v4164 = vadd.f32 %v3779, %v4163
    %v4165 = vpop.f32.mrf.mxu0
    %4166 = vmatprep.mubr.f32.mxu0 %v391
    %4167 = vmatmul.mubr.f32.gmra.mxu0 %v390
    %v4168 = vpop.f32.mrf.mxu0
    %v4169 = vadd.f32 %v3784, %v4168
    %v4170 = vpop.f32.mrf.mxu0
    %4171 = vmatprep.mubr.f32.mxu0 %v399
    %4172 = vmatmul.mubr.f32.gmra.mxu0 %v398
    %v4173 = vpop.f32.mrf.mxu0
    %v4174 = vadd.f32 %v3789, %v4173
    %v4175 = vpop.f32.mrf.mxu0
    %4176 = vmatprep.mubr.f32.mxu0 %v407
    %4177 = vmatmul.mubr.f32.gmra.mxu0 %v406
    %v4178 = vpop.f32.mrf.mxu0
    %v4179 = vadd.f32 %v3794, %v4178
    %v4180 = vpop.f32.mrf.mxu0
    %4181 = vmatprep.mubr.f32.mxu0 %v415
    %4182 = vmatmul.mubr.f32.gmra.mxu0 %v414
    %v4183 = vpop.f32.mrf.mxu0
    %v4184 = vadd.f32 %v3799, %v4183
    %v4185 = vpop.f32.mrf.mxu0
    %4186 = vmatprep.mubr.f32.mxu0 %v423
    %4187 = vmatmul.mubr.f32.gmra.mxu0 %v422
    %v4188 = vpop.f32.mrf.mxu0
    %v4189 = vadd.f32 %v3804, %v4188
    %v4190 = vpop.f32.mrf.mxu0
    %4191 = vmatprep.mubr.f32.mxu0 %v431
    %4192 = vmatmul.mubr.f32.gmra.mxu0 %v430
    %v4193 = vpop.f32.mrf.mxu0
    %v4194 = vadd.f32 %v3809, %v4193
    %v4195 = vpop.f32.mrf.mxu0
    %4196 = vmatprep.mubr.f32.mxu0 %v439
    %4197 = vmatmul.mubr.f32.gmra.mxu0 %v438
    %v4198 = vpop.f32.mrf.mxu0
    %v4199 = vadd.f32 %v3814, %v4198
    %v4200 = vpop.f32.mrf.mxu0
    %4201 = vmatprep.mubr.f32.mxu0 %v447
    %4202 = vmatmul.mubr.f32.gmra.mxu0 %v446
    %v4203 = vpop.f32.mrf.mxu0
    %v4204 = vadd.f32 %v3819, %v4203
    %v4205 = vpop.f32.mrf.mxu0
    %4206 = vmatprep.mubr.f32.mxu0 %v455
    %4207 = vmatmul.mubr.f32.gmra.mxu0 %v454
    %v4208 = vpop.f32.mrf.mxu0
    %v4209 = vadd.f32 %v3824, %v4208
    %v4210 = vpop.f32.mrf.mxu0
    %4211 = vmatprep.mubr.f32.mxu0 %v463
    %4212 = vmatmul.mubr.f32.gmra.mxu0 %v462
    %v4213 = vpop.f32.mrf.mxu0
    %v4214 = vadd.f32 %v3829, %v4213
    %v4215 = vpop.f32.mrf.mxu0
    %4216 = vmatprep.mubr.f32.mxu0 %v471
    %4217 = vmatmul.mubr.f32.gmra.mxu0 %v470
    %v4218 = vpop.f32.mrf.mxu0
    %v4219 = vadd.f32 %v3834, %v4218
    %v4220 = vpop.f32.mrf.mxu0
    %4221 = vmatprep.mubr.f32.mxu0 %v479
    %4222 = vmatmul.mubr.f32.gmra.mxu0 %v478
    %v4223 = vpop.f32.mrf.mxu0
    %v4224 = vadd.f32 %v3839, %v4223
    %v4225 = vpop.f32.mrf.mxu0
    %4226 = vmatprep.mubr.f32.mxu0 %v487
    %4227 = vmatmul.mubr.f32.gmra.mxu0 %v486
    %v4228 = vpop.f32.mrf.mxu0
    %v4229 = vadd.f32 %v3844, %v4228
    %v4230 = vpop.f32.mrf.mxu0
    %4231 = vmatprep.mubr.f32.mxu0 %v495
    %4232 = vmatmul.mubr.f32.gmra.mxu0 %v494
    %v4233 = vpop.f32.mrf.mxu0
    %v4234 = vadd.f32 %v3849, %v4233
    %v4235 = vpop.f32.mrf.mxu0
    %4236 = vmatprep.mubr.f32.mxu0 %v503
    %4237 = vmatmul.mubr.f32.gmra.mxu0 %v502
    %v4238 = vpop.f32.mrf.mxu0
    %v4239 = vadd.f32 %v3854, %v4238
    %v4240 = vpop.f32.mrf.mxu0
    %4241 = vmatprep.mubr.f32.mxu0 %v511
    %4242 = vmatmul.mubr.f32.gmra.mxu0 %v510
    %v4243 = vpop.f32.mrf.mxu0
    %v4244 = vadd.f32 %v3859, %v4243
    %v4245 = vpop.f32.mrf.mxu0
    %4246 = vmatprep.mubr.f32.mxu0 %v519
    %4247 = vmatmul.mubr.f32.gmra.mxu0 %v518
    %v4248 = vpop.f32.mrf.mxu0
    %v4249 = vadd.f32 %v3864, %v4248
    %v4250 = vpop.f32.mrf.mxu0
    %4251 = vmatprep.mubr.f32.mxu0 %v527
    %4252 = vmatmul.mubr.f32.gmra.mxu0 %v526
    %v4253 = vpop.f32.mrf.mxu0
    %v4254 = vadd.f32 %v3869, %v4253
    %v4255 = vpop.f32.mrf.mxu0
    %4256 = vmatprep.mubr.f32.mxu0 %v535
    %4257 = vmatmul.mubr.f32.gmra.mxu0 %v534
    %v4258 = vpop.f32.mrf.mxu0
    %v4259 = vadd.f32 %v3874, %v4258
    %v4260 = vpop.f32.mrf.mxu0
    %4261 = vmatprep.mubr.f32.mxu0 %v543
    %4262 = vmatmul.mubr.f32.gmra.mxu0 %v542
    %v4263 = vpop.f32.mrf.mxu0
    %v4264 = vadd.f32 %v3879, %v4263
    %v4265 = vpop.f32.mrf.mxu0
    %4266 = vmatprep.mubr.f32.mxu0 %v551
    %4267 = vmatmul.mubr.f32.gmra.mxu0 %v550
    %v4268 = vpop.f32.mrf.mxu0
    %v4269 = vadd.f32 %v3884, %v4268
    %v4270 = vpop.f32.mrf.mxu0
    %4271 = vdwg.mxu0
    %4272 = vst [vmem:[#allocation7] sm:$0xff] %v2350
    %4273 = vst [vmem:[#allocation7 + $0x8] sm:$0xff] %v2352
    %4274 = vst [vmem:[#allocation7 + $0x10] sm:$0xff] %v3954
    %4275 = vst [vmem:[#allocation7 + $0x18] sm:$0xff] %v2356
    %4276 = vst [vmem:[#allocation7 + $0x20] sm:$0xff] %v2358
    %4277 = vst [vmem:[#allocation7 + $0x28] sm:$0xff] %v3959
    %4278 = vst [vmem:[#allocation7 + $0x30] sm:$0xff] %v2362
    %4279 = vst [vmem:[#allocation7 + $0x38] sm:$0xff] %v2364
    %4280 = vst [vmem:[#allocation7 + $0x40] sm:$0xff] %v3964
    %4281 = vst [vmem:[#allocation7 + $0x48] sm:$0xff] %v2368
    %4282 = vst [vmem:[#allocation7 + $0x50] sm:$0xff] %v2370
    %4283 = vst [vmem:[#allocation7 + $0x58] sm:$0xff] %v3969
    %4284 = vst [vmem:[#allocation7 + $0x60] sm:$0xff] %v2374
    %4285 = vst [vmem:[#allocation7 + $0x68] sm:$0xff] %v2376
    %4286 = vst [vmem:[#allocation7 + $0x70] sm:$0xff] %v3974
    %4287 = vst [vmem:[#allocation7 + $0x78] sm:$0xff] %v2380
    %4288 = vst [vmem:[#allocation7 + $0x80] sm:$0xff] %v2382
    %4289 = vst [vmem:[#allocation7 + $0x88] sm:$0xff] %v3979
    %4290 = vst [vmem:[#allocation7 + $0x90] sm:$0xff] %v2386
    %4291 = vst [vmem:[#allocation7 + $0x98] sm:$0xff] %v2388
    %4292 = vst [vmem:[#allocation7 + $0xa0] sm:$0xff] %v3984
    %4293 = vst [vmem:[#allocation7 + $0xa8] sm:$0xff] %v2392
    %4294 = vst [vmem:[#allocation7 + $0xb0] sm:$0xff] %v2394
    %4295 = vst [vmem:[#allocation7 + $0xb8] sm:$0xff] %v3989
    %4296 = vst [vmem:[#allocation7 + $0xc0] sm:$0xff] %v2398
    %4297 = vst [vmem:[#allocation7 + $0xc8] sm:$0xff] %v2400
    %4298 = vst [vmem:[#allocation7 + $0xd0] sm:$0xff] %v3994
    %4299 = vst [vmem:[#allocation7 + $0xd8] sm:$0xff] %v2404
    %4300 = vst [vmem:[#allocation7 + $0xe0] sm:$0xff] %v2406
    %4301 = vst [vmem:[#allocation7 + $0xe8] sm:$0xff] %v3999
    %4302 = vst [vmem:[#allocation7 + $0xf0] sm:$0xff] %v2410
    %4303 = vst [vmem:[#allocation7 + $0xf8] sm:$0xff] %v2412
    %4304 = vst [vmem:[#allocation7 + $0x100] sm:$0xff] %v4004
    %4305 = vst [vmem:[#allocation7 + $0x108] sm:$0xff] %v2416
    %4306 = vst [vmem:[#allocation7 + $0x110] sm:$0xff] %v2418
    %4307 = vst [vmem:[#allocation7 + $0x118] sm:$0xff] %v4009
    %4308 = vst [vmem:[#allocation7 + $0x120] sm:$0xff] %v2422
    %4309 = vst [vmem:[#allocation7 + $0x128] sm:$0xff] %v2424
    %4310 = vst [vmem:[#allocation7 + $0x130] sm:$0xff] %v4014
    %4311 = vst [vmem:[#allocation7 + $0x138] sm:$0xff] %v2428
    %4312 = vst [vmem:[#allocation7 + $0x140] sm:$0xff] %v2430
    %4313 = vst [vmem:[#allocation7 + $0x148] sm:$0xff] %v4019
    %4314 = vst [vmem:[#allocation7 + $0x150] sm:$0xff] %v2434
    %4315 = vst [vmem:[#allocation7 + $0x158] sm:$0xff] %v2436
    %4316 = vst [vmem:[#allocation7 + $0x160] sm:$0xff] %v4024
    %4317 = vst [vmem:[#allocation7 + $0x168] sm:$0xff] %v2440
    %4318 = vst [vmem:[#allocation7 + $0x170] sm:$0xff] %v2442
    %4319 = vst [vmem:[#allocation7 + $0x178] sm:$0xff] %v4029
    %4320 = vst [vmem:[#allocation7 + $0x180] sm:$0xff] %v2446
    %4321 = vst [vmem:[#allocation7 + $0x188] sm:$0xff] %v2448
    %4322 = vst [vmem:[#allocation7 + $0x190] sm:$0xff] %v4034
    %4323 = vst [vmem:[#allocation7 + $0x198] sm:$0xff] %v2452
    %4324 = vst [vmem:[#allocation7 + $0x1a0] sm:$0xff] %v2454
    %4325 = vst [vmem:[#allocation7 + $0x1a8] sm:$0xff] %v4039
    %4326 = vst [vmem:[#allocation7 + $0x1b0] sm:$0xff] %v2458
    %4327 = vst [vmem:[#allocation7 + $0x1b8] sm:$0xff] %v2460
    %4328 = vst [vmem:[#allocation7 + $0x1c0] sm:$0xff] %v4044
    %4329 = vst [vmem:[#allocation7 + $0x1c8] sm:$0xff] %v2464
    %4330 = vst [vmem:[#allocation7 + $0x1d0] sm:$0xff] %v2466
    %4331 = vst [vmem:[#allocation7 + $0x1d8] sm:$0xff] %v4049
    %4332 = vst [vmem:[#allocation7 + $0x1e0] sm:$0xff] %v2470
    %4333 = vst [vmem:[#allocation7 + $0x1e8] sm:$0xff] %v2472
    %4334 = vst [vmem:[#allocation7 + $0x1f0] sm:$0xff] %v4054
    %4335 = vst [vmem:[#allocation7 + $0x1f8] sm:$0xff] %v2476
    %4336 = vst [vmem:[#allocation7 + $0x200] sm:$0xff] %v2478
    %4337 = vst [vmem:[#allocation7 + $0x208] sm:$0xff] %v4059
    %4338 = vst [vmem:[#allocation7 + $0x210] sm:$0xff] %v2482
    %4339 = vst [vmem:[#allocation7 + $0x218] sm:$0xff] %v2484
    %4340 = vst [vmem:[#allocation7 + $0x220] sm:$0xff] %v4064
    %4341 = vst [vmem:[#allocation7 + $0x228] sm:$0xff] %v2488
    %4342 = vst [vmem:[#allocation7 + $0x230] sm:$0xff] %v2490
    %4343 = vst [vmem:[#allocation7 + $0x238] sm:$0xff] %v4069
    %4344 = vst [vmem:[#allocation7 + $0x240] sm:$0xff] %v2494
    %4345 = vst [vmem:[#allocation7 + $0x248] sm:$0xff] %v2496
    %4346 = vst [vmem:[#allocation7 + $0x250] sm:$0xff] %v4074
    %4347 = vst [vmem:[#allocation7 + $0x258] sm:$0xff] %v2500
    %4348 = vst [vmem:[#allocation7 + $0x260] sm:$0xff] %v2502
    %4349 = vst [vmem:[#allocation7 + $0x268] sm:$0xff] %v4079
    %4350 = vst [vmem:[#allocation7 + $0x270] sm:$0xff] %v2506
    %4351 = vst [vmem:[#allocation7 + $0x278] sm:$0xff] %v2508
    %4352 = vst [vmem:[#allocation7 + $0x280] sm:$0xff] %v4084
    %4353 = vst [vmem:[#allocation7 + $0x288] sm:$0xff] %v2512
    %4354 = vst [vmem:[#allocation7 + $0x290] sm:$0xff] %v2514
    %4355 = vst [vmem:[#allocation7 + $0x298] sm:$0xff] %v4089
    %4356 = vst [vmem:[#allocation7 + $0x2a0] sm:$0xff] %v2518
    %4357 = vst [vmem:[#allocation7 + $0x2a8] sm:$0xff] %v2520
    %4358 = vst [vmem:[#allocation7 + $0x2b0] sm:$0xff] %v4094
    %4359 = vst [vmem:[#allocation7 + $0x2b8] sm:$0xff] %v2524
    %4360 = vst [vmem:[#allocation7 + $0x2c0] sm:$0xff] %v2526
    %4361 = vst [vmem:[#allocation7 + $0x2c8] sm:$0xff] %v4099
    %4362 = vst [vmem:[#allocation7 + $0x2d0] sm:$0xff] %v2530
    %4363 = vst [vmem:[#allocation7 + $0x2d8] sm:$0xff] %v2532
    %4364 = vst [vmem:[#allocation7 + $0x2e0] sm:$0xff] %v4104
    %4365 = vst [vmem:[#allocation7 + $0x2e8] sm:$0xff] %v2536
    %4366 = vst [vmem:[#allocation7 + $0x2f0] sm:$0xff] %v2538
    %4367 = vst [vmem:[#allocation7 + $0x2f8] sm:$0xff] %v4109
    %4368 = vst [vmem:[#allocation7 + $0x300] sm:$0xff] %v2542
    %4369 = vst [vmem:[#allocation7 + $0x308] sm:$0xff] %v2544
    %4370 = vst [vmem:[#allocation7 + $0x310] sm:$0xff] %v4114
    %4371 = vst [vmem:[#allocation7 + $0x318] sm:$0xff] %v2548
    %4372 = vst [vmem:[#allocation7 + $0x320] sm:$0xff] %v2550
    %4373 = vst [vmem:[#allocation7 + $0x328] sm:$0xff] %v4119
    %4374 = vst [vmem:[#allocation7 + $0x330] sm:$0xff] %v2554
    %4375 = vst [vmem:[#allocation7 + $0x338] sm:$0xff] %v2556
    %4376 = vst [vmem:[#allocation7 + $0x340] sm:$0xff] %v4124
    %4377 = vst [vmem:[#allocation7 + $0x348] sm:$0xff] %v2560
    %4378 = vst [vmem:[#allocation7 + $0x350] sm:$0xff] %v2562
    %4379 = vst [vmem:[#allocation7 + $0x358] sm:$0xff] %v4129
    %4380 = vst [vmem:[#allocation7 + $0x360] sm:$0xff] %v2566
    %4381 = vst [vmem:[#allocation7 + $0x368] sm:$0xff] %v2568
    %4382 = vst [vmem:[#allocation7 + $0x370] sm:$0xff] %v4134
    %4383 = vst [vmem:[#allocation7 + $0x378] sm:$0xff] %v2572
    %4384 = vst [vmem:[#allocation7 + $0x380] sm:$0xff] %v2574
    %4385 = vst [vmem:[#allocation7 + $0x388] sm:$0xff] %v4139
    %4386 = vst [vmem:[#allocation7 + $0x390] sm:$0xff] %v2578
    %4387 = vst [vmem:[#allocation7 + $0x398] sm:$0xff] %v2580
    %4388 = vst [vmem:[#allocation7 + $0x3a0] sm:$0xff] %v4144
    %4389 = vst [vmem:[#allocation7 + $0x3a8] sm:$0xff] %v2584
    %4390 = vst [vmem:[#allocation7 + $0x3b0] sm:$0xff] %v2586
    %4391 = vst [vmem:[#allocation7 + $0x3b8] sm:$0xff] %v4149
    %4392 = vst [vmem:[#allocation7 + $0x3c0] sm:$0xff] %v2590
    %4393 = vst [vmem:[#allocation7 + $0x3c8] sm:$0xff] %v2592
    %4394 = vst [vmem:[#allocation7 + $0x3d0] sm:$0xff] %v4154
    %4395 = vst [vmem:[#allocation7 + $0x3d8] sm:$0xff] %v2596
    %4396 = vst [vmem:[#allocation7 + $0x3e0] sm:$0xff] %v2598
    %4397 = vst [vmem:[#allocation7 + $0x3e8] sm:$0xff] %v4159
    %4398 = vst [vmem:[#allocation7 + $0x3f0] sm:$0xff] %v2602
    %4399 = vst [vmem:[#allocation7 + $0x3f8] sm:$0xff] %v2604
    %4400 = vst [vmem:[#allocation7 + $0x400] sm:$0xff] %v4164
    %4401 = vst [vmem:[#allocation7 + $0x408] sm:$0xff] %v2608
    %4402 = vst [vmem:[#allocation7 + $0x410] sm:$0xff] %v2610
    %4403 = vst [vmem:[#allocation7 + $0x418] sm:$0xff] %v4169
    %4404 = vst [vmem:[#allocation7 + $0x420] sm:$0xff] %v2614
    %4405 = vst [vmem:[#allocation7 + $0x428] sm:$0xff] %v2616
    %4406 = vst [vmem:[#allocation7 + $0x430] sm:$0xff] %v4174
    %4407 = vst [vmem:[#allocation7 + $0x438] sm:$0xff] %v2620
    %4408 = vst [vmem:[#allocation7 + $0x440] sm:$0xff] %v2622
    %4409 = vst [vmem:[#allocation7 + $0x448] sm:$0xff] %v4179
    %4410 = vst [vmem:[#allocation7 + $0x450] sm:$0xff] %v2626
    %4411 = vst [vmem:[#allocation7 + $0x458] sm:$0xff] %v2628
    %4412 = vst [vmem:[#allocation7 + $0x460] sm:$0xff] %v4184
    %4413 = vst [vmem:[#allocation7 + $0x468] sm:$0xff] %v2632
    %4414 = vst [vmem:[#allocation7 + $0x470] sm:$0xff] %v2634
    %4415 = vst [vmem:[#allocation7 + $0x478] sm:$0xff] %v4189
    %4416 = vst [vmem:[#allocation7 + $0x480] sm:$0xff] %v2638
    %4417 = vst [vmem:[#allocation7 + $0x488] sm:$0xff] %v2640
    %4418 = vst [vmem:[#allocation7 + $0x490] sm:$0xff] %v4194
    %4419 = vst [vmem:[#allocation7 + $0x498] sm:$0xff] %v2644
    %4420 = vst [vmem:[#allocation7 + $0x4a0] sm:$0xff] %v2646
    %4421 = vst [vmem:[#allocation7 + $0x4a8] sm:$0xff] %v4199
    %4422 = vst [vmem:[#allocation7 + $0x4b0] sm:$0xff] %v2650
    %4423 = vst [vmem:[#allocation7 + $0x4b8] sm:$0xff] %v2652
    %4424 = vst [vmem:[#allocation7 + $0x4c0] sm:$0xff] %v4204
    %4425 = vst [vmem:[#allocation7 + $0x4c8] sm:$0xff] %v2656
    %4426 = vst [vmem:[#allocation7 + $0x4d0] sm:$0xff] %v2658
    %4427 = vst [vmem:[#allocation7 + $0x4d8] sm:$0xff] %v4209
    %4428 = vst [vmem:[#allocation7 + $0x4e0] sm:$0xff] %v2662
    %4429 = vst [vmem:[#allocation7 + $0x4e8] sm:$0xff] %v2664
    %4430 = vst [vmem:[#allocation7 + $0x4f0] sm:$0xff] %v4214
    %4431 = vst [vmem:[#allocation7 + $0x4f8] sm:$0xff] %v2668
    %4432 = vst [vmem:[#allocation7 + $0x500] sm:$0xff] %v2670
    %4433 = vst [vmem:[#allocation7 + $0x508] sm:$0xff] %v4219
    %4434 = vst [vmem:[#allocation7 + $0x510] sm:$0xff] %v2674
    %4435 = vst [vmem:[#allocation7 + $0x518] sm:$0xff] %v2676
    %4436 = vst [vmem:[#allocation7 + $0x520] sm:$0xff] %v4224
    %4437 = vst [vmem:[#allocation7 + $0x528] sm:$0xff] %v2680
    %4438 = vst [vmem:[#allocation7 + $0x530] sm:$0xff] %v2682
    %4439 = vst [vmem:[#allocation7 + $0x538] sm:$0xff] %v4229
    %4440 = vst [vmem:[#allocation7 + $0x540] sm:$0xff] %v2686
    %4441 = vst [vmem:[#allocation7 + $0x548] sm:$0xff] %v2688
    %4442 = vst [vmem:[#allocation7 + $0x550] sm:$0xff] %v4234
    %4443 = vst [vmem:[#allocation7 + $0x558] sm:$0xff] %v2692
    %4444 = vst [vmem:[#allocation7 + $0x560] sm:$0xff] %v2694
    %4445 = vst [vmem:[#allocation7 + $0x568] sm:$0xff] %v4239
    %4446 = vst [vmem:[#allocation7 + $0x570] sm:$0xff] %v2698
    %4447 = vst [vmem:[#allocation7 + $0x578] sm:$0xff] %v2700
    %4448 = vst [vmem:[#allocation7 + $0x580] sm:$0xff] %v4244
    %4449 = vst [vmem:[#allocation7 + $0x588] sm:$0xff] %v2704
    %4450 = vst [vmem:[#allocation7 + $0x590] sm:$0xff] %v2706
    %4451 = vst [vmem:[#allocation7 + $0x598] sm:$0xff] %v4249
    %4452 = vst [vmem:[#allocation7 + $0x5a0] sm:$0xff] %v2710
    %4453 = vst [vmem:[#allocation7 + $0x5a8] sm:$0xff] %v2712
    %4454 = vst [vmem:[#allocation7 + $0x5b0] sm:$0xff] %v4254
    %4455 = vst [vmem:[#allocation7 + $0x5b8] sm:$0xff] %v2716
    %4456 = vst [vmem:[#allocation7 + $0x5c0] sm:$0xff] %v2718
    %4457 = vst [vmem:[#allocation7 + $0x5c8] sm:$0xff] %v4259
    %4458 = vst [vmem:[#allocation7 + $0x5d0] sm:$0xff] %v2722
    %4459 = vst [vmem:[#allocation7 + $0x5d8] sm:$0xff] %v2724
    %4460 = vst [vmem:[#allocation7 + $0x5e0] sm:$0xff] %v4264
    %4461 = vst [vmem:[#allocation7 + $0x5e8] sm:$0xff] %v2728
    %4462 = vst [vmem:[#allocation7 + $0x5f0] sm:$0xff] %v2730
    %4463 = vst [vmem:[#allocation7 + $0x5f8] sm:$0xff] %v4269
    // Predicated region
    $region18: #{tpu_custom_call.1} parent=1 // pred_check
      _
    $region19: #{tpu_custom_call.1} parent=1 // pred_check_branch
      %4465 = sbr.rel (0) target = $region21
    $region20: #{tpu_custom_call.1} parent=1 // pred_region
      %s4467 = ssub.s32 24576, 24576
      %4468 = vsyncadd [#allocation4], %s4467
      %s4469 = sshll.u32 [#allocation7], 4
      %s4470 = int_to_ptr.vmem [resolvable:$true] %s4469
      %4475 = dma.vmem_to_hbm [thread:$0]  %s4470, 24576, %s2, [#allocation4], 384, 384, 24
    $region21: #{tpu_custom_call.1} parent=1 // pred_fallthru
      _
    // Predicated region
    $region22: #{tpu_custom_call.1} parent=1 // pred_check
      _
    $region23: #{tpu_custom_call.1} parent=1 // pred_check_branch
      %4477 = sbr.rel (0) target = $region25
    $region24: #{tpu_custom_call.1} parent=1 // pred_region
      %4478 = dma.done [#allocation4], 24576
    $region25: #{tpu_custom_call.1} parent=1 // pred_fallthru
      _
    %4479 = vsyncpa [#allocation3], 1
    %4480 = vsyncpa [#allocation6], 1
    %4481 = vsyncpa [#allocation4], 1

</llo_original>
